<compile_context>
chip_gen: v6e
topology: v6e:2x2x1
jax: 0.10.0
libtpu: 0.0.40
codegen_flags: <defaults>
</compile_context>

<pallas_src>
import math

import jax
import jax.numpy as jnp
from jax.experimental import pallas as pl
from jax.experimental.pallas import tpu as pltpu

HIDDEN = 1024      # fixed by the module definition
EPS = 1e-5         # InstanceNorm1d default eps
NEG_SLOPE = 0.1    # LeakyReLU negative slope


def _series_decomp(x, kernel_size):
    """MovingAvg (replicate pad (K-1)//2 both ends, AvgPool1d stride 1) + residue."""
    K = kernel_size
    P = (K - 1) // 2
    T = x.shape[1]
    xpad = jnp.concatenate(
        [jnp.repeat(x[:, :1, :], P, axis=1), x,
         jnp.repeat(x[:, -1:, :], P, axis=1)], axis=1)          # (B, T+K-1, C)
    mm = xpad[:, 0:T, :]
    for j in range(1, K):
        mm = mm + xpad[:, j:j + T, :]
    mm = mm / K                                                 # trend
    return x - mm, mm                                           # (seasonal, trend)


def _make_kernel(TB, T, H, O, mxu_dtype):
    """Fused DLinearV2 forward for a block of TB batch elements."""
    inv_T = 1.0 / T
    inv_TH = 1.0 / (T * H)

    def kernel(x_ref, band_ref, wst_ref, bst_ref, wb_ref, bb_ref,
               wp_ref, wpsum_ref, bp_ref, out_ref):
        # -- fused seasonal+trend projection: one (TB*T, 2C)@(2C, 2H) bf16 MXU
        #    matmul (block-diagonal weight), f32 accumulate + bias. ------------
        y = jnp.dot(x_ref[...], wst_ref[...],
                    preferred_element_type=jnp.float32) + bst_ref[...]
        y = y.reshape(TB, T, 2 * H)                                # (TB, T, 2H)

        # both InstanceNorm1d(1024)-over-T at once (per sample & channel);
        # two-pass variance to avoid cancellation, then LeakyReLU(0.1)
        mean = jnp.sum(y, axis=1, keepdims=True) * inv_T           # (TB, 1, 2H)
        yc = y - mean
        var = jnp.sum(yc * yc, axis=1, keepdims=True) * inv_T
        yn = yc * jax.lax.rsqrt(var + EPS)
        ya = jnp.where(yn >= 0.0, yn, NEG_SLOPE * yn)              # (TB, T, 2H)

        # -- band linear: (TB, 3L) @ (3L, H) ---------------------------------
        yb = jnp.dot(band_ref[...], wb_ref[...],
                     preferred_element_type=jnp.float32) + bb_ref[...]  # (TB, H)

        # seasonal half + trend half + band broadcast over time
        out = ya[:, :, :H] + ya[:, :, H:] + yb.reshape(TB, 1, H)   # (TB, T, H)

        # -- predictor head: LeakyReLU; per-sample moments over all T*H ------
        z = jnp.where(out >= 0.0, out, NEG_SLOPE * out)            # f32
        s = jnp.sum(jnp.sum(z, axis=2), axis=1, keepdims=True)     # (TB, 1)
        ss = jnp.sum(jnp.sum(z * z, axis=2), axis=1, keepdims=True)
        m = s * inv_TH                                             # (TB, 1)
        v = jnp.maximum(ss * inv_TH - m * m, 0.0)
        inv_std = jax.lax.rsqrt(v + EPS)                           # (TB, 1)

        # -- predictor linear with the norm folded in algebraically:
        #      pred[b,o] = (dot(z_b, wp_o) - m_b*Wsum_o) * inv_std_b + bp_o
        #    single MXU contraction over T*H; zn is never materialized;
        #    wp stays lane-dense (O, T*H) (no O->128 lane padding).
        z2 = z.reshape(TB, T * H).astype(mxu_dtype)                # (TB, T*H)
        raw = jax.lax.dot_general(z2, wp_ref[...],
                                  (((1,), (1,)), ((), ())),
                                  preferred_element_type=jnp.float32)   # (TB, O)
        pred = (raw - m * wpsum_ref[...]) * inv_std + bp_ref[...]
        out_ref[...] = pred.astype(out_ref.dtype)

    return kernel


def dlinear_v2_forward(params, candle_inputs, band_center, band_lower,
                       band_upper, *, moving_avg_kernel_size,
                       batch_block=None, mxu_dtype=jnp.bfloat16):
    """candle_inputs: (B, seq_len, input_ch); past_band_*: (B, lookback_days)."""
    B, T, C = candle_inputs.shape
    K = moving_avg_kernel_size
    if K % 2 != 1:
        raise ValueError("moving_avg_kernel_size must be odd (the PyTorch "
                         "module's shapes only line up for odd K)")
    H = HIDDEN
    O = params["bp"].shape[-1]
    L3 = 3 * band_center.shape[-1]

    # glue: series decomposition + concatenations in fused XLA (outside kernel)
    seasonal, trend = _series_decomp(candle_inputs.astype(jnp.float32), K)
    x_cat = jnp.concatenate([seasonal, trend], axis=-1)            # (B, T, 2C)
    band = jnp.concatenate([band_center, band_lower, band_upper], axis=-1)

    # -- hardware-aware block sizing -----------------------------------------
    try:
        vmem_cap = int(pltpu.get_tpu_info().vmem_capacity_bytes)
    except Exception:
        vmem_cap = 64 * 2 ** 20          # assume the smallest (v7x-safe)

    if batch_block is None:
        # amortize per-grid-step overhead with large blocks; cap live f32
        # (TB*T, H) temporaries: ~1024 rows on 64 MiB VMEM (v7x), ~2048 on
        # 128 MiB (v5e/v6e).  TB multiple of 8 keeps blocked dims legal.
        target_rows = 1024 if vmem_cap <= (64 << 20) else 2048
        tb_budget = max(8, (max(8, target_rows // T) // 8) * 8)
        if B >= 16:
            # keep >=2 equal grid steps so the "parallel" batch axis can shard
            # across v7x's two TensorCores (no effect on single-TC v5e/v6e)
            half = (-(-B // 2) + 7) // 8 * 8
            batch_block = min(tb_budget, half)
        else:
            batch_block = min(B, tb_budget)
    TB = int(batch_block)
    if TB >= B:
        TB = B                                   # single full-dim block
    elif TB % 8:
        TB = min(B, -(-TB // 8) * 8)             # blocked sublane rule on dim 0
    Bp = pl.cdiv(B, TB) * TB

    def pad_b(a):
        if Bp == B:
            return a
        return jnp.pad(a, ((0, Bp - B),) + ((0, 0),) * (a.ndim - 1))

    # pre-flattened, lane-friendly inputs (no in-kernel input reshapes)
    x_flat = pad_b(x_cat).reshape(Bp * T, 2 * C).astype(mxu_dtype)   # (Bp*T, 2C)
    band2 = pad_b(band).astype(mxu_dtype)                            # (Bp, L3)

    # block-diagonal fused projection weight / concatenated bias
    wst = jnp.zeros((2 * C, 2 * H), jnp.float32)
    wst = wst.at[:C, :H].set(params["ws"]).at[C:, H:].set(params["wt"])
    wst = wst.astype(mxu_dtype)                                      # (2C, 2H)
    bst = jnp.concatenate([params["bs"], params["bt"]],
                          axis=-1).astype(jnp.float32)               # (1, 2H)
    wb = params["wb"].astype(mxu_dtype)
    bb = params["bb"].astype(jnp.float32)
    wp = params["wp"].reshape(O, T * H).astype(mxu_dtype)            # lane-dense
    wpsum = jnp.sum(wp.astype(jnp.float32), axis=1).reshape(1, O)    # fold term
    bp = params["bp"].astype(jnp.float32)

    kernel = _make_kernel(TB, T, H, O, mxu_dtype)

    in_specs = [
        pl.BlockSpec((TB * T, 2 * C), lambda i: (i, 0)),   # seasonal|trend feats
        pl.BlockSpec((TB, L3), lambda i: (i, 0)),          # band features
        pl.BlockSpec((2 * C, 2 * H), lambda i: (0, 0)),    # wst (grid-invariant)
        pl.BlockSpec((1, 2 * H), lambda i: (0, 0)),        # bst
        pl.BlockSpec((L3, H), lambda i: (0, 0)),           # wb
        pl.BlockSpec((1, H), lambda i: (0, 0)),            # bb
        pl.BlockSpec((O, T * H), lambda i: (0, 0)),        # wp, lane-dense
        pl.BlockSpec((1, O), lambda i: (0, 0)),            # sum(wp) per output
        pl.BlockSpec((1, O), lambda i: (0, 0)),            # bp
    ]
    out_specs = pl.BlockSpec((TB, O), lambda i: (i, 0))

    # ~0.8 of physical VMEM: ~51 MiB on v7x, ~100 MiB on v5e/v6e
    vmem_limit = min(int(0.8 * vmem_cap), 100 * 2 ** 20)

    pred = pl.pallas_call(
        kernel,
        out_shape=jax.ShapeDtypeStruct((Bp, O), jnp.float32),
        grid_spec=pltpu.PrefetchScalarGridSpec(
            num_scalar_prefetch=0,
            grid=(Bp // TB,),
            in_specs=in_specs,
            out_specs=out_specs,
        ),
        compiler_params=pltpu.CompilerParams(
            dimension_semantics=("parallel",),
            vmem_limit_bytes=vmem_limit),
    )(x_flat, band2, wst, bst, wb, bb, wp, wpsum, bp)

    pred = pred[:B]                       # (B, output_num), drop batch padding
    if O == 1:
        pred = pred[:, 0]                 # torch .squeeze(-1)
    return pred


def init_params(key, seq_len, input_ch, output_num, lookback_days):
    """Deterministic nn.Linear-style init; weights stored transposed (in, out).

    The predictor weight is stored lane-dense as (O, T, H); it is equivalent to
    a torch (O, H*T) weight reshaped to (O, H, T) and transposed to (O, T, H)
    (the torch flatten order is ch*T + t).
    """
    H = HIDDEN
    ks = jax.random.split(key, 4)

    def lin(k, fan_in, fan_out):
        bound = 1.0 / math.sqrt(fan_in)
        kw, kb = jax.random.split(k)
        w = jax.random.uniform(kw, (fan_in, fan_out), jnp.float32, -bound, bound)
        b = jax.random.uniform(kb, (1, fan_out), jnp.float32, -bound, bound)
        return w, b

    ws, bs = lin(ks[0], input_ch, H)
    wt, bt = lin(ks[1], input_ch, H)
    wb, bb = lin(ks[2], 3 * lookback_days, H)
    bound = 1.0 / math.sqrt(seq_len * H)
    kw, kb = jax.random.split(ks[3])
    wp = jax.random.uniform(kw, (output_num, seq_len, H), jnp.float32, -bound, bound)
    bp = jax.random.uniform(kb, (1, output_num), jnp.float32, -bound, bound)
    return dict(ws=ws, bs=bs, wt=wt, bt=bt, wb=wb, bb=bb, wp=wp, bp=bp)


def reference_forward(params, candle, bc, bl, bu, *, moving_avg_kernel_size,
                      mxu_dtype=jnp.bfloat16):
    """Pure-JAX mirror of the PyTorch forward (with the same bf16 rounding the
    kernel applies to its MXU operands), used only for verification."""
    hi = jax.lax.Precision.HIGHEST

    def q(x):                                    # mimic bf16 MXU inputs
        return x.astype(mxu_dtype).astype(jnp.float32)

    seasonal, trend = _series_decomp(candle.astype(jnp.float32),
                                     moving_avg_kernel_size)

    def lbr(x, w, b):
        y = jnp.einsum("btc,ch->bth", q(x), q(w), precision=hi) + b
        mean = y.mean(axis=1, keepdims=True)
        var = ((y - mean) ** 2).mean(axis=1, keepdims=True)
        yn = (y - mean) / jnp.sqrt(var + EPS)
        return jnp.where(yn >= 0, yn, NEG_SLOPE * yn)

    ys = lbr(seasonal, params["ws"], params["bs"])
    yt = lbr(trend, params["wt"], params["bt"])
    band = jnp.concatenate([bc, bl, bu], axis=-1)
    yb = jnp.einsum("bl,lh->bh", q(band), q(params["wb"]), precision=hi) + params["bb"]
    out = ys + yt + yb[:, None, :]                               # (B, T, H)
    z = jnp.where(out >= 0, out, NEG_SLOPE * out)
    m = z.mean(axis=(1, 2), keepdims=True)
    v = ((z - m) ** 2).mean(axis=(1, 2), keepdims=True)
    zn = (z - m) / jnp.sqrt(v + EPS)
    pred = jnp.einsum("bth,oth->bo", zn, q(params["wp"]), precision=hi) + params["bp"]
    if pred.shape[-1] == 1:
        pred = pred[:, 0]
    return pred


if __name__ == "__main__":
    # small shapes consistent with the module
    B, seq_len, input_ch = 2, 8, 4
    output_num, lookback_days, moving_avg_kernel_size = 3, 5, 5

    key = jax.random.PRNGKey(0)
    kp, k1, k2, k3, k4 = jax.random.split(key, 5)
    params = init_params(kp, seq_len, input_ch, output_num, lookback_days)

    candle_inputs = jax.random.normal(k1, (B, seq_len, input_ch), jnp.float32)
    past_band_center = jax.random.normal(k2, (B, lookback_days), jnp.float32)
    past_band_upperbound = jax.random.normal(k3, (B, lookback_days), jnp.float32)
    past_band_lowerbound = jax.random.normal(k4, (B, lookback_days), jnp.float32)

    pred = dlinear_v2_forward(
        params, candle_inputs, past_band_center, past_band_lowerbound,
        past_band_upperbound, moving_avg_kernel_size=moving_avg_kernel_size)
    pred = jax.block_until_ready(pred)

    ref = reference_forward(
        params, candle_inputs, past_band_center, past_band_lowerbound,
        past_band_upperbound, moving_avg_kernel_size=moving_avg_kernel_size)

    assert pred.shape == (B, output_num), pred.shape
    assert jnp.allclose(pred, ref, rtol=1e-2, atol=1e-2), (pred, ref)

    print("KERNEL_OK")
</pallas_src>

<mosaic_0001>
module attributes {stable_mosaic.version = 11 : i64} {
  func.func @kernel(%arg0: i32, %arg1: memref<16x8xbf16, #tpu.memory_space<vmem>>, %arg2: memref<2x15xbf16, #tpu.memory_space<vmem>>, %arg3: memref<8x2048xbf16, #tpu.memory_space<vmem>>, %arg4: memref<1x2048xf32, #tpu.memory_space<vmem>>, %arg5: memref<15x1024xbf16, #tpu.memory_space<vmem>>, %arg6: memref<1x1024xf32, #tpu.memory_space<vmem>>, %arg7: memref<3x8192xbf16, #tpu.memory_space<vmem>>, %arg8: memref<1x3xf32, #tpu.memory_space<vmem>>, %arg9: memref<1x3xf32, #tpu.memory_space<vmem>>, %arg10: memref<2x3xf32, #tpu.memory_space<vmem>>) attributes {dimension_semantics = [#tpu.dimension_semantics<parallel>], iteration_bounds = array<i64: 1>, scalar_prefetch = 0 : i64, scratch_operands = 0 : i64, tpu.core_type = #tpu.core_type<tc>, window_params = [{transform_indices = @transform_0, window_bounds = array<i64: 16, 8>}, {transform_indices = @transform_1, window_bounds = array<i64: 2, 15>}, {pipeline_mode = #tpu.pipeline_mode<synchronous>, transform_indices = @transform_2, window_bounds = array<i64: 8, 2048>}, {pipeline_mode = #tpu.pipeline_mode<synchronous>, transform_indices = @transform_3, window_bounds = array<i64: 1, 2048>}, {pipeline_mode = #tpu.pipeline_mode<synchronous>, transform_indices = @transform_4, window_bounds = array<i64: 15, 1024>}, {pipeline_mode = #tpu.pipeline_mode<synchronous>, transform_indices = @transform_5, window_bounds = array<i64: 1, 1024>}, {pipeline_mode = #tpu.pipeline_mode<synchronous>, transform_indices = @transform_6, window_bounds = array<i64: 3, 8192>}, {pipeline_mode = #tpu.pipeline_mode<synchronous>, transform_indices = @transform_7, window_bounds = array<i64: 1, 3>}, {pipeline_mode = #tpu.pipeline_mode<synchronous>, transform_indices = @transform_8, window_bounds = array<i64: 1, 3>}, {transform_indices = @transform_9, window_bounds = array<i64: 2, 3>}]} {
    %c0 = arith.constant 0 : index
    %c0_0 = arith.constant 0 : index
    %0 = vector.load %arg1[%c0, %c0_0] : memref<16x8xbf16, #tpu.memory_space<vmem>>, vector<16x8xbf16>
    %c0_1 = arith.constant 0 : index
    %c0_2 = arith.constant 0 : index
    %1 = vector.load %arg3[%c0_1, %c0_2] : memref<8x2048xbf16, #tpu.memory_space<vmem>>, vector<8x2048xbf16>
    %cst = arith.constant dense<0.000000e+00> : vector<16x2048xf32>
    %2 = tpu.matmul %0, %1, %cst {dimension_numbers = #tpu.dot_dimension_numbers<[1], [0], [0], [1], [0, 0, 1, 1], [], []>} : vector<16x8xbf16>, vector<8x2048xbf16>, vector<16x2048xf32> -> vector<16x2048xf32>
    %c0_3 = arith.constant 0 : index
    %c0_4 = arith.constant 0 : index
    %3 = vector.load %arg4[%c0_3, %c0_4] : memref<1x2048xf32, #tpu.memory_space<vmem>>, vector<1x2048xf32>
    %4 = vector.broadcast %3 : vector<1x2048xf32> to vector<16x2048xf32>
    %5 = arith.addf %2, %4 : vector<16x2048xf32>
    %6 = vector.shape_cast %5 : vector<16x2048xf32> to vector<2x8x2048xf32>
    %cst_5 = arith.constant dense<0.000000e+00> : vector<2x2048xf32>
    %7 = vector.multi_reduction <add>, %6, %cst_5 [1] : vector<2x8x2048xf32> to vector<2x2048xf32>
    %8 = vector.shape_cast %7 : vector<2x2048xf32> to vector<2x1x2048xf32>
    %cst_6 = arith.constant 1.250000e-01 : f32
    %9 = vector.broadcast %cst_6 : f32 to vector<2x1x2048xf32>
    %10 = arith.mulf %8, %9 : vector<2x1x2048xf32>
    %11 = vector.broadcast %10 : vector<2x1x2048xf32> to vector<2x8x2048xf32>
    %12 = arith.subf %6, %11 : vector<2x8x2048xf32>
    %13 = arith.mulf %12, %12 : vector<2x8x2048xf32>
    %cst_7 = arith.constant dense<0.000000e+00> : vector<2x2048xf32>
    %14 = vector.multi_reduction <add>, %13, %cst_7 [1] : vector<2x8x2048xf32> to vector<2x2048xf32>
    %15 = vector.shape_cast %14 : vector<2x2048xf32> to vector<2x1x2048xf32>
    %cst_8 = arith.constant 1.250000e-01 : f32
    %16 = vector.broadcast %cst_8 : f32 to vector<2x1x2048xf32>
    %17 = arith.mulf %15, %16 : vector<2x1x2048xf32>
    %cst_9 = arith.constant 9.99999974E-6 : f32
    %18 = vector.broadcast %cst_9 : f32 to vector<2x1x2048xf32>
    %19 = arith.addf %17, %18 : vector<2x1x2048xf32>
    %20 = math.rsqrt %19 : vector<2x1x2048xf32>
    %21 = vector.broadcast %20 : vector<2x1x2048xf32> to vector<2x8x2048xf32>
    %22 = arith.mulf %12, %21 : vector<2x8x2048xf32>
    %cst_10 = arith.constant 0.000000e+00 : f32
    %23 = vector.broadcast %cst_10 : f32 to vector<2x8x2048xf32>
    %24 = arith.cmpf oge, %22, %23 : vector<2x8x2048xf32>
    %cst_11 = arith.constant 1.000000e-01 : f32
    %25 = vector.broadcast %cst_11 : f32 to vector<2x8x2048xf32>
    %26 = arith.mulf %25, %22 : vector<2x8x2048xf32>
    %27 = arith.select %24, %22, %26 : vector<2x8x2048xi1>, vector<2x8x2048xf32>
    %c0_12 = arith.constant 0 : index
    %c0_13 = arith.constant 0 : index
    %28 = vector.load %arg2[%c0_12, %c0_13] : memref<2x15xbf16, #tpu.memory_space<vmem>>, vector<2x15xbf16>
    %c0_14 = arith.constant 0 : index
    %c0_15 = arith.constant 0 : index
    %29 = vector.load %arg5[%c0_14, %c0_15] : memref<15x1024xbf16, #tpu.memory_space<vmem>>, vector<15x1024xbf16>
    %cst_16 = arith.constant dense<0.000000e+00> : vector<2x1024xf32>
    %30 = tpu.matmul %28, %29, %cst_16 {dimension_numbers = #tpu.dot_dimension_numbers<[1], [0], [0], [1], [0, 0, 1, 1], [], []>} : vector<2x15xbf16>, vector<15x1024xbf16>, vector<2x1024xf32> -> vector<2x1024xf32>
    %c0_17 = arith.constant 0 : index
    %c0_18 = arith.constant 0 : index
    %31 = vector.load %arg6[%c0_17, %c0_18] : memref<1x1024xf32, #tpu.memory_space<vmem>>, vector<1x1024xf32>
    %32 = vector.broadcast %31 : vector<1x1024xf32> to vector<2x1024xf32>
    %33 = arith.addf %30, %32 : vector<2x1024xf32>
    %34 = vector.extract_strided_slice %27 {offsets = [0, 0, 0], sizes = [2, 8, 1024], strides = [1, 1, 1]} : vector<2x8x2048xf32> to vector<2x8x1024xf32>
    %35 = vector.extract_strided_slice %27 {offsets = [0, 0, 1024], sizes = [2, 8, 1024], strides = [1, 1, 1]} : vector<2x8x2048xf32> to vector<2x8x1024xf32>
    %36 = arith.addf %34, %35 : vector<2x8x1024xf32>
    %37 = vector.shape_cast %33 : vector<2x1024xf32> to vector<2x1x1024xf32>
    %38 = vector.broadcast %37 : vector<2x1x1024xf32> to vector<2x8x1024xf32>
    %39 = arith.addf %36, %38 : vector<2x8x1024xf32>
    %cst_19 = arith.constant 0.000000e+00 : f32
    %40 = vector.broadcast %cst_19 : f32 to vector<2x8x1024xf32>
    %41 = arith.cmpf oge, %39, %40 : vector<2x8x1024xf32>
    %cst_20 = arith.constant 1.000000e-01 : f32
    %42 = vector.broadcast %cst_20 : f32 to vector<2x8x1024xf32>
    %43 = arith.mulf %42, %39 : vector<2x8x1024xf32>
    %44 = arith.select %41, %39, %43 : vector<2x8x1024xi1>, vector<2x8x1024xf32>
    %cst_21 = arith.constant dense<0.000000e+00> : vector<2x8xf32>
    %45 = vector.multi_reduction <add>, %44, %cst_21 [2] : vector<2x8x1024xf32> to vector<2x8xf32>
    %cst_22 = arith.constant dense<0.000000e+00> : vector<2xf32>
    %46 = vector.multi_reduction <add>, %45, %cst_22 [1] : vector<2x8xf32> to vector<2xf32>
    %47 = vector.shape_cast %46 : vector<2xf32> to vector<2x1xf32>
    %48 = arith.mulf %44, %44 : vector<2x8x1024xf32>
    %cst_23 = arith.constant dense<0.000000e+00> : vector<2x8xf32>
    %49 = vector.multi_reduction <add>, %48, %cst_23 [2] : vector<2x8x1024xf32> to vector<2x8xf32>
    %cst_24 = arith.constant dense<0.000000e+00> : vector<2xf32>
    %50 = vector.multi_reduction <add>, %49, %cst_24 [1] : vector<2x8xf32> to vector<2xf32>
    %51 = vector.shape_cast %50 : vector<2xf32> to vector<2x1xf32>
    %cst_25 = arith.constant 1.22070313E-4 : f32
    %52 = vector.broadcast %cst_25 : f32 to vector<2x1xf32>
    %53 = arith.mulf %47, %52 : vector<2x1xf32>
    %cst_26 = arith.constant 1.22070313E-4 : f32
    %54 = vector.broadcast %cst_26 : f32 to vector<2x1xf32>
    %55 = arith.mulf %51, %54 : vector<2x1xf32>
    %56 = arith.mulf %53, %53 : vector<2x1xf32>
    %57 = arith.subf %55, %56 : vector<2x1xf32>
    %cst_27 = arith.constant 0.000000e+00 : f32
    %58 = vector.broadcast %cst_27 : f32 to vector<2x1xf32>
    %59 = arith.maximumf %57, %58 : vector<2x1xf32>
    %cst_28 = arith.constant 9.99999974E-6 : f32
    %60 = vector.broadcast %cst_28 : f32 to vector<2x1xf32>
    %61 = arith.addf %59, %60 : vector<2x1xf32>
    %62 = math.rsqrt %61 : vector<2x1xf32>
    %63 = vector.shape_cast %44 : vector<2x8x1024xf32> to vector<2x8192xf32>
    %64 = arith.truncf %63 : vector<2x8192xf32> to vector<2x8192xbf16>
    %c0_29 = arith.constant 0 : index
    %c0_30 = arith.constant 0 : index
    %65 = vector.load %arg7[%c0_29, %c0_30] : memref<3x8192xbf16, #tpu.memory_space<vmem>>, vector<3x8192xbf16>
    %cst_31 = arith.constant dense<0.000000e+00> : vector<2x3xf32>
    %66 = tpu.matmul %64, %65, %cst_31 {dimension_numbers = #tpu.dot_dimension_numbers<[1], [1], [0], [0], [0, 0, 1, 0], [], []>} : vector<2x8192xbf16>, vector<3x8192xbf16>, vector<2x3xf32> -> vector<2x3xf32>
    %c0_32 = arith.constant 0 : index
    %c0_33 = arith.constant 0 : index
    %67 = vector.load %arg8[%c0_32, %c0_33] : memref<1x3xf32, #tpu.memory_space<vmem>>, vector<1x3xf32>
    %68 = vector.broadcast %53 : vector<2x1xf32> to vector<2x3xf32>
    %69 = vector.broadcast %67 : vector<1x3xf32> to vector<2x3xf32>
    %70 = arith.mulf %68, %69 : vector<2x3xf32>
    %71 = arith.subf %66, %70 : vector<2x3xf32>
    %72 = vector.broadcast %62 : vector<2x1xf32> to vector<2x3xf32>
    %73 = arith.mulf %71, %72 : vector<2x3xf32>
    %c0_34 = arith.constant 0 : index
    %c0_35 = arith.constant 0 : index
    %74 = vector.load %arg9[%c0_34, %c0_35] : memref<1x3xf32, #tpu.memory_space<vmem>>, vector<1x3xf32>
    %75 = vector.broadcast %74 : vector<1x3xf32> to vector<2x3xf32>
    %76 = arith.addf %73, %75 : vector<2x3xf32>
    %c0_36 = arith.constant 0 : index
    %c0_37 = arith.constant 0 : index
    %77 = vector.load %arg10[%c0_36, %c0_37] : memref<2x3xf32, #tpu.memory_space<vmem>>, vector<2x3xf32>
    tpu.vector_store %arg10[%c0_36, %c0_37], %76 {strides = array<i32>} : memref<2x3xf32, #tpu.memory_space<vmem>>, vector<2x3xf32>,
    return
  }
  func.func @transform_0(%arg0: i32) -> (i32, i32) {
    %c0_i32 = arith.constant 0 : i32
    %c0_i32_0 = arith.constant 0 : i32
    return %arg0, %c0_i32 : i32, i32
  }
  func.func @transform_1(%arg0: i32) -> (i32, i32) {
    %c0_i32 = arith.constant 0 : i32
    %c0_i32_0 = arith.constant 0 : i32
    return %arg0, %c0_i32 : i32, i32
  }
  func.func @transform_2(%arg0: i32) -> (i32, i32) {
    %c0_i32 = arith.constant 0 : i32
    %c0_i32_0 = arith.constant 0 : i32
    %c0_i32_1 = arith.constant 0 : i32
    return %c0_i32, %c0_i32_0 : i32, i32
  }
  func.func @transform_3(%arg0: i32) -> (i32, i32) {
    %c0_i32 = arith.constant 0 : i32
    %c0_i32_0 = arith.constant 0 : i32
    %c0_i32_1 = arith.constant 0 : i32
    return %c0_i32, %c0_i32_0 : i32, i32
  }
  func.func @transform_4(%arg0: i32) -> (i32, i32) {
    %c0_i32 = arith.constant 0 : i32
    %c0_i32_0 = arith.constant 0 : i32
    %c0_i32_1 = arith.constant 0 : i32
    return %c0_i32, %c0_i32_0 : i32, i32
  }
  func.func @transform_5(%arg0: i32) -> (i32, i32) {
    %c0_i32 = arith.constant 0 : i32
    %c0_i32_0 = arith.constant 0 : i32
    %c0_i32_1 = arith.constant 0 : i32
    return %c0_i32, %c0_i32_0 : i32, i32
  }
  func.func @transform_6(%arg0: i32) -> (i32, i32) {
    %c0_i32 = arith.constant 0 : i32
    %c0_i32_0 = arith.constant 0 : i32
    %c0_i32_1 = arith.constant 0 : i32
    return %c0_i32, %c0_i32_0 : i32, i32
  }
  func.func @transform_7(%arg0: i32) -> (i32, i32) {
    %c0_i32 = arith.constant 0 : i32
    %c0_i32_0 = arith.constant 0 : i32
    %c0_i32_1 = arith.constant 0 : i32
    return %c0_i32, %c0_i32_0 : i32, i32
  }
  func.func @transform_8(%arg0: i32) -> (i32, i32) {
    %c0_i32 = arith.constant 0 : i32
    %c0_i32_0 = arith.constant 0 : i32
    %c0_i32_1 = arith.constant 0 : i32
    return %c0_i32, %c0_i32_0 : i32, i32
  }
  func.func @transform_9(%arg0: i32) -> (i32, i32) {
    %c0_i32 = arith.constant 0 : i32
    %c0_i32_0 = arith.constant 0 : i32
    return %arg0, %c0_i32 : i32, i32
  }
}

</mosaic_0001>

<llo_original>
// kernel: tpu_custom_call.1
$region0: #{tpu_custom_call.1}
  #allocation0 [shape = 'u32[]', space=smem, size = 0x4, offset = 0x4, fixed_abs, tag = 'smem constant byte address 0x4 - core index']
  #allocation1 [shape = 'u32[144,128]{1,0:T(1,128)}', space=vmem, size = 0x12000, scoped, tag = 'internal scratch']
  %s0 = inlined_call_operand.vmem [shape: bf16[16,8], index: 0, kind: input, shape index: {}]
  %s1 = inlined_call_operand.vmem [shape: bf16[2,15], index: 1, kind: input, shape index: {}]
  %s2 = inlined_call_operand.hbm [shape: bf16[8,2048], index: 2, kind: input, shape index: {}]
  %s3 = inlined_call_operand.vmem [shape: f32[1,2048], index: 3, kind: input, shape index: {}]
  %s4 = inlined_call_operand.hbm [shape: bf16[15,1024], index: 4, kind: input, shape index: {}]
  %s5 = inlined_call_operand.hbm [shape: f32[1,1024], index: 5, kind: input, shape index: {}]
  %s6 = inlined_call_operand.hbm [shape: bf16[3,8192], index: 6, kind: input, shape index: {}]
  %s7 = inlined_call_operand.vmem [shape: f32[1,3], index: 7, kind: input, shape index: {}]
  %s8 = inlined_call_operand.vmem [shape: f32[1,3], index: 8, kind: input, shape index: {}]
  %s9 = inlined_call_operand.hbm [shape: f32[2,3], index: 9, kind: output, shape index: {}]
  %s10 = sld [smem:[#allocation0]]
  $region62: #{tpu_custom_call.1} parent=0
    _
  %s12 = ssub.s32 1, %s10
  %s13 = scalar_select 0, %s12, %s10
  $region1: #{tpu_custom_call.1} parent=0
    #allocation2 [shape = 'u8[32768]{0}', space=vmem, size = 0x8000, scoped, tag = 'input window, operand 2, single buffered']
    #allocation3 [shape = 's32[1]{0}', space=sflag, size = 0x4, scoped, tag = 'scoped memory for tpu_custom_call.1']
    #allocation4 [shape = 's32[1]{0}', space=sflag, size = 0x4, scoped, tag = 'scoped memory for tpu_custom_call.1']
    #allocation5 [shape = 'u8[32768]{0}', space=vmem, size = 0x8000, scoped, tag = 'input window, operand 4, single buffered']
    #allocation6 [shape = 's32[1]{0}', space=sflag, size = 0x4, scoped, tag = 'scoped memory for tpu_custom_call.1']
    #allocation7 [shape = 'u8[4096]{0}', space=vmem, size = 0x1000, scoped, tag = 'input window, operand 5, single buffered']
    #allocation8 [shape = 'u8[65536]{0}', space=vmem, size = 0x10000, scoped, tag = 'input window, operand 6, single buffered']
    #allocation9 [shape = 's32[1]{0}', space=sflag, size = 0x4, scoped, tag = 'scoped memory for tpu_custom_call.1']
    #allocation10 [shape = 'u8[1024]{0}', space=vmem, size = 0x400, scoped, tag = 'output window, operand 0, single buffered']
    %14 = vsyncpa [#allocation3], 0
    %15 = vsyncpa [#allocation6], 0
    %16 = vsyncpa [#allocation9], 0
    %17 = vsyncpa [#allocation4], 0
    // Predicated region
    $region2: #{tpu_custom_call.1} parent=1 // pred_check
      _
    $region3: #{tpu_custom_call.1} parent=1 // pred_check_branch
      %19 = sbr.rel (0) target = $region5
    $region4: #{tpu_custom_call.1} parent=1 // pred_region
      _
    $region5: #{tpu_custom_call.1} parent=1 // pred_fallthru
      _
    // Predicated region
    $region6: #{tpu_custom_call.1} parent=1 // pred_check
      _
    $region7: #{tpu_custom_call.1} parent=1 // pred_check_branch
      %21 = sbr.rel (0) target = $region9
    $region8: #{tpu_custom_call.1} parent=1 // pred_region
      _
    $region9: #{tpu_custom_call.1} parent=1 // pred_fallthru
      _
    // Predicated region
    $region10: #{tpu_custom_call.1} parent=1 // pred_check
      _
    $region11: #{tpu_custom_call.1} parent=1 // pred_check_branch
      %23 = sbr.rel (0) target = $region13
    $region12: #{tpu_custom_call.1} parent=1 // pred_region
      %s25 = ssub.s32 1024, 1024
      %26 = vsyncadd [#allocation3], %s25
      %s28 = sshll.u32 [#allocation2], 4
      %s29 = int_to_ptr.vmem [resolvable:$true] %s28
      %31 = dma.hbm_to_vmem [thread:$0]  %s2, 1024, %s29, [#allocation3]
    $region13: #{tpu_custom_call.1} parent=1 // pred_fallthru
      _
    // Predicated region
    $region14: #{tpu_custom_call.1} parent=1 // pred_check
      _
    $region15: #{tpu_custom_call.1} parent=1 // pred_check_branch
      %33 = sbr.rel (0) target = $region17
    $region16: #{tpu_custom_call.1} parent=1 // pred_region
      _
    $region17: #{tpu_custom_call.1} parent=1 // pred_fallthru
      _
    // Predicated region
    $region18: #{tpu_custom_call.1} parent=1 // pred_check
      _
    $region19: #{tpu_custom_call.1} parent=1 // pred_check_branch
      %35 = sbr.rel (0) target = $region21
    $region20: #{tpu_custom_call.1} parent=1 // pred_region
      %s37 = ssub.s32 1024, 1024
      %38 = vsyncadd [#allocation6], %s37
      %s39 = sshll.u32 [#allocation5], 4
      %s40 = int_to_ptr.vmem [resolvable:$true] %s39
      %45 = dma.hbm_to_vmem [thread:$0]  %s4, 1024, %s40, [#allocation6], 512, 512, 32
    $region21: #{tpu_custom_call.1} parent=1 // pred_fallthru
      _
    // Predicated region
    $region22: #{tpu_custom_call.1} parent=1 // pred_check
      _
    $region23: #{tpu_custom_call.1} parent=1 // pred_check_branch
      %47 = sbr.rel (0) target = $region25
    $region24: #{tpu_custom_call.1} parent=1 // pred_region
      %s49 = ssub.s32 128, 128
      %50 = vsyncadd [#allocation6], %s49
      %s52 = sshll.u32 [#allocation7], 4
      %s53 = int_to_ptr.vmem [resolvable:$true] %s52
      %55 = dma.hbm_to_vmem [thread:$0]  %s5, 128, %s53, [#allocation6]
    $region25: #{tpu_custom_call.1} parent=1 // pred_fallthru
      _
    // Predicated region
    $region26: #{tpu_custom_call.1} parent=1 // pred_check
      _
    $region27: #{tpu_custom_call.1} parent=1 // pred_check_branch
      %57 = sbr.rel (0) target = $region29
    $region28: #{tpu_custom_call.1} parent=1 // pred_region
      %s59 = ssub.s32 2048, 2048
      %60 = vsyncadd [#allocation9], %s59
      %s62 = sshll.u32 [#allocation8], 4
      %s63 = int_to_ptr.vmem [resolvable:$true] %s62
      %65 = dma.hbm_to_vmem [thread:$0]  %s6, 2048, %s63, [#allocation9]
    $region29: #{tpu_custom_call.1} parent=1 // pred_fallthru
      _
    // Predicated region
    $region30: #{tpu_custom_call.1} parent=1 // pred_check
      _
    $region31: #{tpu_custom_call.1} parent=1 // pred_check_branch
      %67 = sbr.rel (0) target = $region33
    $region32: #{tpu_custom_call.1} parent=1 // pred_region
      _
    $region33: #{tpu_custom_call.1} parent=1 // pred_fallthru
      _
    // Predicated region
    $region34: #{tpu_custom_call.1} parent=1 // pred_check
      _
    $region35: #{tpu_custom_call.1} parent=1 // pred_check_branch
      %69 = sbr.rel (0) target = $region37
    $region36: #{tpu_custom_call.1} parent=1 // pred_region
      _
    $region37: #{tpu_custom_call.1} parent=1 // pred_fallthru
      _
    // Predicated region
    $region38: #{tpu_custom_call.1} parent=1 // pred_check
      _
    $region39: #{tpu_custom_call.1} parent=1 // pred_check_branch
      %71 = sbr.rel (0) target = $region41
    $region40: #{tpu_custom_call.1} parent=1 // pred_region
      %72 = dma.done [#allocation3], 1024
    $region41: #{tpu_custom_call.1} parent=1 // pred_fallthru
      _
    // Predicated region
    $region42: #{tpu_custom_call.1} parent=1 // pred_check
      _
    $region43: #{tpu_custom_call.1} parent=1 // pred_check_branch
      %74 = sbr.rel (0) target = $region45
    $region44: #{tpu_custom_call.1} parent=1 // pred_region
      %75 = dma.done [#allocation6], 1024
    $region45: #{tpu_custom_call.1} parent=1 // pred_fallthru
      _
    // Predicated region
    $region46: #{tpu_custom_call.1} parent=1 // pred_check
      _
    $region47: #{tpu_custom_call.1} parent=1 // pred_check_branch
      %77 = sbr.rel (0) target = $region49
    $region48: #{tpu_custom_call.1} parent=1 // pred_region
      %78 = dma.done [#allocation6], 128
    $region49: #{tpu_custom_call.1} parent=1 // pred_fallthru
      _
    // Predicated region
    $region50: #{tpu_custom_call.1} parent=1 // pred_check
      _
    $region51: #{tpu_custom_call.1} parent=1 // pred_check_branch
      %80 = sbr.rel (0) target = $region53
    $region52: #{tpu_custom_call.1} parent=1 // pred_region
      %81 = dma.done [#allocation9], 2048
    $region53: #{tpu_custom_call.1} parent=1 // pred_fallthru
      _
    %v83 = vld [vmem:[%s0] sm:$0xf]
    %v84 = vld [vmem:[%s0 + $0x4] sm:$0xf]
    %v85 = vld [vmem:[#allocation2] sm:$0xff]
    %v86 = vld [vmem:[#allocation2 + $0x8] sm:$0xff]
    %v87 = vld [vmem:[#allocation2 + $0x10] sm:$0xff]
    %v88 = vld [vmem:[#allocation2 + $0x18] sm:$0xff]
    %v89 = vld [vmem:[#allocation2 + $0x20] sm:$0xff]
    %v90 = vld [vmem:[#allocation2 + $0x28] sm:$0xff]
    %v91 = vld [vmem:[#allocation2 + $0x30] sm:$0xff]
    %v92 = vld [vmem:[#allocation2 + $0x38] sm:$0xff]
    %v93 = vld [vmem:[%s3] sm:$0xff]
    %v94 = vld [vmem:[%s3 + $0x8] sm:$0xff]
    %v97 = vlaneseq
    %v98 = vshrl.u32 %v97, 7
    %v99 = vsub.s32 0, %v98
    %v100 = vrot.slane %v93, %v99
    %v101 = vlaneseq
    %v102 = vshrl.u32 %v101, 7
    %v103 = vsub.s32 1, %v102
    %v104 = vrot.slane %v93, %v103
    %v105 = vlaneseq
    %v106 = vshrl.u32 %v105, 7
    %v107 = vsub.s32 2, %v106
    %v108 = vrot.slane %v93, %v107
    %v109 = vlaneseq
    %v110 = vshrl.u32 %v109, 7
    %v111 = vsub.s32 3, %v110
    %v112 = vrot.slane %v93, %v111
    %v113 = vlaneseq
    %v114 = vshrl.u32 %v113, 7
    %v115 = vsub.s32 4, %v114
    %v116 = vrot.slane %v93, %v115
    %v117 = vlaneseq
    %v118 = vshrl.u32 %v117, 7
    %v119 = vsub.s32 5, %v118
    %v120 = vrot.slane %v93, %v119
    %v121 = vlaneseq
    %v122 = vshrl.u32 %v121, 7
    %v123 = vsub.s32 6, %v122
    %v124 = vrot.slane %v93, %v123
    %v125 = vlaneseq
    %v126 = vshrl.u32 %v125, 7
    %v127 = vsub.s32 7, %v126
    %v128 = vrot.slane %v93, %v127
    %v129 = vlaneseq
    %v130 = vshrl.u32 %v129, 7
    %v131 = vsub.s32 0, %v130
    %v132 = vrot.slane %v94, %v131
    %v133 = vlaneseq
    %v134 = vshrl.u32 %v133, 7
    %v135 = vsub.s32 1, %v134
    %v136 = vrot.slane %v94, %v135
    %v137 = vlaneseq
    %v138 = vshrl.u32 %v137, 7
    %v139 = vsub.s32 2, %v138
    %v140 = vrot.slane %v94, %v139
    %v141 = vlaneseq
    %v142 = vshrl.u32 %v141, 7
    %v143 = vsub.s32 3, %v142
    %v144 = vrot.slane %v94, %v143
    %v145 = vlaneseq
    %v146 = vshrl.u32 %v145, 7
    %v147 = vsub.s32 4, %v146
    %v148 = vrot.slane %v94, %v147
    %v149 = vlaneseq
    %v150 = vshrl.u32 %v149, 7
    %v151 = vsub.s32 5, %v150
    %v152 = vrot.slane %v94, %v151
    %v153 = vlaneseq
    %v154 = vshrl.u32 %v153, 7
    %v155 = vsub.s32 6, %v154
    %v156 = vrot.slane %v94, %v155
    %v157 = vlaneseq
    %v158 = vshrl.u32 %v157, 7
    %v159 = vsub.s32 7, %v158
    %v160 = vrot.slane %v94, %v159
    %v179 = vunpack.c.l.b16 %v83
    %v180 = vunpack.c.l.b16 %v84
    %v181 = vpack.c.b16 %v180, %v179
    %v190 = vunpack.c.l.b16 %v85
    %v191 = vunpack.c.h.b16 %v85
    %v192 = vunpack.c.l.b16 %v86
    %v193 = vunpack.c.h.b16 %v86
    %v194 = vunpack.c.l.b16 %v87
    %v195 = vunpack.c.h.b16 %v87
    %v196 = vunpack.c.l.b16 %v88
    %v197 = vunpack.c.h.b16 %v88
    %v198 = vunpack.c.l.b16 %v89
    %v199 = vunpack.c.h.b16 %v89
    %v200 = vunpack.c.l.b16 %v90
    %v201 = vunpack.c.h.b16 %v90
    %v202 = vunpack.c.l.b16 %v91
    %v203 = vunpack.c.h.b16 %v91
    %v204 = vunpack.c.l.b16 %v92
    %v205 = vunpack.c.h.b16 %v92
    %v206 = vpack.c.b16 %v190, %v190
    %v207 = vpack.c.b16 %v191, %v191
    %v208 = vpack.c.b16 %v192, %v192
    %v209 = vpack.c.b16 %v193, %v193
    %v210 = vpack.c.b16 %v194, %v194
    %v211 = vpack.c.b16 %v195, %v195
    %v212 = vpack.c.b16 %v196, %v196
    %v213 = vpack.c.b16 %v197, %v197
    %v214 = vpack.c.b16 %v198, %v198
    %v215 = vpack.c.b16 %v199, %v199
    %v216 = vpack.c.b16 %v200, %v200
    %v217 = vpack.c.b16 %v201, %v201
    %v218 = vpack.c.b16 %v202, %v202
    %v219 = vpack.c.b16 %v203, %v203
    %v220 = vpack.c.b16 %v204, %v204
    %v221 = vpack.c.b16 %v205, %v205
    %vm222 = vcmask 64512
    %v224 = vsel %vm222, %v181, 0
    %vm226 = vcmask 1043456
    %v228 = vsel %vm226, %v206, 0
    %v231 = vsel %vm226, %v207, 0
    %v234 = vsel %vm226, %v208, 0
    %v237 = vsel %vm226, %v209, 0
    %v240 = vsel %vm226, %v210, 0
    %v243 = vsel %vm226, %v211, 0
    %v246 = vsel %vm226, %v212, 0
    %v249 = vsel %vm226, %v213, 0
    %v252 = vsel %vm226, %v214, 0
    %v255 = vsel %vm226, %v215, 0
    %v258 = vsel %vm226, %v216, 0
    %v261 = vsel %vm226, %v217, 0
    %v264 = vsel %vm226, %v218, 0
    %v267 = vsel %vm226, %v219, 0
    %v270 = vsel %vm226, %v220, 0
    %v273 = vsel %vm226, %v221, 0
    %275 = vmatprep.subr.bf16.mxu0 0
    %276 = vmatpush1.bf16.msra.mxu0 0
    %277 = vmatprep.subr.bf16.mxu0 0
    %278 = vmatpush1.bf16.msra.mxu0 0
    %279 = vmatprep.subr.bf16.mxu0 0
    %280 = vmatpush1.bf16.msra.mxu0 0
    %281 = vmatprep.subr.bf16.mxu0 0
    %282 = vmatpush1.bf16.msra.mxu0 0
    %283 = vmatprep.subr.bf16.mxu0 0
    %284 = vmatpush1.bf16.msra.mxu0 0
    %285 = vmatprep.subr.bf16.mxu0 0
    %286 = vmatpush1.bf16.msra.mxu0 0
    %287 = vmatprep.subr.bf16.mxu0 0
    %288 = vmatpush1.bf16.msra.mxu0 0
    %289 = vmatprep.subr.bf16.mxu0 %v231
    %290 = vmatpush1.bf16.msra.mxu0 %v228
    %291 = vmatprep.subr.bf16.mxu0 0
    %292 = vmatpush2.bf16.msra.mxu0 0
    %293 = vmatprep.subr.bf16.mxu0 0
    %294 = vmatpush2.bf16.msra.mxu0 0
    %295 = vmatprep.subr.bf16.mxu0 0
    %296 = vmatpush2.bf16.msra.mxu0 0
    %297 = vmatprep.subr.bf16.mxu0 0
    %298 = vmatpush2.bf16.msra.mxu0 0
    %299 = vmatprep.subr.bf16.mxu0 0
    %300 = vmatpush2.bf16.msra.mxu0 0
    %301 = vmatprep.subr.bf16.mxu0 0
    %302 = vmatpush2.bf16.msra.mxu0 0
    %303 = vmatprep.subr.bf16.mxu0 0
    %304 = vmatpush2.bf16.msra.mxu0 0
    %305 = vmatprep.subr.bf16.mxu0 0
    %306 = vmatpush2.bf16.msra.mxu0 0
    %307 = vmatprep.mubr.bf16.mxu0 0
    %308 = vmatmul.mubr.bf16.gmra.mxu0 %v224
    %v309 = vpop.f32.mrf.mxu0
    %v310 = vadd.f32 %v100, %v309
    %v311 = vpop.f32.mrf.mxu0
    %v312 = vadd.f32 %v104, %v311
    %v313 = vpop.f32.mrf.mxu0
    %v314 = vadd.f32 %v100, %v313
    %v315 = vpop.f32.mrf.mxu0
    %v316 = vadd.f32 %v104, %v315
    %317 = vdwg.mxu0
    %318 = vmatprep.subr.bf16.mxu0 0
    %319 = vmatpush1.bf16.msra.mxu0 0
    %320 = vmatprep.subr.bf16.mxu0 0
    %321 = vmatpush1.bf16.msra.mxu0 0
    %322 = vmatprep.subr.bf16.mxu0 0
    %323 = vmatpush1.bf16.msra.mxu0 0
    %324 = vmatprep.subr.bf16.mxu0 0
    %325 = vmatpush1.bf16.msra.mxu0 0
    %326 = vmatprep.subr.bf16.mxu0 0
    %327 = vmatpush1.bf16.msra.mxu0 0
    %328 = vmatprep.subr.bf16.mxu0 0
    %329 = vmatpush1.bf16.msra.mxu0 0
    %330 = vmatprep.subr.bf16.mxu0 0
    %331 = vmatpush1.bf16.msra.mxu0 0
    %332 = vmatprep.subr.bf16.mxu0 %v237
    %333 = vmatpush1.bf16.msra.mxu0 %v234
    %334 = vmatprep.subr.bf16.mxu0 0
    %335 = vmatpush2.bf16.msra.mxu0 0
    %336 = vmatprep.subr.bf16.mxu0 0
    %337 = vmatpush2.bf16.msra.mxu0 0
    %338 = vmatprep.subr.bf16.mxu0 0
    %339 = vmatpush2.bf16.msra.mxu0 0
    %340 = vmatprep.subr.bf16.mxu0 0
    %341 = vmatpush2.bf16.msra.mxu0 0
    %342 = vmatprep.subr.bf16.mxu0 0
    %343 = vmatpush2.bf16.msra.mxu0 0
    %344 = vmatprep.subr.bf16.mxu0 0
    %345 = vmatpush2.bf16.msra.mxu0 0
    %346 = vmatprep.subr.bf16.mxu0 0
    %347 = vmatpush2.bf16.msra.mxu0 0
    %348 = vmatprep.subr.bf16.mxu0 0
    %349 = vmatpush2.bf16.msra.mxu0 0
    %350 = vmatprep.mubr.bf16.mxu0 0
    %351 = vmatmul.mubr.bf16.gmra.mxu0 %v224
    %v352 = vpop.f32.mrf.mxu0
    %v353 = vadd.f32 %v108, %v352
    %v354 = vpop.f32.mrf.mxu0
    %v355 = vadd.f32 %v112, %v354
    %v356 = vpop.f32.mrf.mxu0
    %v357 = vadd.f32 %v108, %v356
    %v358 = vpop.f32.mrf.mxu0
    %v359 = vadd.f32 %v112, %v358
    %360 = vdwg.mxu0
    %361 = vmatprep.subr.bf16.mxu0 0
    %362 = vmatpush1.bf16.msra.mxu0 0
    %363 = vmatprep.subr.bf16.mxu0 0
    %364 = vmatpush1.bf16.msra.mxu0 0
    %365 = vmatprep.subr.bf16.mxu0 0
    %366 = vmatpush1.bf16.msra.mxu0 0
    %367 = vmatprep.subr.bf16.mxu0 0
    %368 = vmatpush1.bf16.msra.mxu0 0
    %369 = vmatprep.subr.bf16.mxu0 0
    %370 = vmatpush1.bf16.msra.mxu0 0
    %371 = vmatprep.subr.bf16.mxu0 0
    %372 = vmatpush1.bf16.msra.mxu0 0
    %373 = vmatprep.subr.bf16.mxu0 0
    %374 = vmatpush1.bf16.msra.mxu0 0
    %375 = vmatprep.subr.bf16.mxu0 %v243
    %376 = vmatpush1.bf16.msra.mxu0 %v240
    %377 = vmatprep.subr.bf16.mxu0 0
    %378 = vmatpush2.bf16.msra.mxu0 0
    %379 = vmatprep.subr.bf16.mxu0 0
    %380 = vmatpush2.bf16.msra.mxu0 0
    %381 = vmatprep.subr.bf16.mxu0 0
    %382 = vmatpush2.bf16.msra.mxu0 0
    %383 = vmatprep.subr.bf16.mxu0 0
    %384 = vmatpush2.bf16.msra.mxu0 0
    %385 = vmatprep.subr.bf16.mxu0 0
    %386 = vmatpush2.bf16.msra.mxu0 0
    %387 = vmatprep.subr.bf16.mxu0 0
    %388 = vmatpush2.bf16.msra.mxu0 0
    %389 = vmatprep.subr.bf16.mxu0 0
    %390 = vmatpush2.bf16.msra.mxu0 0
    %391 = vmatprep.subr.bf16.mxu0 0
    %392 = vmatpush2.bf16.msra.mxu0 0
    %393 = vmatprep.mubr.bf16.mxu0 0
    %394 = vmatmul.mubr.bf16.gmra.mxu0 %v224
    %v395 = vpop.f32.mrf.mxu0
    %v396 = vadd.f32 %v116, %v395
    %v397 = vpop.f32.mrf.mxu0
    %v398 = vadd.f32 %v120, %v397
    %v399 = vpop.f32.mrf.mxu0
    %v400 = vadd.f32 %v116, %v399
    %v401 = vpop.f32.mrf.mxu0
    %v402 = vadd.f32 %v120, %v401
    %403 = vdwg.mxu0
    %404 = vmatprep.subr.bf16.mxu0 0
    %405 = vmatpush1.bf16.msra.mxu0 0
    %406 = vmatprep.subr.bf16.mxu0 0
    %407 = vmatpush1.bf16.msra.mxu0 0
    %408 = vmatprep.subr.bf16.mxu0 0
    %409 = vmatpush1.bf16.msra.mxu0 0
    %410 = vmatprep.subr.bf16.mxu0 0
    %411 = vmatpush1.bf16.msra.mxu0 0
    %412 = vmatprep.subr.bf16.mxu0 0
    %413 = vmatpush1.bf16.msra.mxu0 0
    %414 = vmatprep.subr.bf16.mxu0 0
    %415 = vmatpush1.bf16.msra.mxu0 0
    %416 = vmatprep.subr.bf16.mxu0 0
    %417 = vmatpush1.bf16.msra.mxu0 0
    %418 = vmatprep.subr.bf16.mxu0 %v249
    %419 = vmatpush1.bf16.msra.mxu0 %v246
    %420 = vmatprep.subr.bf16.mxu0 0
    %421 = vmatpush2.bf16.msra.mxu0 0
    %422 = vmatprep.subr.bf16.mxu0 0
    %423 = vmatpush2.bf16.msra.mxu0 0
    %424 = vmatprep.subr.bf16.mxu0 0
    %425 = vmatpush2.bf16.msra.mxu0 0
    %426 = vmatprep.subr.bf16.mxu0 0
    %427 = vmatpush2.bf16.msra.mxu0 0
    %428 = vmatprep.subr.bf16.mxu0 0
    %429 = vmatpush2.bf16.msra.mxu0 0
    %430 = vmatprep.subr.bf16.mxu0 0
    %431 = vmatpush2.bf16.msra.mxu0 0
    %432 = vmatprep.subr.bf16.mxu0 0
    %433 = vmatpush2.bf16.msra.mxu0 0
    %434 = vmatprep.subr.bf16.mxu0 0
    %435 = vmatpush2.bf16.msra.mxu0 0
    %436 = vmatprep.mubr.bf16.mxu0 0
    %437 = vmatmul.mubr.bf16.gmra.mxu0 %v224
    %v438 = vpop.f32.mrf.mxu0
    %v439 = vadd.f32 %v124, %v438
    %v440 = vpop.f32.mrf.mxu0
    %v441 = vadd.f32 %v128, %v440
    %v442 = vpop.f32.mrf.mxu0
    %v443 = vadd.f32 %v124, %v442
    %v444 = vpop.f32.mrf.mxu0
    %v445 = vadd.f32 %v128, %v444
    %446 = vdwg.mxu0
    %447 = vmatprep.subr.bf16.mxu0 0
    %448 = vmatpush1.bf16.msra.mxu0 0
    %449 = vmatprep.subr.bf16.mxu0 0
    %450 = vmatpush1.bf16.msra.mxu0 0
    %451 = vmatprep.subr.bf16.mxu0 0
    %452 = vmatpush1.bf16.msra.mxu0 0
    %453 = vmatprep.subr.bf16.mxu0 0
    %454 = vmatpush1.bf16.msra.mxu0 0
    %455 = vmatprep.subr.bf16.mxu0 0
    %456 = vmatpush1.bf16.msra.mxu0 0
    %457 = vmatprep.subr.bf16.mxu0 0
    %458 = vmatpush1.bf16.msra.mxu0 0
    %459 = vmatprep.subr.bf16.mxu0 0
    %460 = vmatpush1.bf16.msra.mxu0 0
    %461 = vmatprep.subr.bf16.mxu0 %v255
    %462 = vmatpush1.bf16.msra.mxu0 %v252
    %463 = vmatprep.subr.bf16.mxu0 0
    %464 = vmatpush2.bf16.msra.mxu0 0
    %465 = vmatprep.subr.bf16.mxu0 0
    %466 = vmatpush2.bf16.msra.mxu0 0
    %467 = vmatprep.subr.bf16.mxu0 0
    %468 = vmatpush2.bf16.msra.mxu0 0
    %469 = vmatprep.subr.bf16.mxu0 0
    %470 = vmatpush2.bf16.msra.mxu0 0
    %471 = vmatprep.subr.bf16.mxu0 0
    %472 = vmatpush2.bf16.msra.mxu0 0
    %473 = vmatprep.subr.bf16.mxu0 0
    %474 = vmatpush2.bf16.msra.mxu0 0
    %475 = vmatprep.subr.bf16.mxu0 0
    %476 = vmatpush2.bf16.msra.mxu0 0
    %477 = vmatprep.subr.bf16.mxu0 0
    %478 = vmatpush2.bf16.msra.mxu0 0
    %479 = vmatprep.mubr.bf16.mxu0 0
    %480 = vmatmul.mubr.bf16.gmra.mxu0 %v224
    %v481 = vpop.f32.mrf.mxu0
    %v482 = vadd.f32 %v132, %v481
    %v483 = vpop.f32.mrf.mxu0
    %v484 = vadd.f32 %v136, %v483
    %v485 = vpop.f32.mrf.mxu0
    %v486 = vadd.f32 %v132, %v485
    %v487 = vpop.f32.mrf.mxu0
    %v488 = vadd.f32 %v136, %v487
    %489 = vdwg.mxu0
    %490 = vmatprep.subr.bf16.mxu0 0
    %491 = vmatpush1.bf16.msra.mxu0 0
    %492 = vmatprep.subr.bf16.mxu0 0
    %493 = vmatpush1.bf16.msra.mxu0 0
    %494 = vmatprep.subr.bf16.mxu0 0
    %495 = vmatpush1.bf16.msra.mxu0 0
    %496 = vmatprep.subr.bf16.mxu0 0
    %497 = vmatpush1.bf16.msra.mxu0 0
    %498 = vmatprep.subr.bf16.mxu0 0
    %499 = vmatpush1.bf16.msra.mxu0 0
    %500 = vmatprep.subr.bf16.mxu0 0
    %501 = vmatpush1.bf16.msra.mxu0 0
    %502 = vmatprep.subr.bf16.mxu0 0
    %503 = vmatpush1.bf16.msra.mxu0 0
    %504 = vmatprep.subr.bf16.mxu0 %v261
    %505 = vmatpush1.bf16.msra.mxu0 %v258
    %506 = vmatprep.subr.bf16.mxu0 0
    %507 = vmatpush2.bf16.msra.mxu0 0
    %508 = vmatprep.subr.bf16.mxu0 0
    %509 = vmatpush2.bf16.msra.mxu0 0
    %510 = vmatprep.subr.bf16.mxu0 0
    %511 = vmatpush2.bf16.msra.mxu0 0
    %512 = vmatprep.subr.bf16.mxu0 0
    %513 = vmatpush2.bf16.msra.mxu0 0
    %514 = vmatprep.subr.bf16.mxu0 0
    %515 = vmatpush2.bf16.msra.mxu0 0
    %516 = vmatprep.subr.bf16.mxu0 0
    %517 = vmatpush2.bf16.msra.mxu0 0
    %518 = vmatprep.subr.bf16.mxu0 0
    %519 = vmatpush2.bf16.msra.mxu0 0
    %520 = vmatprep.subr.bf16.mxu0 0
    %521 = vmatpush2.bf16.msra.mxu0 0
    %522 = vmatprep.mubr.bf16.mxu0 0
    %523 = vmatmul.mubr.bf16.gmra.mxu0 %v224
    %v524 = vpop.f32.mrf.mxu0
    %v525 = vadd.f32 %v140, %v524
    %v526 = vpop.f32.mrf.mxu0
    %v527 = vadd.f32 %v144, %v526
    %v528 = vpop.f32.mrf.mxu0
    %v529 = vadd.f32 %v140, %v528
    %v530 = vpop.f32.mrf.mxu0
    %v531 = vadd.f32 %v144, %v530
    %532 = vdwg.mxu0
    %533 = vmatprep.subr.bf16.mxu0 0
    %534 = vmatpush1.bf16.msra.mxu0 0
    %535 = vmatprep.subr.bf16.mxu0 0
    %536 = vmatpush1.bf16.msra.mxu0 0
    %537 = vmatprep.subr.bf16.mxu0 0
    %538 = vmatpush1.bf16.msra.mxu0 0
    %539 = vmatprep.subr.bf16.mxu0 0
    %540 = vmatpush1.bf16.msra.mxu0 0
    %541 = vmatprep.subr.bf16.mxu0 0
    %542 = vmatpush1.bf16.msra.mxu0 0
    %543 = vmatprep.subr.bf16.mxu0 0
    %544 = vmatpush1.bf16.msra.mxu0 0
    %545 = vmatprep.subr.bf16.mxu0 0
    %546 = vmatpush1.bf16.msra.mxu0 0
    %547 = vmatprep.subr.bf16.mxu0 %v267
    %548 = vmatpush1.bf16.msra.mxu0 %v264
    %549 = vmatprep.subr.bf16.mxu0 0
    %550 = vmatpush2.bf16.msra.mxu0 0
    %551 = vmatprep.subr.bf16.mxu0 0
    %552 = vmatpush2.bf16.msra.mxu0 0
    %553 = vmatprep.subr.bf16.mxu0 0
    %554 = vmatpush2.bf16.msra.mxu0 0
    %555 = vmatprep.subr.bf16.mxu0 0
    %556 = vmatpush2.bf16.msra.mxu0 0
    %557 = vmatprep.subr.bf16.mxu0 0
    %558 = vmatpush2.bf16.msra.mxu0 0
    %559 = vmatprep.subr.bf16.mxu0 0
    %560 = vmatpush2.bf16.msra.mxu0 0
    %561 = vmatprep.subr.bf16.mxu0 0
    %562 = vmatpush2.bf16.msra.mxu0 0
    %563 = vmatprep.subr.bf16.mxu0 0
    %564 = vmatpush2.bf16.msra.mxu0 0
    %565 = vmatprep.mubr.bf16.mxu0 0
    %566 = vmatmul.mubr.bf16.gmra.mxu0 %v224
    %v567 = vpop.f32.mrf.mxu0
    %v568 = vadd.f32 %v148, %v567
    %v569 = vpop.f32.mrf.mxu0
    %v570 = vadd.f32 %v152, %v569
    %v571 = vpop.f32.mrf.mxu0
    %v572 = vadd.f32 %v148, %v571
    %v573 = vpop.f32.mrf.mxu0
    %v574 = vadd.f32 %v152, %v573
    %575 = vdwg.mxu0
    %576 = vmatprep.subr.bf16.mxu0 0
    %577 = vmatpush1.bf16.msra.mxu0 0
    %578 = vmatprep.subr.bf16.mxu0 0
    %579 = vmatpush1.bf16.msra.mxu0 0
    %580 = vmatprep.subr.bf16.mxu0 0
    %581 = vmatpush1.bf16.msra.mxu0 0
    %582 = vmatprep.subr.bf16.mxu0 0
    %583 = vmatpush1.bf16.msra.mxu0 0
    %584 = vmatprep.subr.bf16.mxu0 0
    %585 = vmatpush1.bf16.msra.mxu0 0
    %586 = vmatprep.subr.bf16.mxu0 0
    %587 = vmatpush1.bf16.msra.mxu0 0
    %588 = vmatprep.subr.bf16.mxu0 0
    %589 = vmatpush1.bf16.msra.mxu0 0
    %590 = vmatprep.subr.bf16.mxu0 %v273
    %591 = vmatpush1.bf16.msra.mxu0 %v270
    %592 = vmatprep.subr.bf16.mxu0 0
    %593 = vmatpush2.bf16.msra.mxu0 0
    %594 = vmatprep.subr.bf16.mxu0 0
    %595 = vmatpush2.bf16.msra.mxu0 0
    %596 = vmatprep.subr.bf16.mxu0 0
    %597 = vmatpush2.bf16.msra.mxu0 0
    %598 = vmatprep.subr.bf16.mxu0 0
    %599 = vmatpush2.bf16.msra.mxu0 0
    %600 = vmatprep.subr.bf16.mxu0 0
    %601 = vmatpush2.bf16.msra.mxu0 0
    %602 = vmatprep.subr.bf16.mxu0 0
    %603 = vmatpush2.bf16.msra.mxu0 0
    %604 = vmatprep.subr.bf16.mxu0 0
    %605 = vmatpush2.bf16.msra.mxu0 0
    %606 = vmatprep.subr.bf16.mxu0 0
    %607 = vmatpush2.bf16.msra.mxu0 0
    %608 = vmatprep.mubr.bf16.mxu0 0
    %609 = vmatmul.mubr.bf16.gmra.mxu0 %v224
    %v610 = vpop.f32.mrf.mxu0
    %v611 = vadd.f32 %v156, %v610
    %v612 = vpop.f32.mrf.mxu0
    %v613 = vadd.f32 %v160, %v612
    %v614 = vpop.f32.mrf.mxu0
    %v615 = vadd.f32 %v156, %v614
    %v616 = vpop.f32.mrf.mxu0
    %v617 = vadd.f32 %v160, %v616
    %618 = vdwg.mxu0
    %v619 = vrot.slane %v310, 4
    %v620 = vadd.f32 %v310, %v619
    %v621 = vrot.slane %v620, 2
    %v622 = vadd.f32 %v620, %v621
    %v623 = vrot.slane %v622, 1
    %v624 = vadd.f32 %v622, %v623
    %v625 = vrot.slane %v312, 4
    %v626 = vadd.f32 %v312, %v625
    %v627 = vrot.slane %v626, 2
    %v628 = vadd.f32 %v626, %v627
    %v629 = vrot.slane %v628, 1
    %v630 = vadd.f32 %v628, %v629
    %v631 = vrot.slane %v353, 4
    %v632 = vadd.f32 %v353, %v631
    %v633 = vrot.slane %v632, 2
    %v634 = vadd.f32 %v632, %v633
    %v635 = vrot.slane %v634, 1
    %v636 = vadd.f32 %v634, %v635
    %v637 = vrot.slane %v355, 4
    %v638 = vadd.f32 %v355, %v637
    %v639 = vrot.slane %v638, 2
    %v640 = vadd.f32 %v638, %v639
    %v641 = vrot.slane %v640, 1
    %v642 = vadd.f32 %v640, %v641
    %v643 = vrot.slane %v396, 4
    %v644 = vadd.f32 %v396, %v643
    %v645 = vrot.slane %v644, 2
    %v646 = vadd.f32 %v644, %v645
    %v647 = vrot.slane %v646, 1
    %v648 = vadd.f32 %v646, %v647
    %v649 = vrot.slane %v398, 4
    %v650 = vadd.f32 %v398, %v649
    %v651 = vrot.slane %v650, 2
    %v652 = vadd.f32 %v650, %v651
    %v653 = vrot.slane %v652, 1
    %v654 = vadd.f32 %v652, %v653
    %v655 = vrot.slane %v439, 4
    %v656 = vadd.f32 %v439, %v655
    %v657 = vrot.slane %v656, 2
    %v658 = vadd.f32 %v656, %v657
    %v659 = vrot.slane %v658, 1
    %v660 = vadd.f32 %v658, %v659
    %v661 = vrot.slane %v441, 4
    %v662 = vadd.f32 %v441, %v661
    %v663 = vrot.slane %v662, 2
    %v664 = vadd.f32 %v662, %v663
    %v665 = vrot.slane %v664, 1
    %v666 = vadd.f32 %v664, %v665
    %v667 = vrot.slane %v482, 4
    %v668 = vadd.f32 %v482, %v667
    %v669 = vrot.slane %v668, 2
    %v670 = vadd.f32 %v668, %v669
    %v671 = vrot.slane %v670, 1
    %v672 = vadd.f32 %v670, %v671
    %v673 = vrot.slane %v484, 4
    %v674 = vadd.f32 %v484, %v673
    %v675 = vrot.slane %v674, 2
    %v676 = vadd.f32 %v674, %v675
    %v677 = vrot.slane %v676, 1
    %v678 = vadd.f32 %v676, %v677
    %v679 = vrot.slane %v525, 4
    %v680 = vadd.f32 %v525, %v679
    %v681 = vrot.slane %v680, 2
    %v682 = vadd.f32 %v680, %v681
    %v683 = vrot.slane %v682, 1
    %v684 = vadd.f32 %v682, %v683
    %v685 = vrot.slane %v527, 4
    %v686 = vadd.f32 %v527, %v685
    %v687 = vrot.slane %v686, 2
    %v688 = vadd.f32 %v686, %v687
    %v689 = vrot.slane %v688, 1
    %v690 = vadd.f32 %v688, %v689
    %v691 = vrot.slane %v568, 4
    %v692 = vadd.f32 %v568, %v691
    %v693 = vrot.slane %v692, 2
    %v694 = vadd.f32 %v692, %v693
    %v695 = vrot.slane %v694, 1
    %v696 = vadd.f32 %v694, %v695
    %v697 = vrot.slane %v570, 4
    %v698 = vadd.f32 %v570, %v697
    %v699 = vrot.slane %v698, 2
    %v700 = vadd.f32 %v698, %v699
    %v701 = vrot.slane %v700, 1
    %v702 = vadd.f32 %v700, %v701
    %v703 = vrot.slane %v611, 4
    %v704 = vadd.f32 %v611, %v703
    %v705 = vrot.slane %v704, 2
    %v706 = vadd.f32 %v704, %v705
    %v707 = vrot.slane %v706, 1
    %v708 = vadd.f32 %v706, %v707
    %v709 = vrot.slane %v613, 4
    %v710 = vadd.f32 %v613, %v709
    %v711 = vrot.slane %v710, 2
    %v712 = vadd.f32 %v710, %v711
    %v713 = vrot.slane %v712, 1
    %v714 = vadd.f32 %v712, %v713
    %v715 = vrot.slane %v314, 4
    %v716 = vadd.f32 %v314, %v715
    %v717 = vrot.slane %v716, 2
    %v718 = vadd.f32 %v716, %v717
    %v719 = vrot.slane %v718, 1
    %v720 = vadd.f32 %v718, %v719
    %v721 = vrot.slane %v316, 4
    %v722 = vadd.f32 %v316, %v721
    %v723 = vrot.slane %v722, 2
    %v724 = vadd.f32 %v722, %v723
    %v725 = vrot.slane %v724, 1
    %v726 = vadd.f32 %v724, %v725
    %v727 = vrot.slane %v357, 4
    %v728 = vadd.f32 %v357, %v727
    %v729 = vrot.slane %v728, 2
    %v730 = vadd.f32 %v728, %v729
    %v731 = vrot.slane %v730, 1
    %v732 = vadd.f32 %v730, %v731
    %v733 = vrot.slane %v359, 4
    %v734 = vadd.f32 %v359, %v733
    %v735 = vrot.slane %v734, 2
    %v736 = vadd.f32 %v734, %v735
    %v737 = vrot.slane %v736, 1
    %v738 = vadd.f32 %v736, %v737
    %v739 = vrot.slane %v400, 4
    %v740 = vadd.f32 %v400, %v739
    %v741 = vrot.slane %v740, 2
    %v742 = vadd.f32 %v740, %v741
    %v743 = vrot.slane %v742, 1
    %v744 = vadd.f32 %v742, %v743
    %v745 = vrot.slane %v402, 4
    %v746 = vadd.f32 %v402, %v745
    %v747 = vrot.slane %v746, 2
    %v748 = vadd.f32 %v746, %v747
    %v749 = vrot.slane %v748, 1
    %v750 = vadd.f32 %v748, %v749
    %v751 = vrot.slane %v443, 4
    %v752 = vadd.f32 %v443, %v751
    %v753 = vrot.slane %v752, 2
    %v754 = vadd.f32 %v752, %v753
    %v755 = vrot.slane %v754, 1
    %v756 = vadd.f32 %v754, %v755
    %v757 = vrot.slane %v445, 4
    %v758 = vadd.f32 %v445, %v757
    %v759 = vrot.slane %v758, 2
    %v760 = vadd.f32 %v758, %v759
    %v761 = vrot.slane %v760, 1
    %v762 = vadd.f32 %v760, %v761
    %v763 = vrot.slane %v486, 4
    %v764 = vadd.f32 %v486, %v763
    %v765 = vrot.slane %v764, 2
    %v766 = vadd.f32 %v764, %v765
    %v767 = vrot.slane %v766, 1
    %v768 = vadd.f32 %v766, %v767
    %v769 = vrot.slane %v488, 4
    %v770 = vadd.f32 %v488, %v769
    %v771 = vrot.slane %v770, 2
    %v772 = vadd.f32 %v770, %v771
    %v773 = vrot.slane %v772, 1
    %v774 = vadd.f32 %v772, %v773
    %v775 = vrot.slane %v529, 4
    %v776 = vadd.f32 %v529, %v775
    %v777 = vrot.slane %v776, 2
    %v778 = vadd.f32 %v776, %v777
    %v779 = vrot.slane %v778, 1
    %v780 = vadd.f32 %v778, %v779
    %v781 = vrot.slane %v531, 4
    %v782 = vadd.f32 %v531, %v781
    %v783 = vrot.slane %v782, 2
    %v784 = vadd.f32 %v782, %v783
    %v785 = vrot.slane %v784, 1
    %v786 = vadd.f32 %v784, %v785
    %v787 = vrot.slane %v572, 4
    %v788 = vadd.f32 %v572, %v787
    %v789 = vrot.slane %v788, 2
    %v790 = vadd.f32 %v788, %v789
    %v791 = vrot.slane %v790, 1
    %v792 = vadd.f32 %v790, %v791
    %v793 = vrot.slane %v574, 4
    %v794 = vadd.f32 %v574, %v793
    %v795 = vrot.slane %v794, 2
    %v796 = vadd.f32 %v794, %v795
    %v797 = vrot.slane %v796, 1
    %v798 = vadd.f32 %v796, %v797
    %v799 = vrot.slane %v615, 4
    %v800 = vadd.f32 %v615, %v799
    %v801 = vrot.slane %v800, 2
    %v802 = vadd.f32 %v800, %v801
    %v803 = vrot.slane %v802, 1
    %v804 = vadd.f32 %v802, %v803
    %v805 = vrot.slane %v617, 4
    %v806 = vadd.f32 %v617, %v805
    %v807 = vrot.slane %v806, 2
    %v808 = vadd.f32 %v806, %v807
    %v809 = vrot.slane %v808, 1
    %v810 = vadd.f32 %v808, %v809
    %v811 = vmul.f32 %v624, 0.125
    %v812 = vmul.f32 %v630, 0.125
    %v813 = vmul.f32 %v636, 0.125
    %v814 = vmul.f32 %v642, 0.125
    %v815 = vmul.f32 %v648, 0.125
    %v816 = vmul.f32 %v654, 0.125
    %v817 = vmul.f32 %v660, 0.125
    %v818 = vmul.f32 %v666, 0.125
    %v819 = vmul.f32 %v672, 0.125
    %v820 = vmul.f32 %v678, 0.125
    %v821 = vmul.f32 %v684, 0.125
    %v822 = vmul.f32 %v690, 0.125
    %v823 = vmul.f32 %v696, 0.125
    %v824 = vmul.f32 %v702, 0.125
    %v825 = vmul.f32 %v708, 0.125
    %v826 = vmul.f32 %v714, 0.125
    %v827 = vmul.f32 %v720, 0.125
    %v828 = vmul.f32 %v726, 0.125
    %v829 = vmul.f32 %v732, 0.125
    %v830 = vmul.f32 %v738, 0.125
    %v831 = vmul.f32 %v744, 0.125
    %v832 = vmul.f32 %v750, 0.125
    %v833 = vmul.f32 %v756, 0.125
    %v834 = vmul.f32 %v762, 0.125
    %v835 = vmul.f32 %v768, 0.125
    %v836 = vmul.f32 %v774, 0.125
    %v837 = vmul.f32 %v780, 0.125
    %v838 = vmul.f32 %v786, 0.125
    %v839 = vmul.f32 %v792, 0.125
    %v840 = vmul.f32 %v798, 0.125
    %v841 = vmul.f32 %v804, 0.125
    %v842 = vmul.f32 %v810, 0.125
    %v843 = vsub.f32 %v310, %v811
    %v844 = vsub.f32 %v312, %v812
    %v845 = vsub.f32 %v353, %v813
    %v846 = vsub.f32 %v355, %v814
    %v847 = vsub.f32 %v396, %v815
    %v848 = vsub.f32 %v398, %v816
    %v849 = vsub.f32 %v439, %v817
    %v850 = vsub.f32 %v441, %v818
    %v851 = vsub.f32 %v482, %v819
    %v852 = vsub.f32 %v484, %v820
    %v853 = vsub.f32 %v525, %v821
    %v854 = vsub.f32 %v527, %v822
    %v855 = vsub.f32 %v568, %v823
    %v856 = vsub.f32 %v570, %v824
    %v857 = vsub.f32 %v611, %v825
    %v858 = vsub.f32 %v613, %v826
    %v859 = vsub.f32 %v314, %v827
    %v860 = vsub.f32 %v316, %v828
    %v861 = vsub.f32 %v357, %v829
    %v862 = vsub.f32 %v359, %v830
    %v863 = vsub.f32 %v400, %v831
    %v864 = vsub.f32 %v402, %v832
    %v865 = vsub.f32 %v443, %v833
    %v866 = vsub.f32 %v445, %v834
    %v867 = vsub.f32 %v486, %v835
    %v868 = vsub.f32 %v488, %v836
    %v869 = vsub.f32 %v529, %v837
    %v870 = vsub.f32 %v531, %v838
    %v871 = vsub.f32 %v572, %v839
    %v872 = vsub.f32 %v574, %v840
    %v873 = vsub.f32 %v615, %v841
    %v874 = vsub.f32 %v617, %v842
    %v875 = vmul.f32 %v843, %v843
    %v876 = vmul.f32 %v844, %v844
    %v877 = vmul.f32 %v845, %v845
    %v878 = vmul.f32 %v846, %v846
    %v879 = vmul.f32 %v847, %v847
    %v880 = vmul.f32 %v848, %v848
    %v881 = vmul.f32 %v849, %v849
    %v882 = vmul.f32 %v850, %v850
    %v883 = vmul.f32 %v851, %v851
    %v884 = vmul.f32 %v852, %v852
    %v885 = vmul.f32 %v853, %v853
    %v886 = vmul.f32 %v854, %v854
    %v887 = vmul.f32 %v855, %v855
    %v888 = vmul.f32 %v856, %v856
    %v889 = vmul.f32 %v857, %v857
    %v890 = vmul.f32 %v858, %v858
    %v891 = vmul.f32 %v859, %v859
    %v892 = vmul.f32 %v860, %v860
    %v893 = vmul.f32 %v861, %v861
    %v894 = vmul.f32 %v862, %v862
    %v895 = vmul.f32 %v863, %v863
    %v896 = vmul.f32 %v864, %v864
    %v897 = vmul.f32 %v865, %v865
    %v898 = vmul.f32 %v866, %v866
    %v899 = vmul.f32 %v867, %v867
    %v900 = vmul.f32 %v868, %v868
    %v901 = vmul.f32 %v869, %v869
    %v902 = vmul.f32 %v870, %v870
    %v903 = vmul.f32 %v871, %v871
    %v904 = vmul.f32 %v872, %v872
    %v905 = vmul.f32 %v873, %v873
    %v906 = vmul.f32 %v874, %v874
    %v907 = vrot.slane %v875, 4
    %v908 = vadd.f32 %v875, %v907
    %v909 = vrot.slane %v908, 2
    %v910 = vadd.f32 %v908, %v909
    %v911 = vrot.slane %v910, 1
    %v912 = vadd.f32 %v910, %v911
    %v913 = vrot.slane %v876, 4
    %v914 = vadd.f32 %v876, %v913
    %v915 = vrot.slane %v914, 2
    %v916 = vadd.f32 %v914, %v915
    %v917 = vrot.slane %v916, 1
    %v918 = vadd.f32 %v916, %v917
    %v919 = vrot.slane %v877, 4
    %v920 = vadd.f32 %v877, %v919
    %v921 = vrot.slane %v920, 2
    %v922 = vadd.f32 %v920, %v921
    %v923 = vrot.slane %v922, 1
    %v924 = vadd.f32 %v922, %v923
    %v925 = vrot.slane %v878, 4
    %v926 = vadd.f32 %v878, %v925
    %v927 = vrot.slane %v926, 2
    %v928 = vadd.f32 %v926, %v927
    %v929 = vrot.slane %v928, 1
    %v930 = vadd.f32 %v928, %v929
    %v931 = vrot.slane %v879, 4
    %v932 = vadd.f32 %v879, %v931
    %v933 = vrot.slane %v932, 2
    %v934 = vadd.f32 %v932, %v933
    %v935 = vrot.slane %v934, 1
    %v936 = vadd.f32 %v934, %v935
    %v937 = vrot.slane %v880, 4
    %v938 = vadd.f32 %v880, %v937
    %v939 = vrot.slane %v938, 2
    %v940 = vadd.f32 %v938, %v939
    %v941 = vrot.slane %v940, 1
    %v942 = vadd.f32 %v940, %v941
    %v943 = vrot.slane %v881, 4
    %v944 = vadd.f32 %v881, %v943
    %v945 = vrot.slane %v944, 2
    %v946 = vadd.f32 %v944, %v945
    %v947 = vrot.slane %v946, 1
    %v948 = vadd.f32 %v946, %v947
    %v949 = vrot.slane %v882, 4
    %v950 = vadd.f32 %v882, %v949
    %v951 = vrot.slane %v950, 2
    %v952 = vadd.f32 %v950, %v951
    %v953 = vrot.slane %v952, 1
    %v954 = vadd.f32 %v952, %v953
    %v955 = vrot.slane %v883, 4
    %v956 = vadd.f32 %v883, %v955
    %v957 = vrot.slane %v956, 2
    %v958 = vadd.f32 %v956, %v957
    %v959 = vrot.slane %v958, 1
    %v960 = vadd.f32 %v958, %v959
    %v961 = vrot.slane %v884, 4
    %v962 = vadd.f32 %v884, %v961
    %v963 = vrot.slane %v962, 2
    %v964 = vadd.f32 %v962, %v963
    %v965 = vrot.slane %v964, 1
    %v966 = vadd.f32 %v964, %v965
    %v967 = vrot.slane %v885, 4
    %v968 = vadd.f32 %v885, %v967
    %v969 = vrot.slane %v968, 2
    %v970 = vadd.f32 %v968, %v969
    %v971 = vrot.slane %v970, 1
    %v972 = vadd.f32 %v970, %v971
    %v973 = vrot.slane %v886, 4
    %v974 = vadd.f32 %v886, %v973
    %v975 = vrot.slane %v974, 2
    %v976 = vadd.f32 %v974, %v975
    %v977 = vrot.slane %v976, 1
    %v978 = vadd.f32 %v976, %v977
    %v979 = vrot.slane %v887, 4
    %v980 = vadd.f32 %v887, %v979
    %v981 = vrot.slane %v980, 2
    %v982 = vadd.f32 %v980, %v981
    %v983 = vrot.slane %v982, 1
    %v984 = vadd.f32 %v982, %v983
    %v985 = vrot.slane %v888, 4
    %v986 = vadd.f32 %v888, %v985
    %v987 = vrot.slane %v986, 2
    %v988 = vadd.f32 %v986, %v987
    %v989 = vrot.slane %v988, 1
    %v990 = vadd.f32 %v988, %v989
    %v991 = vrot.slane %v889, 4
    %v992 = vadd.f32 %v889, %v991
    %v993 = vrot.slane %v992, 2
    %v994 = vadd.f32 %v992, %v993
    %v995 = vrot.slane %v994, 1
    %v996 = vadd.f32 %v994, %v995
    %v997 = vrot.slane %v890, 4
    %v998 = vadd.f32 %v890, %v997
    %v999 = vrot.slane %v998, 2
    %v1000 = vadd.f32 %v998, %v999
    %v1001 = vrot.slane %v1000, 1
    %v1002 = vadd.f32 %v1000, %v1001
    %v1003 = vrot.slane %v891, 4
    %v1004 = vadd.f32 %v891, %v1003
    %v1005 = vrot.slane %v1004, 2
    %v1006 = vadd.f32 %v1004, %v1005
    %v1007 = vrot.slane %v1006, 1
    %v1008 = vadd.f32 %v1006, %v1007
    %v1009 = vrot.slane %v892, 4
    %v1010 = vadd.f32 %v892, %v1009
    %v1011 = vrot.slane %v1010, 2
    %v1012 = vadd.f32 %v1010, %v1011
    %v1013 = vrot.slane %v1012, 1
    %v1014 = vadd.f32 %v1012, %v1013
    %v1015 = vrot.slane %v893, 4
    %v1016 = vadd.f32 %v893, %v1015
    %v1017 = vrot.slane %v1016, 2
    %v1018 = vadd.f32 %v1016, %v1017
    %v1019 = vrot.slane %v1018, 1
    %v1020 = vadd.f32 %v1018, %v1019
    %v1021 = vrot.slane %v894, 4
    %v1022 = vadd.f32 %v894, %v1021
    %v1023 = vrot.slane %v1022, 2
    %v1024 = vadd.f32 %v1022, %v1023
    %v1025 = vrot.slane %v1024, 1
    %v1026 = vadd.f32 %v1024, %v1025
    %v1027 = vrot.slane %v895, 4
    %v1028 = vadd.f32 %v895, %v1027
    %v1029 = vrot.slane %v1028, 2
    %v1030 = vadd.f32 %v1028, %v1029
    %v1031 = vrot.slane %v1030, 1
    %v1032 = vadd.f32 %v1030, %v1031
    %v1033 = vrot.slane %v896, 4
    %v1034 = vadd.f32 %v896, %v1033
    %v1035 = vrot.slane %v1034, 2
    %v1036 = vadd.f32 %v1034, %v1035
    %v1037 = vrot.slane %v1036, 1
    %v1038 = vadd.f32 %v1036, %v1037
    %v1039 = vrot.slane %v897, 4
    %v1040 = vadd.f32 %v897, %v1039
    %v1041 = vrot.slane %v1040, 2
    %v1042 = vadd.f32 %v1040, %v1041
    %v1043 = vrot.slane %v1042, 1
    %v1044 = vadd.f32 %v1042, %v1043
    %v1045 = vrot.slane %v898, 4
    %v1046 = vadd.f32 %v898, %v1045
    %v1047 = vrot.slane %v1046, 2
    %v1048 = vadd.f32 %v1046, %v1047
    %v1049 = vrot.slane %v1048, 1
    %v1050 = vadd.f32 %v1048, %v1049
    %v1051 = vrot.slane %v899, 4
    %v1052 = vadd.f32 %v899, %v1051
    %v1053 = vrot.slane %v1052, 2
    %v1054 = vadd.f32 %v1052, %v1053
    %v1055 = vrot.slane %v1054, 1
    %v1056 = vadd.f32 %v1054, %v1055
    %v1057 = vrot.slane %v900, 4
    %v1058 = vadd.f32 %v900, %v1057
    %v1059 = vrot.slane %v1058, 2
    %v1060 = vadd.f32 %v1058, %v1059
    %v1061 = vrot.slane %v1060, 1
    %v1062 = vadd.f32 %v1060, %v1061
    %v1063 = vrot.slane %v901, 4
    %v1064 = vadd.f32 %v901, %v1063
    %v1065 = vrot.slane %v1064, 2
    %v1066 = vadd.f32 %v1064, %v1065
    %v1067 = vrot.slane %v1066, 1
    %v1068 = vadd.f32 %v1066, %v1067
    %v1069 = vrot.slane %v902, 4
    %v1070 = vadd.f32 %v902, %v1069
    %v1071 = vrot.slane %v1070, 2
    %v1072 = vadd.f32 %v1070, %v1071
    %v1073 = vrot.slane %v1072, 1
    %v1074 = vadd.f32 %v1072, %v1073
    %v1075 = vrot.slane %v903, 4
    %v1076 = vadd.f32 %v903, %v1075
    %v1077 = vrot.slane %v1076, 2
    %v1078 = vadd.f32 %v1076, %v1077
    %v1079 = vrot.slane %v1078, 1
    %v1080 = vadd.f32 %v1078, %v1079
    %v1081 = vrot.slane %v904, 4
    %v1082 = vadd.f32 %v904, %v1081
    %v1083 = vrot.slane %v1082, 2
    %v1084 = vadd.f32 %v1082, %v1083
    %v1085 = vrot.slane %v1084, 1
    %v1086 = vadd.f32 %v1084, %v1085
    %v1087 = vrot.slane %v905, 4
    %v1088 = vadd.f32 %v905, %v1087
    %v1089 = vrot.slane %v1088, 2
    %v1090 = vadd.f32 %v1088, %v1089
    %v1091 = vrot.slane %v1090, 1
    %v1092 = vadd.f32 %v1090, %v1091
    %v1093 = vrot.slane %v906, 4
    %v1094 = vadd.f32 %v906, %v1093
    %v1095 = vrot.slane %v1094, 2
    %v1096 = vadd.f32 %v1094, %v1095
    %v1097 = vrot.slane %v1096, 1
    %v1098 = vadd.f32 %v1096, %v1097
    %v1099 = vmul.f32 %v912, 0.125
    %v1100 = vmul.f32 %v918, 0.125
    %v1101 = vmul.f32 %v924, 0.125
    %v1102 = vmul.f32 %v930, 0.125
    %v1103 = vmul.f32 %v936, 0.125
    %v1104 = vmul.f32 %v942, 0.125
    %v1105 = vmul.f32 %v948, 0.125
    %v1106 = vmul.f32 %v954, 0.125
    %v1107 = vmul.f32 %v960, 0.125
    %v1108 = vmul.f32 %v966, 0.125
    %v1109 = vmul.f32 %v972, 0.125
    %v1110 = vmul.f32 %v978, 0.125
    %v1111 = vmul.f32 %v984, 0.125
    %v1112 = vmul.f32 %v990, 0.125
    %v1113 = vmul.f32 %v996, 0.125
    %v1114 = vmul.f32 %v1002, 0.125
    %v1115 = vmul.f32 %v1008, 0.125
    %v1116 = vmul.f32 %v1014, 0.125
    %v1117 = vmul.f32 %v1020, 0.125
    %v1118 = vmul.f32 %v1026, 0.125
    %v1119 = vmul.f32 %v1032, 0.125
    %v1120 = vmul.f32 %v1038, 0.125
    %v1121 = vmul.f32 %v1044, 0.125
    %v1122 = vmul.f32 %v1050, 0.125
    %v1123 = vmul.f32 %v1056, 0.125
    %v1124 = vmul.f32 %v1062, 0.125
    %v1125 = vmul.f32 %v1068, 0.125
    %v1126 = vmul.f32 %v1074, 0.125
    %v1127 = vmul.f32 %v1080, 0.125
    %v1128 = vmul.f32 %v1086, 0.125
    %v1129 = vmul.f32 %v1092, 0.125
    %v1130 = vmul.f32 %v1098, 0.125
    %v1131 = vadd.f32 %v1099, 1e-05
    %v1132 = vadd.f32 %v1100, 1e-05
    %v1133 = vadd.f32 %v1101, 1e-05
    %v1134 = vadd.f32 %v1102, 1e-05
    %v1135 = vadd.f32 %v1103, 1e-05
    %v1136 = vadd.f32 %v1104, 1e-05
    %v1137 = vadd.f32 %v1105, 1e-05
    %v1138 = vadd.f32 %v1106, 1e-05
    %v1139 = vadd.f32 %v1107, 1e-05
    %v1140 = vadd.f32 %v1108, 1e-05
    %v1141 = vadd.f32 %v1109, 1e-05
    %v1142 = vadd.f32 %v1110, 1e-05
    %v1143 = vadd.f32 %v1111, 1e-05
    %v1144 = vadd.f32 %v1112, 1e-05
    %v1145 = vadd.f32 %v1113, 1e-05
    %v1146 = vadd.f32 %v1114, 1e-05
    %v1147 = vadd.f32 %v1115, 1e-05
    %v1148 = vadd.f32 %v1116, 1e-05
    %v1149 = vadd.f32 %v1117, 1e-05
    %v1150 = vadd.f32 %v1118, 1e-05
    %v1151 = vadd.f32 %v1119, 1e-05
    %v1152 = vadd.f32 %v1120, 1e-05
    %v1153 = vadd.f32 %v1121, 1e-05
    %v1154 = vadd.f32 %v1122, 1e-05
    %v1155 = vadd.f32 %v1123, 1e-05
    %v1156 = vadd.f32 %v1124, 1e-05
    %v1157 = vadd.f32 %v1125, 1e-05
    %v1158 = vadd.f32 %v1126, 1e-05
    %v1159 = vadd.f32 %v1127, 1e-05
    %v1160 = vadd.f32 %v1128, 1e-05
    %v1161 = vadd.f32 %v1129, 1e-05
    %v1162 = vadd.f32 %v1130, 1e-05
    %v1163 = vrsqrt.pop %v1131
    %v1164 = vrsqrt.pop %v1132
    %v1165 = vrsqrt.pop %v1133
    %v1166 = vrsqrt.pop %v1134
    %v1167 = vrsqrt.pop %v1135
    %v1168 = vrsqrt.pop %v1136
    %v1169 = vrsqrt.pop %v1137
    %v1170 = vrsqrt.pop %v1138
    %v1171 = vrsqrt.pop %v1139
    %v1172 = vrsqrt.pop %v1140
    %v1173 = vrsqrt.pop %v1141
    %v1174 = vrsqrt.pop %v1142
    %v1175 = vrsqrt.pop %v1143
    %v1176 = vrsqrt.pop %v1144
    %v1177 = vrsqrt.pop %v1145
    %v1178 = vrsqrt.pop %v1146
    %v1179 = vrsqrt.pop %v1147
    %v1180 = vrsqrt.pop %v1148
    %v1181 = vrsqrt.pop %v1149
    %v1182 = vrsqrt.pop %v1150
    %v1183 = vrsqrt.pop %v1151
    %v1184 = vrsqrt.pop %v1152
    %v1185 = vrsqrt.pop %v1153
    %v1186 = vrsqrt.pop %v1154
    %v1187 = vrsqrt.pop %v1155
    %v1188 = vrsqrt.pop %v1156
    %v1189 = vrsqrt.pop %v1157
    %v1190 = vrsqrt.pop %v1158
    %v1191 = vrsqrt.pop %v1159
    %v1192 = vrsqrt.pop %v1160
    %v1193 = vrsqrt.pop %v1161
    %v1194 = vrsqrt.pop %v1162
    %v1195 = vmul.f32 %v843, %v1163
    %v1196 = vmul.f32 %v844, %v1164
    %v1197 = vmul.f32 %v845, %v1165
    %v1198 = vmul.f32 %v846, %v1166
    %v1199 = vmul.f32 %v847, %v1167
    %v1200 = vmul.f32 %v848, %v1168
    %v1201 = vmul.f32 %v849, %v1169
    %v1202 = vmul.f32 %v850, %v1170
    %v1203 = vmul.f32 %v851, %v1171
    %v1204 = vmul.f32 %v852, %v1172
    %v1205 = vmul.f32 %v853, %v1173
    %v1206 = vmul.f32 %v854, %v1174
    %v1207 = vmul.f32 %v855, %v1175
    %v1208 = vmul.f32 %v856, %v1176
    %v1209 = vmul.f32 %v857, %v1177
    %v1210 = vmul.f32 %v858, %v1178
    %v1211 = vmul.f32 %v859, %v1179
    %v1212 = vmul.f32 %v860, %v1180
    %v1213 = vmul.f32 %v861, %v1181
    %v1214 = vmul.f32 %v862, %v1182
    %v1215 = vmul.f32 %v863, %v1183
    %v1216 = vmul.f32 %v864, %v1184
    %v1217 = vmul.f32 %v865, %v1185
    %v1218 = vmul.f32 %v866, %v1186
    %v1219 = vmul.f32 %v867, %v1187
    %v1220 = vmul.f32 %v868, %v1188
    %v1221 = vmul.f32 %v869, %v1189
    %v1222 = vmul.f32 %v870, %v1190
    %v1223 = vmul.f32 %v871, %v1191
    %v1224 = vmul.f32 %v872, %v1192
    %v1225 = vmul.f32 %v873, %v1193
    %v1226 = vmul.f32 %v874, %v1194
    %vm1227 = vcmp.ge.f32.partialorder %v1195, 0.0
    %vm1228 = vcmp.ge.f32.partialorder %v1196, 0.0
    %vm1229 = vcmp.ge.f32.partialorder %v1197, 0.0
    %vm1230 = vcmp.ge.f32.partialorder %v1198, 0.0
    %vm1231 = vcmp.ge.f32.partialorder %v1199, 0.0
    %vm1232 = vcmp.ge.f32.partialorder %v1200, 0.0
    %vm1233 = vcmp.ge.f32.partialorder %v1201, 0.0
    %vm1234 = vcmp.ge.f32.partialorder %v1202, 0.0
    %vm1235 = vcmp.ge.f32.partialorder %v1203, 0.0
    %vm1236 = vcmp.ge.f32.partialorder %v1204, 0.0
    %vm1237 = vcmp.ge.f32.partialorder %v1205, 0.0
    %vm1238 = vcmp.ge.f32.partialorder %v1206, 0.0
    %vm1239 = vcmp.ge.f32.partialorder %v1207, 0.0
    %vm1240 = vcmp.ge.f32.partialorder %v1208, 0.0
    %vm1241 = vcmp.ge.f32.partialorder %v1209, 0.0
    %vm1242 = vcmp.ge.f32.partialorder %v1210, 0.0
    %vm1243 = vcmp.ge.f32.partialorder %v1211, 0.0
    %vm1244 = vcmp.ge.f32.partialorder %v1212, 0.0
    %vm1245 = vcmp.ge.f32.partialorder %v1213, 0.0
    %vm1246 = vcmp.ge.f32.partialorder %v1214, 0.0
    %vm1247 = vcmp.ge.f32.partialorder %v1215, 0.0
    %vm1248 = vcmp.ge.f32.partialorder %v1216, 0.0
    %vm1249 = vcmp.ge.f32.partialorder %v1217, 0.0
    %vm1250 = vcmp.ge.f32.partialorder %v1218, 0.0
    %vm1251 = vcmp.ge.f32.partialorder %v1219, 0.0
    %vm1252 = vcmp.ge.f32.partialorder %v1220, 0.0
    %vm1253 = vcmp.ge.f32.partialorder %v1221, 0.0
    %vm1254 = vcmp.ge.f32.partialorder %v1222, 0.0
    %vm1255 = vcmp.ge.f32.partialorder %v1223, 0.0
    %vm1256 = vcmp.ge.f32.partialorder %v1224, 0.0
    %vm1257 = vcmp.ge.f32.partialorder %v1225, 0.0
    %vm1258 = vcmp.ge.f32.partialorder %v1226, 0.0
    %v1259 = vmul.f32 %v1195, 0.1
    %v1260 = vmul.f32 %v1196, 0.1
    %v1261 = vmul.f32 %v1197, 0.1
    %v1262 = vmul.f32 %v1198, 0.1
    %v1263 = vmul.f32 %v1199, 0.1
    %v1264 = vmul.f32 %v1200, 0.1
    %v1265 = vmul.f32 %v1201, 0.1
    %v1266 = vmul.f32 %v1202, 0.1
    %v1267 = vmul.f32 %v1203, 0.1
    %v1268 = vmul.f32 %v1204, 0.1
    %v1269 = vmul.f32 %v1205, 0.1
    %v1270 = vmul.f32 %v1206, 0.1
    %v1271 = vmul.f32 %v1207, 0.1
    %v1272 = vmul.f32 %v1208, 0.1
    %v1273 = vmul.f32 %v1209, 0.1
    %v1274 = vmul.f32 %v1210, 0.1
    %v1275 = vmul.f32 %v1211, 0.1
    %v1276 = vmul.f32 %v1212, 0.1
    %v1277 = vmul.f32 %v1213, 0.1
    %v1278 = vmul.f32 %v1214, 0.1
    %v1279 = vmul.f32 %v1215, 0.1
    %v1280 = vmul.f32 %v1216, 0.1
    %v1281 = vmul.f32 %v1217, 0.1
    %v1282 = vmul.f32 %v1218, 0.1
    %v1283 = vmul.f32 %v1219, 0.1
    %v1284 = vmul.f32 %v1220, 0.1
    %v1285 = vmul.f32 %v1221, 0.1
    %v1286 = vmul.f32 %v1222, 0.1
    %v1287 = vmul.f32 %v1223, 0.1
    %v1288 = vmul.f32 %v1224, 0.1
    %v1289 = vmul.f32 %v1225, 0.1
    %v1290 = vmul.f32 %v1226, 0.1
    %v1291 = vsel %vm1227, %v1195, %v1259
    %v1292 = vsel %vm1228, %v1196, %v1260
    %v1293 = vsel %vm1229, %v1197, %v1261
    %v1294 = vsel %vm1230, %v1198, %v1262
    %v1295 = vsel %vm1231, %v1199, %v1263
    %v1296 = vsel %vm1232, %v1200, %v1264
    %v1297 = vsel %vm1233, %v1201, %v1265
    %v1298 = vsel %vm1234, %v1202, %v1266
    %v1299 = vsel %vm1235, %v1203, %v1267
    %v1300 = vsel %vm1236, %v1204, %v1268
    %v1301 = vsel %vm1237, %v1205, %v1269
    %v1302 = vsel %vm1238, %v1206, %v1270
    %v1303 = vsel %vm1239, %v1207, %v1271
    %v1304 = vsel %vm1240, %v1208, %v1272
    %v1305 = vsel %vm1241, %v1209, %v1273
    %v1306 = vsel %vm1242, %v1210, %v1274
    %v1307 = vsel %vm1243, %v1211, %v1275
    %v1308 = vsel %vm1244, %v1212, %v1276
    %v1309 = vsel %vm1245, %v1213, %v1277
    %v1310 = vsel %vm1246, %v1214, %v1278
    %v1311 = vsel %vm1247, %v1215, %v1279
    %v1312 = vsel %vm1248, %v1216, %v1280
    %v1313 = vsel %vm1249, %v1217, %v1281
    %v1314 = vsel %vm1250, %v1218, %v1282
    %v1315 = vsel %vm1251, %v1219, %v1283
    %v1316 = vsel %vm1252, %v1220, %v1284
    %v1317 = vsel %vm1253, %v1221, %v1285
    %v1318 = vsel %vm1254, %v1222, %v1286
    %v1319 = vsel %vm1255, %v1223, %v1287
    %v1320 = vsel %vm1256, %v1224, %v1288
    %v1321 = vsel %vm1257, %v1225, %v1289
    %v1322 = vsel %vm1258, %v1226, %v1290
    %v1323 = vld [vmem:[%s1] sm:$0x1]
    %v1324 = vld [vmem:[#allocation5] sm:$0xff]
    %v1325 = vld [vmem:[#allocation5 + $0x8] sm:$0xff]
    %v1326 = vld [vmem:[#allocation5 + $0x10] sm:$0xff]
    %v1327 = vld [vmem:[#allocation5 + $0x18] sm:$0xff]
    %v1328 = vld [vmem:[#allocation5 + $0x20] sm:$0xff]
    %v1329 = vld [vmem:[#allocation5 + $0x28] sm:$0xff]
    %v1330 = vld [vmem:[#allocation5 + $0x30] sm:$0xff]
    %v1331 = vld [vmem:[#allocation5 + $0x38] sm:$0xff]
    %v1332 = vld [vmem:[#allocation7] sm:$0xff]
    %v1334 = vlaneseq
    %v1335 = vshrl.u32 %v1334, 7
    %v1336 = vsub.s32 0, %v1335
    %v1337 = vrot.slane %v1332, %v1336
    %v1338 = vlaneseq
    %v1339 = vshrl.u32 %v1338, 7
    %v1340 = vsub.s32 1, %v1339
    %v1341 = vrot.slane %v1332, %v1340
    %v1342 = vlaneseq
    %v1343 = vshrl.u32 %v1342, 7
    %v1344 = vsub.s32 2, %v1343
    %v1345 = vrot.slane %v1332, %v1344
    %v1346 = vlaneseq
    %v1347 = vshrl.u32 %v1346, 7
    %v1348 = vsub.s32 3, %v1347
    %v1349 = vrot.slane %v1332, %v1348
    %v1350 = vlaneseq
    %v1351 = vshrl.u32 %v1350, 7
    %v1352 = vsub.s32 4, %v1351
    %v1353 = vrot.slane %v1332, %v1352
    %v1354 = vlaneseq
    %v1355 = vshrl.u32 %v1354, 7
    %v1356 = vsub.s32 5, %v1355
    %v1357 = vrot.slane %v1332, %v1356
    %v1358 = vlaneseq
    %v1359 = vshrl.u32 %v1358, 7
    %v1360 = vsub.s32 6, %v1359
    %v1361 = vrot.slane %v1332, %v1360
    %v1362 = vlaneseq
    %v1363 = vshrl.u32 %v1362, 7
    %v1364 = vsub.s32 7, %v1363
    %v1365 = vrot.slane %v1332, %v1364
    %v1382 = vunpack.c.l.b16 %v1324
    %v1383 = vunpack.c.h.b16 %v1324
    %v1384 = vunpack.c.l.b16 %v1325
    %v1385 = vunpack.c.h.b16 %v1325
    %v1386 = vunpack.c.l.b16 %v1326
    %v1387 = vunpack.c.h.b16 %v1326
    %v1388 = vunpack.c.l.b16 %v1327
    %v1389 = vunpack.c.h.b16 %v1327
    %v1390 = vunpack.c.l.b16 %v1328
    %v1391 = vunpack.c.h.b16 %v1328
    %v1392 = vunpack.c.l.b16 %v1329
    %v1393 = vunpack.c.h.b16 %v1329
    %v1394 = vunpack.c.l.b16 %v1330
    %v1395 = vunpack.c.h.b16 %v1330
    %v1396 = vunpack.c.l.b16 %v1331
    %v1397 = vunpack.c.h.b16 %v1331
    %v1398 = vpack.c.b16 %v1390, %v1382
    %v1399 = vpack.c.b16 %v1391, %v1383
    %v1400 = vpack.c.b16 %v1392, %v1384
    %v1401 = vpack.c.b16 %v1393, %v1385
    %v1402 = vpack.c.b16 %v1394, %v1386
    %v1403 = vpack.c.b16 %v1395, %v1387
    %v1404 = vpack.c.b16 %v1396, %v1388
    %v1405 = vpack.c.b16 %v1397, %v1389
    %vm1406 = vcmask 121856
    %v1408 = vsel %vm1406, %v1323, 0
    %vm1410 = vcmask 1046528
    %vm1411 = vcmask 1047552
    %v1412 = vsel %vm1410, 4294967295, 65535
    %v1413 = vsel %vm1411, %v1412, 0
    %v1415 = vand.u32 %v1398, %v1413
    %v1418 = vand.u32 %v1399, %v1413
    %v1421 = vand.u32 %v1400, %v1413
    %v1424 = vand.u32 %v1401, %v1413
    %v1427 = vand.u32 %v1402, %v1413
    %v1430 = vand.u32 %v1403, %v1413
    %v1433 = vand.u32 %v1404, %v1413
    %v1436 = vand.u32 %v1405, %v1413
    %1438 = vmatprep.subr.bf16.mxu0 0
    %1439 = vmatpush1.bf16.msra.mxu0 0
    %1440 = vmatprep.subr.bf16.mxu0 0
    %1441 = vmatpush1.bf16.msra.mxu0 0
    %1442 = vmatprep.subr.bf16.mxu0 0
    %1443 = vmatpush1.bf16.msra.mxu0 0
    %1444 = vmatprep.subr.bf16.mxu0 0
    %1445 = vmatpush1.bf16.msra.mxu0 0
    %1446 = vmatprep.subr.bf16.mxu0 0
    %1447 = vmatpush1.bf16.msra.mxu0 0
    %1448 = vmatprep.subr.bf16.mxu0 0
    %1449 = vmatpush1.bf16.msra.mxu0 0
    %1450 = vmatprep.subr.bf16.mxu0 0
    %1451 = vmatpush1.bf16.msra.mxu0 0
    %1452 = vmatprep.subr.bf16.mxu0 %v1418
    %1453 = vmatpush1.bf16.msra.mxu0 %v1415
    %1454 = vmatprep.subr.bf16.mxu0 0
    %1455 = vmatpush2.bf16.msra.mxu0 0
    %1456 = vmatprep.subr.bf16.mxu0 0
    %1457 = vmatpush2.bf16.msra.mxu0 0
    %1458 = vmatprep.subr.bf16.mxu0 0
    %1459 = vmatpush2.bf16.msra.mxu0 0
    %1460 = vmatprep.subr.bf16.mxu0 0
    %1461 = vmatpush2.bf16.msra.mxu0 0
    %1462 = vmatprep.subr.bf16.mxu0 0
    %1463 = vmatpush2.bf16.msra.mxu0 0
    %1464 = vmatprep.subr.bf16.mxu0 0
    %1465 = vmatpush2.bf16.msra.mxu0 0
    %1466 = vmatprep.subr.bf16.mxu0 0
    %1467 = vmatpush2.bf16.msra.mxu0 0
    %1468 = vmatprep.subr.bf16.mxu0 0
    %1469 = vmatpush2.bf16.msra.mxu0 0
    %1470 = vmatprep.mubr.bf16.mxu0 0
    %1471 = vmatmul.mubr.bf16.gmra.mxu0 %v1408
    %v1472 = vpop.f32.mrf.mxu0
    %v1473 = vadd.f32 %v1337, %v1472
    %v1474 = vpop.f32.mrf.mxu0
    %v1475 = vadd.f32 %v1341, %v1474
    %v1476 = vpop.f32.mrf.mxu0
    %v1477 = vpop.f32.mrf.mxu0
    %1478 = vdwg.mxu0
    %1479 = vmatprep.subr.bf16.mxu0 0
    %1480 = vmatpush1.bf16.msra.mxu0 0
    %1481 = vmatprep.subr.bf16.mxu0 0
    %1482 = vmatpush1.bf16.msra.mxu0 0
    %1483 = vmatprep.subr.bf16.mxu0 0
    %1484 = vmatpush1.bf16.msra.mxu0 0
    %1485 = vmatprep.subr.bf16.mxu0 0
    %1486 = vmatpush1.bf16.msra.mxu0 0
    %1487 = vmatprep.subr.bf16.mxu0 0
    %1488 = vmatpush1.bf16.msra.mxu0 0
    %1489 = vmatprep.subr.bf16.mxu0 0
    %1490 = vmatpush1.bf16.msra.mxu0 0
    %1491 = vmatprep.subr.bf16.mxu0 0
    %1492 = vmatpush1.bf16.msra.mxu0 0
    %1493 = vmatprep.subr.bf16.mxu0 %v1424
    %1494 = vmatpush1.bf16.msra.mxu0 %v1421
    %1495 = vmatprep.subr.bf16.mxu0 0
    %1496 = vmatpush2.bf16.msra.mxu0 0
    %1497 = vmatprep.subr.bf16.mxu0 0
    %1498 = vmatpush2.bf16.msra.mxu0 0
    %1499 = vmatprep.subr.bf16.mxu0 0
    %1500 = vmatpush2.bf16.msra.mxu0 0
    %1501 = vmatprep.subr.bf16.mxu0 0
    %1502 = vmatpush2.bf16.msra.mxu0 0
    %1503 = vmatprep.subr.bf16.mxu0 0
    %1504 = vmatpush2.bf16.msra.mxu0 0
    %1505 = vmatprep.subr.bf16.mxu0 0
    %1506 = vmatpush2.bf16.msra.mxu0 0
    %1507 = vmatprep.subr.bf16.mxu0 0
    %1508 = vmatpush2.bf16.msra.mxu0 0
    %1509 = vmatprep.subr.bf16.mxu0 0
    %1510 = vmatpush2.bf16.msra.mxu0 0
    %1511 = vmatprep.mubr.bf16.mxu0 0
    %1512 = vmatmul.mubr.bf16.gmra.mxu0 %v1408
    %v1513 = vpop.f32.mrf.mxu0
    %v1514 = vadd.f32 %v1345, %v1513
    %v1515 = vpop.f32.mrf.mxu0
    %v1516 = vadd.f32 %v1349, %v1515
    %v1517 = vpop.f32.mrf.mxu0
    %v1518 = vpop.f32.mrf.mxu0
    %1519 = vdwg.mxu0
    %1520 = vmatprep.subr.bf16.mxu0 0
    %1521 = vmatpush1.bf16.msra.mxu0 0
    %1522 = vmatprep.subr.bf16.mxu0 0
    %1523 = vmatpush1.bf16.msra.mxu0 0
    %1524 = vmatprep.subr.bf16.mxu0 0
    %1525 = vmatpush1.bf16.msra.mxu0 0
    %1526 = vmatprep.subr.bf16.mxu0 0
    %1527 = vmatpush1.bf16.msra.mxu0 0
    %1528 = vmatprep.subr.bf16.mxu0 0
    %1529 = vmatpush1.bf16.msra.mxu0 0
    %1530 = vmatprep.subr.bf16.mxu0 0
    %1531 = vmatpush1.bf16.msra.mxu0 0
    %1532 = vmatprep.subr.bf16.mxu0 0
    %1533 = vmatpush1.bf16.msra.mxu0 0
    %1534 = vmatprep.subr.bf16.mxu0 %v1430
    %1535 = vmatpush1.bf16.msra.mxu0 %v1427
    %1536 = vmatprep.subr.bf16.mxu0 0
    %1537 = vmatpush2.bf16.msra.mxu0 0
    %1538 = vmatprep.subr.bf16.mxu0 0
    %1539 = vmatpush2.bf16.msra.mxu0 0
    %1540 = vmatprep.subr.bf16.mxu0 0
    %1541 = vmatpush2.bf16.msra.mxu0 0
    %1542 = vmatprep.subr.bf16.mxu0 0
    %1543 = vmatpush2.bf16.msra.mxu0 0
    %1544 = vmatprep.subr.bf16.mxu0 0
    %1545 = vmatpush2.bf16.msra.mxu0 0
    %1546 = vmatprep.subr.bf16.mxu0 0
    %1547 = vmatpush2.bf16.msra.mxu0 0
    %1548 = vmatprep.subr.bf16.mxu0 0
    %1549 = vmatpush2.bf16.msra.mxu0 0
    %1550 = vmatprep.subr.bf16.mxu0 0
    %1551 = vmatpush2.bf16.msra.mxu0 0
    %1552 = vmatprep.mubr.bf16.mxu0 0
    %1553 = vmatmul.mubr.bf16.gmra.mxu0 %v1408
    %v1554 = vpop.f32.mrf.mxu0
    %v1555 = vadd.f32 %v1353, %v1554
    %v1556 = vpop.f32.mrf.mxu0
    %v1557 = vadd.f32 %v1357, %v1556
    %v1558 = vpop.f32.mrf.mxu0
    %v1559 = vpop.f32.mrf.mxu0
    %1560 = vdwg.mxu0
    %1561 = vmatprep.subr.bf16.mxu0 0
    %1562 = vmatpush1.bf16.msra.mxu0 0
    %1563 = vmatprep.subr.bf16.mxu0 0
    %1564 = vmatpush1.bf16.msra.mxu0 0
    %1565 = vmatprep.subr.bf16.mxu0 0
    %1566 = vmatpush1.bf16.msra.mxu0 0
    %1567 = vmatprep.subr.bf16.mxu0 0
    %1568 = vmatpush1.bf16.msra.mxu0 0
    %1569 = vmatprep.subr.bf16.mxu0 0
    %1570 = vmatpush1.bf16.msra.mxu0 0
    %1571 = vmatprep.subr.bf16.mxu0 0
    %1572 = vmatpush1.bf16.msra.mxu0 0
    %1573 = vmatprep.subr.bf16.mxu0 0
    %1574 = vmatpush1.bf16.msra.mxu0 0
    %1575 = vmatprep.subr.bf16.mxu0 %v1436
    %1576 = vmatpush1.bf16.msra.mxu0 %v1433
    %1577 = vmatprep.subr.bf16.mxu0 0
    %1578 = vmatpush2.bf16.msra.mxu0 0
    %1579 = vmatprep.subr.bf16.mxu0 0
    %1580 = vmatpush2.bf16.msra.mxu0 0
    %1581 = vmatprep.subr.bf16.mxu0 0
    %1582 = vmatpush2.bf16.msra.mxu0 0
    %1583 = vmatprep.subr.bf16.mxu0 0
    %1584 = vmatpush2.bf16.msra.mxu0 0
    %1585 = vmatprep.subr.bf16.mxu0 0
    %1586 = vmatpush2.bf16.msra.mxu0 0
    %1587 = vmatprep.subr.bf16.mxu0 0
    %1588 = vmatpush2.bf16.msra.mxu0 0
    %1589 = vmatprep.subr.bf16.mxu0 0
    %1590 = vmatpush2.bf16.msra.mxu0 0
    %1591 = vmatprep.subr.bf16.mxu0 0
    %1592 = vmatpush2.bf16.msra.mxu0 0
    %1593 = vmatprep.mubr.bf16.mxu0 0
    %1594 = vmatmul.mubr.bf16.gmra.mxu0 %v1408
    %v1595 = vpop.f32.mrf.mxu0
    %v1596 = vadd.f32 %v1361, %v1595
    %v1597 = vpop.f32.mrf.mxu0
    %v1598 = vadd.f32 %v1365, %v1597
    %v1599 = vpop.f32.mrf.mxu0
    %v1600 = vpop.f32.mrf.mxu0
    %1601 = vdwg.mxu0
    %v1602 = vadd.f32 %v1291, %v1299
    %v1603 = vadd.f32 %v1292, %v1300
    %v1604 = vadd.f32 %v1293, %v1301
    %v1605 = vadd.f32 %v1294, %v1302
    %v1606 = vadd.f32 %v1295, %v1303
    %v1607 = vadd.f32 %v1296, %v1304
    %v1608 = vadd.f32 %v1297, %v1305
    %v1609 = vadd.f32 %v1298, %v1306
    %v1610 = vadd.f32 %v1307, %v1315
    %v1611 = vadd.f32 %v1308, %v1316
    %v1612 = vadd.f32 %v1309, %v1317
    %v1613 = vadd.f32 %v1310, %v1318
    %v1614 = vadd.f32 %v1311, %v1319
    %v1615 = vadd.f32 %v1312, %v1320
    %v1616 = vadd.f32 %v1313, %v1321
    %v1617 = vadd.f32 %v1314, %v1322
    %v1626 = vcombine.low %v1473, %v1475
    %v1627 = vcombine.low %v1514, %v1516
    %v1628 = vcombine.low %v1555, %v1557
    %v1629 = vcombine.low %v1596, %v1598
    %v1631 = vunpack.c.l.s4 1966171168
    %v1632 = vunpack.c.0.s8 %v1631
    %v1633 = vlaneseq
    %v1634 = vshrl.u32 %v1633, 7
    %v1635 = vsub.s32 %v1632, %v1634
    %v1636 = vrot.slane %v1626, %v1635
    %v1638 = vunpack.c.l.s4 1966171168
    %v1639 = vunpack.c.0.s8 %v1638
    %v1640 = vlaneseq
    %v1641 = vshrl.u32 %v1640, 7
    %v1642 = vsub.s32 %v1639, %v1641
    %v1643 = vrot.slane %v1627, %v1642
    %v1645 = vunpack.c.l.s4 1966171168
    %v1646 = vunpack.c.0.s8 %v1645
    %v1647 = vlaneseq
    %v1648 = vshrl.u32 %v1647, 7
    %v1649 = vsub.s32 %v1646, %v1648
    %v1650 = vrot.slane %v1628, %v1649
    %v1652 = vunpack.c.l.s4 1966171168
    %v1653 = vunpack.c.0.s8 %v1652
    %v1654 = vlaneseq
    %v1655 = vshrl.u32 %v1654, 7
    %v1656 = vsub.s32 %v1653, %v1655
    %v1657 = vrot.slane %v1629, %v1656
    %v1658 = vcombine.low %v1636, %v1643
    %v1659 = vcombine.high %v1636, %v1643
    %v1660 = vcombine.low %v1650, %v1657
    %v1661 = vcombine.high %v1650, %v1657
    %v1663 = vunpack.c.l.s4 1966171168
    %v1664 = vunpack.c.0.s8 %v1663
    %v1665 = vlaneseq
    %v1666 = vshrl.u32 %v1665, 7
    %v1667 = vsub.s32 %v1664, %v1666
    %v1668 = vrot.slane %v1658, %v1667
    %v1670 = vunpack.c.l.s4 1966171168
    %v1671 = vunpack.c.0.s8 %v1670
    %v1672 = vlaneseq
    %v1673 = vshrl.u32 %v1672, 7
    %v1674 = vsub.s32 %v1671, %v1673
    %v1675 = vrot.slane %v1659, %v1674
    %v1677 = vunpack.c.l.s4 1966171168
    %v1678 = vunpack.c.0.s8 %v1677
    %v1679 = vlaneseq
    %v1680 = vshrl.u32 %v1679, 7
    %v1681 = vsub.s32 %v1678, %v1680
    %v1682 = vrot.slane %v1660, %v1681
    %v1684 = vunpack.c.l.s4 1966171168
    %v1685 = vunpack.c.0.s8 %v1684
    %v1686 = vlaneseq
    %v1687 = vshrl.u32 %v1686, 7
    %v1688 = vsub.s32 %v1685, %v1687
    %v1689 = vrot.slane %v1661, %v1688
    %v1690 = vcombine.low %v1668, %v1682
    %v1691 = vcombine.low %v1675, %v1689
    %v1692 = vlaneseq
    %v1693 = vshrl.u32 %v1692, 7
    %v1694 = vsub.s32 0, %v1693
    %v1695 = vrot.slane %v1690, %v1694
    %v1696 = vlaneseq
    %v1697 = vshrl.u32 %v1696, 7
    %v1698 = vsub.s32 1, %v1697
    %v1699 = vrot.slane %v1690, %v1698
    %v1700 = vlaneseq
    %v1701 = vshrl.u32 %v1700, 7
    %v1702 = vsub.s32 2, %v1701
    %v1703 = vrot.slane %v1690, %v1702
    %v1704 = vlaneseq
    %v1705 = vshrl.u32 %v1704, 7
    %v1706 = vsub.s32 3, %v1705
    %v1707 = vrot.slane %v1690, %v1706
    %v1708 = vlaneseq
    %v1709 = vshrl.u32 %v1708, 7
    %v1710 = vsub.s32 4, %v1709
    %v1711 = vrot.slane %v1690, %v1710
    %v1712 = vlaneseq
    %v1713 = vshrl.u32 %v1712, 7
    %v1714 = vsub.s32 5, %v1713
    %v1715 = vrot.slane %v1690, %v1714
    %v1716 = vlaneseq
    %v1717 = vshrl.u32 %v1716, 7
    %v1718 = vsub.s32 6, %v1717
    %v1719 = vrot.slane %v1690, %v1718
    %v1720 = vlaneseq
    %v1721 = vshrl.u32 %v1720, 7
    %v1722 = vsub.s32 7, %v1721
    %v1723 = vrot.slane %v1690, %v1722
    %v1724 = vlaneseq
    %v1725 = vshrl.u32 %v1724, 7
    %v1726 = vsub.s32 0, %v1725
    %v1727 = vrot.slane %v1691, %v1726
    %v1728 = vlaneseq
    %v1729 = vshrl.u32 %v1728, 7
    %v1730 = vsub.s32 1, %v1729
    %v1731 = vrot.slane %v1691, %v1730
    %v1732 = vlaneseq
    %v1733 = vshrl.u32 %v1732, 7
    %v1734 = vsub.s32 2, %v1733
    %v1735 = vrot.slane %v1691, %v1734
    %v1736 = vlaneseq
    %v1737 = vshrl.u32 %v1736, 7
    %v1738 = vsub.s32 3, %v1737
    %v1739 = vrot.slane %v1691, %v1738
    %v1740 = vlaneseq
    %v1741 = vshrl.u32 %v1740, 7
    %v1742 = vsub.s32 4, %v1741
    %v1743 = vrot.slane %v1691, %v1742
    %v1744 = vlaneseq
    %v1745 = vshrl.u32 %v1744, 7
    %v1746 = vsub.s32 5, %v1745
    %v1747 = vrot.slane %v1691, %v1746
    %v1748 = vlaneseq
    %v1749 = vshrl.u32 %v1748, 7
    %v1750 = vsub.s32 6, %v1749
    %v1751 = vrot.slane %v1691, %v1750
    %v1752 = vlaneseq
    %v1753 = vshrl.u32 %v1752, 7
    %v1754 = vsub.s32 7, %v1753
    %v1755 = vrot.slane %v1691, %v1754
    %v1772 = vadd.f32 %v1602, %v1695
    %v1773 = vadd.f32 %v1603, %v1699
    %v1774 = vadd.f32 %v1604, %v1703
    %v1775 = vadd.f32 %v1605, %v1707
    %v1776 = vadd.f32 %v1606, %v1711
    %v1777 = vadd.f32 %v1607, %v1715
    %v1778 = vadd.f32 %v1608, %v1719
    %v1779 = vadd.f32 %v1609, %v1723
    %v1780 = vadd.f32 %v1610, %v1727
    %v1781 = vadd.f32 %v1611, %v1731
    %v1782 = vadd.f32 %v1612, %v1735
    %v1783 = vadd.f32 %v1613, %v1739
    %v1784 = vadd.f32 %v1614, %v1743
    %v1785 = vadd.f32 %v1615, %v1747
    %v1786 = vadd.f32 %v1616, %v1751
    %v1787 = vadd.f32 %v1617, %v1755
    %vm1788 = vcmp.ge.f32.partialorder %v1772, 0.0
    %vm1789 = vcmp.ge.f32.partialorder %v1773, 0.0
    %vm1790 = vcmp.ge.f32.partialorder %v1774, 0.0
    %vm1791 = vcmp.ge.f32.partialorder %v1775, 0.0
    %vm1792 = vcmp.ge.f32.partialorder %v1776, 0.0
    %vm1793 = vcmp.ge.f32.partialorder %v1777, 0.0
    %vm1794 = vcmp.ge.f32.partialorder %v1778, 0.0
    %vm1795 = vcmp.ge.f32.partialorder %v1779, 0.0
    %vm1796 = vcmp.ge.f32.partialorder %v1780, 0.0
    %vm1797 = vcmp.ge.f32.partialorder %v1781, 0.0
    %vm1798 = vcmp.ge.f32.partialorder %v1782, 0.0
    %vm1799 = vcmp.ge.f32.partialorder %v1783, 0.0
    %vm1800 = vcmp.ge.f32.partialorder %v1784, 0.0
    %vm1801 = vcmp.ge.f32.partialorder %v1785, 0.0
    %vm1802 = vcmp.ge.f32.partialorder %v1786, 0.0
    %vm1803 = vcmp.ge.f32.partialorder %v1787, 0.0
    %v1804 = vmul.f32 %v1772, 0.1
    %v1805 = vmul.f32 %v1773, 0.1
    %v1806 = vmul.f32 %v1774, 0.1
    %v1807 = vmul.f32 %v1775, 0.1
    %v1808 = vmul.f32 %v1776, 0.1
    %v1809 = vmul.f32 %v1777, 0.1
    %v1810 = vmul.f32 %v1778, 0.1
    %v1811 = vmul.f32 %v1779, 0.1
    %v1812 = vmul.f32 %v1780, 0.1
    %v1813 = vmul.f32 %v1781, 0.1
    %v1814 = vmul.f32 %v1782, 0.1
    %v1815 = vmul.f32 %v1783, 0.1
    %v1816 = vmul.f32 %v1784, 0.1
    %v1817 = vmul.f32 %v1785, 0.1
    %v1818 = vmul.f32 %v1786, 0.1
    %v1819 = vmul.f32 %v1787, 0.1
    %v1820 = vsel %vm1788, %v1772, %v1804
    %v1821 = vsel %vm1789, %v1773, %v1805
    %v1822 = vsel %vm1790, %v1774, %v1806
    %v1823 = vsel %vm1791, %v1775, %v1807
    %v1824 = vsel %vm1792, %v1776, %v1808
    %v1825 = vsel %vm1793, %v1777, %v1809
    %v1826 = vsel %vm1794, %v1778, %v1810
    %v1827 = vsel %vm1795, %v1779, %v1811
    %v1828 = vsel %vm1796, %v1780, %v1812
    %v1829 = vsel %vm1797, %v1781, %v1813
    %v1830 = vsel %vm1798, %v1782, %v1814
    %v1831 = vsel %vm1799, %v1783, %v1815
    %v1832 = vsel %vm1800, %v1784, %v1816
    %v1833 = vsel %vm1801, %v1785, %v1817
    %v1834 = vsel %vm1802, %v1786, %v1818
    %v1835 = vsel %vm1803, %v1787, %v1819
    %v1836 = vadd.f32 %v1820, %v1821
    %v1837 = vadd.f32 %v1836, %v1822
    %v1838 = vadd.f32 %v1837, %v1823
    %v1839 = vadd.f32 %v1838, %v1824
    %v1840 = vadd.f32 %v1839, %v1825
    %v1841 = vadd.f32 %v1840, %v1826
    %v1842 = vadd.f32 %v1841, %v1827
    %1843 = vadd.xlane.f32.xlu0 %v1842
    %v1844 = vpop.xlane.xlu0 %1843
    %v1845 = vadd.f32 %v1828, %v1829
    %v1846 = vadd.f32 %v1845, %v1830
    %v1847 = vadd.f32 %v1846, %v1831
    %v1848 = vadd.f32 %v1847, %v1832
    %v1849 = vadd.f32 %v1848, %v1833
    %v1850 = vadd.f32 %v1849, %v1834
    %v1851 = vadd.f32 %v1850, %v1835
    %1852 = vadd.xlane.f32.xlu0 %v1851
    %v1853 = vpop.xlane.xlu0 %1852
    %v1856 = vlaneseq
    %v1857 = vand.u32 %v1856, 127
    %v1858 = vlaneseq
    %v1859 = vshrl.u32 %v1858, 7
    %v1860 = vsub.s32 %v1857, %v1859
    %v1861 = vrot.slane %v1844, %v1860
    %v1862 = vlaneseq
    %v1863 = vshrl.u32 %v1862, 7
    %v1864 = vsub.s32 %v1857, %v1863
    %v1865 = vrot.slane %v1853, %v1864
    %vm1866 = vcmask 1041409
    %v1867 = vsel %vm1866, %v1865, %v1861
    %vm1869 = vcmask 58368
    %v1870 = vsel %vm1869, %v1867, 0.0
    %1871 = vadd.xlane.f32.xlu0 %v1870
    %v1872 = vpop.xlane.xlu0 %1871
    %v1873 = vmul.f32 %v1820, %v1820
    %v1874 = vmul.f32 %v1821, %v1821
    %v1875 = vmul.f32 %v1822, %v1822
    %v1876 = vmul.f32 %v1823, %v1823
    %v1877 = vmul.f32 %v1824, %v1824
    %v1878 = vmul.f32 %v1825, %v1825
    %v1879 = vmul.f32 %v1826, %v1826
    %v1880 = vmul.f32 %v1827, %v1827
    %v1881 = vmul.f32 %v1828, %v1828
    %v1882 = vmul.f32 %v1829, %v1829
    %v1883 = vmul.f32 %v1830, %v1830
    %v1884 = vmul.f32 %v1831, %v1831
    %v1885 = vmul.f32 %v1832, %v1832
    %v1886 = vmul.f32 %v1833, %v1833
    %v1887 = vmul.f32 %v1834, %v1834
    %v1888 = vmul.f32 %v1835, %v1835
    %v1889 = vadd.f32 %v1873, %v1874
    %v1890 = vadd.f32 %v1889, %v1875
    %v1891 = vadd.f32 %v1890, %v1876
    %v1892 = vadd.f32 %v1891, %v1877
    %v1893 = vadd.f32 %v1892, %v1878
    %v1894 = vadd.f32 %v1893, %v1879
    %v1895 = vadd.f32 %v1894, %v1880
    %1896 = vadd.xlane.f32.xlu0 %v1895
    %v1897 = vpop.xlane.xlu0 %1896
    %v1898 = vadd.f32 %v1881, %v1882
    %v1899 = vadd.f32 %v1898, %v1883
    %v1900 = vadd.f32 %v1899, %v1884
    %v1901 = vadd.f32 %v1900, %v1885
    %v1902 = vadd.f32 %v1901, %v1886
    %v1903 = vadd.f32 %v1902, %v1887
    %v1904 = vadd.f32 %v1903, %v1888
    %1905 = vadd.xlane.f32.xlu0 %v1904
    %v1906 = vpop.xlane.xlu0 %1905
    %v1909 = vlaneseq
    %v1910 = vshrl.u32 %v1909, 7
    %v1911 = vsub.s32 %v1857, %v1910
    %v1912 = vrot.slane %v1897, %v1911
    %v1913 = vlaneseq
    %v1914 = vshrl.u32 %v1913, 7
    %v1915 = vsub.s32 %v1857, %v1914
    %v1916 = vrot.slane %v1906, %v1915
    %v1917 = vsel %vm1866, %v1916, %v1912
    %v1919 = vsel %vm1869, %v1917, 0.0
    %1920 = vadd.xlane.f32.xlu0 %v1919
    %v1921 = vpop.xlane.xlu0 %1920
    %v1922 = vmul.f32 %v1872, 0.00012207031
    %v1923 = vmul.f32 %v1921, 0.00012207031
    %v1924 = vmul.f32 %v1922, %v1922
    %v1925 = vsub.f32 %v1923, %v1924
    %v1926 = vmax.f32 %v1925, 0.0
    %v1927 = vadd.f32 %v1926, 1e-05
    %v1928 = vrsqrt.pop %v1927
    %v1945 = vcombine.low %v1820, %v1821
    %v1946 = vcombine.high %v1820, %v1821
    %v1947 = vcombine.low %v1822, %v1823
    %v1948 = vcombine.high %v1822, %v1823
    %v1950 = vunpack.c.l.s4 1983009808
    %v1951 = vunpack.c.0.s8 %v1950
    %v1952 = vlaneseq
    %v1953 = vshrl.u32 %v1952, 7
    %v1954 = vsub.s32 %v1951, %v1953
    %v1955 = vrot.slane %v1945, %v1954
    %v1957 = vunpack.c.l.s4 1983009808
    %v1958 = vunpack.c.0.s8 %v1957
    %v1959 = vlaneseq
    %v1960 = vshrl.u32 %v1959, 7
    %v1961 = vsub.s32 %v1958, %v1960
    %v1962 = vrot.slane %v1946, %v1961
    %v1964 = vunpack.c.l.s4 1983009808
    %v1965 = vunpack.c.0.s8 %v1964
    %v1966 = vlaneseq
    %v1967 = vshrl.u32 %v1966, 7
    %v1968 = vsub.s32 %v1965, %v1967
    %v1969 = vrot.slane %v1947, %v1968
    %v1971 = vunpack.c.l.s4 1983009808
    %v1972 = vunpack.c.0.s8 %v1971
    %v1973 = vlaneseq
    %v1974 = vshrl.u32 %v1973, 7
    %v1975 = vsub.s32 %v1972, %v1974
    %v1976 = vrot.slane %v1948, %v1975
    %v1977 = vcombine.low %v1955, %v1969
    %v1978 = vcombine.high %v1955, %v1969
    %v1979 = vcombine.low %v1962, %v1976
    %v1980 = vcombine.high %v1962, %v1976
    %v1981 = vcombine.low %v1824, %v1825
    %v1982 = vcombine.high %v1824, %v1825
    %v1983 = vcombine.low %v1826, %v1827
    %v1984 = vcombine.high %v1826, %v1827
    %v1986 = vunpack.c.l.s4 1983009808
    %v1987 = vunpack.c.0.s8 %v1986
    %v1988 = vlaneseq
    %v1989 = vshrl.u32 %v1988, 7
    %v1990 = vsub.s32 %v1987, %v1989
    %v1991 = vrot.slane %v1981, %v1990
    %v1993 = vunpack.c.l.s4 1983009808
    %v1994 = vunpack.c.0.s8 %v1993
    %v1995 = vlaneseq
    %v1996 = vshrl.u32 %v1995, 7
    %v1997 = vsub.s32 %v1994, %v1996
    %v1998 = vrot.slane %v1982, %v1997
    %v2000 = vunpack.c.l.s4 1983009808
    %v2001 = vunpack.c.0.s8 %v2000
    %v2002 = vlaneseq
    %v2003 = vshrl.u32 %v2002, 7
    %v2004 = vsub.s32 %v2001, %v2003
    %v2005 = vrot.slane %v1983, %v2004
    %v2007 = vunpack.c.l.s4 1983009808
    %v2008 = vunpack.c.0.s8 %v2007
    %v2009 = vlaneseq
    %v2010 = vshrl.u32 %v2009, 7
    %v2011 = vsub.s32 %v2008, %v2010
    %v2012 = vrot.slane %v1984, %v2011
    %v2013 = vcombine.low %v1991, %v2005
    %v2014 = vcombine.high %v1991, %v2005
    %v2015 = vcombine.low %v1998, %v2012
    %v2016 = vcombine.high %v1998, %v2012
    %v2017 = vcombine.low %v1828, %v1829
    %v2018 = vcombine.high %v1828, %v1829
    %v2019 = vcombine.low %v1830, %v1831
    %v2020 = vcombine.high %v1830, %v1831
    %v2022 = vunpack.c.l.s4 1983009808
    %v2023 = vunpack.c.0.s8 %v2022
    %v2024 = vlaneseq
    %v2025 = vshrl.u32 %v2024, 7
    %v2026 = vsub.s32 %v2023, %v2025
    %v2027 = vrot.slane %v2017, %v2026
    %v2029 = vunpack.c.l.s4 1983009808
    %v2030 = vunpack.c.0.s8 %v2029
    %v2031 = vlaneseq
    %v2032 = vshrl.u32 %v2031, 7
    %v2033 = vsub.s32 %v2030, %v2032
    %v2034 = vrot.slane %v2018, %v2033
    %v2036 = vunpack.c.l.s4 1983009808
    %v2037 = vunpack.c.0.s8 %v2036
    %v2038 = vlaneseq
    %v2039 = vshrl.u32 %v2038, 7
    %v2040 = vsub.s32 %v2037, %v2039
    %v2041 = vrot.slane %v2019, %v2040
    %v2043 = vunpack.c.l.s4 1983009808
    %v2044 = vunpack.c.0.s8 %v2043
    %v2045 = vlaneseq
    %v2046 = vshrl.u32 %v2045, 7
    %v2047 = vsub.s32 %v2044, %v2046
    %v2048 = vrot.slane %v2020, %v2047
    %v2049 = vcombine.low %v2027, %v2041
    %v2050 = vcombine.high %v2027, %v2041
    %v2051 = vcombine.low %v2034, %v2048
    %v2052 = vcombine.high %v2034, %v2048
    %v2053 = vcombine.low %v1832, %v1833
    %v2054 = vcombine.high %v1832, %v1833
    %v2055 = vcombine.low %v1834, %v1835
    %v2056 = vcombine.high %v1834, %v1835
    %v2058 = vunpack.c.l.s4 1983009808
    %v2059 = vunpack.c.0.s8 %v2058
    %v2060 = vlaneseq
    %v2061 = vshrl.u32 %v2060, 7
    %v2062 = vsub.s32 %v2059, %v2061
    %v2063 = vrot.slane %v2053, %v2062
    %v2065 = vunpack.c.l.s4 1983009808
    %v2066 = vunpack.c.0.s8 %v2065
    %v2067 = vlaneseq
    %v2068 = vshrl.u32 %v2067, 7
    %v2069 = vsub.s32 %v2066, %v2068
    %v2070 = vrot.slane %v2054, %v2069
    %v2072 = vunpack.c.l.s4 1983009808
    %v2073 = vunpack.c.0.s8 %v2072
    %v2074 = vlaneseq
    %v2075 = vshrl.u32 %v2074, 7
    %v2076 = vsub.s32 %v2073, %v2075
    %v2077 = vrot.slane %v2055, %v2076
    %v2079 = vunpack.c.l.s4 1983009808
    %v2080 = vunpack.c.0.s8 %v2079
    %v2081 = vlaneseq
    %v2082 = vshrl.u32 %v2081, 7
    %v2083 = vsub.s32 %v2080, %v2082
    %v2084 = vrot.slane %v2056, %v2083
    %v2085 = vcombine.low %v2063, %v2077
    %v2086 = vcombine.high %v2063, %v2077
    %v2087 = vcombine.low %v2070, %v2084
    %v2088 = vcombine.high %v2070, %v2084
    %v2105 = vcombine.low %v1977, %v2049
    %v2106 = vcombine.high %v1977, %v2049
    %v2108 = vunpack.c.l.s4 1934713408
    %v2109 = vunpack.c.0.s8 %v2108
    %v2110 = vlaneseq
    %v2111 = vshrl.u32 %v2110, 7
    %v2112 = vsub.s32 %v2109, %v2111
    %v2113 = vrot.slane %v2105, %v2112
    %v2115 = vunpack.c.l.s4 1934713408
    %v2116 = vunpack.c.0.s8 %v2115
    %v2117 = vlaneseq
    %v2118 = vshrl.u32 %v2117, 7
    %v2119 = vsub.s32 %v2116, %v2118
    %v2120 = vrot.slane %v2106, %v2119
    %v2121 = vcombine.low %v2113, %v2120
    %v2122 = vcombine.high %v2113, %v2120
    %v2123 = vcombine.low %v1978, %v2050
    %v2124 = vcombine.high %v1978, %v2050
    %v2126 = vunpack.c.l.s4 1934713408
    %v2127 = vunpack.c.0.s8 %v2126
    %v2128 = vlaneseq
    %v2129 = vshrl.u32 %v2128, 7
    %v2130 = vsub.s32 %v2127, %v2129
    %v2131 = vrot.slane %v2123, %v2130
    %v2133 = vunpack.c.l.s4 1934713408
    %v2134 = vunpack.c.0.s8 %v2133
    %v2135 = vlaneseq
    %v2136 = vshrl.u32 %v2135, 7
    %v2137 = vsub.s32 %v2134, %v2136
    %v2138 = vrot.slane %v2124, %v2137
    %v2139 = vcombine.low %v2131, %v2138
    %v2140 = vcombine.high %v2131, %v2138
    %v2141 = vcombine.low %v1979, %v2051
    %v2142 = vcombine.high %v1979, %v2051
    %v2144 = vunpack.c.l.s4 1934713408
    %v2145 = vunpack.c.0.s8 %v2144
    %v2146 = vlaneseq
    %v2147 = vshrl.u32 %v2146, 7
    %v2148 = vsub.s32 %v2145, %v2147
    %v2149 = vrot.slane %v2141, %v2148
    %v2151 = vunpack.c.l.s4 1934713408
    %v2152 = vunpack.c.0.s8 %v2151
    %v2153 = vlaneseq
    %v2154 = vshrl.u32 %v2153, 7
    %v2155 = vsub.s32 %v2152, %v2154
    %v2156 = vrot.slane %v2142, %v2155
    %v2157 = vcombine.low %v2149, %v2156
    %v2158 = vcombine.high %v2149, %v2156
    %v2159 = vcombine.low %v1980, %v2052
    %v2160 = vcombine.high %v1980, %v2052
    %v2162 = vunpack.c.l.s4 1934713408
    %v2163 = vunpack.c.0.s8 %v2162
    %v2164 = vlaneseq
    %v2165 = vshrl.u32 %v2164, 7
    %v2166 = vsub.s32 %v2163, %v2165
    %v2167 = vrot.slane %v2159, %v2166
    %v2169 = vunpack.c.l.s4 1934713408
    %v2170 = vunpack.c.0.s8 %v2169
    %v2171 = vlaneseq
    %v2172 = vshrl.u32 %v2171, 7
    %v2173 = vsub.s32 %v2170, %v2172
    %v2174 = vrot.slane %v2160, %v2173
    %v2175 = vcombine.low %v2167, %v2174
    %v2176 = vcombine.high %v2167, %v2174
    %v2177 = vcombine.low %v2013, %v2085
    %v2178 = vcombine.high %v2013, %v2085
    %v2180 = vunpack.c.l.s4 1934713408
    %v2181 = vunpack.c.0.s8 %v2180
    %v2182 = vlaneseq
    %v2183 = vshrl.u32 %v2182, 7
    %v2184 = vsub.s32 %v2181, %v2183
    %v2185 = vrot.slane %v2177, %v2184
    %v2187 = vunpack.c.l.s4 1934713408
    %v2188 = vunpack.c.0.s8 %v2187
    %v2189 = vlaneseq
    %v2190 = vshrl.u32 %v2189, 7
    %v2191 = vsub.s32 %v2188, %v2190
    %v2192 = vrot.slane %v2178, %v2191
    %v2193 = vcombine.low %v2185, %v2192
    %v2194 = vcombine.high %v2185, %v2192
    %v2195 = vcombine.low %v2014, %v2086
    %v2196 = vcombine.high %v2014, %v2086
    %v2198 = vunpack.c.l.s4 1934713408
    %v2199 = vunpack.c.0.s8 %v2198
    %v2200 = vlaneseq
    %v2201 = vshrl.u32 %v2200, 7
    %v2202 = vsub.s32 %v2199, %v2201
    %v2203 = vrot.slane %v2195, %v2202
    %v2205 = vunpack.c.l.s4 1934713408
    %v2206 = vunpack.c.0.s8 %v2205
    %v2207 = vlaneseq
    %v2208 = vshrl.u32 %v2207, 7
    %v2209 = vsub.s32 %v2206, %v2208
    %v2210 = vrot.slane %v2196, %v2209
    %v2211 = vcombine.low %v2203, %v2210
    %v2212 = vcombine.high %v2203, %v2210
    %v2213 = vcombine.low %v2015, %v2087
    %v2214 = vcombine.high %v2015, %v2087
    %v2216 = vunpack.c.l.s4 1934713408
    %v2217 = vunpack.c.0.s8 %v2216
    %v2218 = vlaneseq
    %v2219 = vshrl.u32 %v2218, 7
    %v2220 = vsub.s32 %v2217, %v2219
    %v2221 = vrot.slane %v2213, %v2220
    %v2223 = vunpack.c.l.s4 1934713408
    %v2224 = vunpack.c.0.s8 %v2223
    %v2225 = vlaneseq
    %v2226 = vshrl.u32 %v2225, 7
    %v2227 = vsub.s32 %v2224, %v2226
    %v2228 = vrot.slane %v2214, %v2227
    %v2229 = vcombine.low %v2221, %v2228
    %v2230 = vcombine.high %v2221, %v2228
    %v2231 = vcombine.low %v2016, %v2088
    %v2232 = vcombine.high %v2016, %v2088
    %v2234 = vunpack.c.l.s4 1934713408
    %v2235 = vunpack.c.0.s8 %v2234
    %v2236 = vlaneseq
    %v2237 = vshrl.u32 %v2236, 7
    %v2238 = vsub.s32 %v2235, %v2237
    %v2239 = vrot.slane %v2231, %v2238
    %v2241 = vunpack.c.l.s4 1934713408
    %v2242 = vunpack.c.0.s8 %v2241
    %v2243 = vlaneseq
    %v2244 = vshrl.u32 %v2243, 7
    %v2245 = vsub.s32 %v2242, %v2244
    %v2246 = vrot.slane %v2232, %v2245
    %v2247 = vcombine.low %v2239, %v2246
    %v2248 = vcombine.high %v2239, %v2246
    %v2251 = vcombine.high %v2121, %v2121
    %v2253 = vunpack.c.l.s4 1983009808
    %v2254 = vunpack.c.0.s8 %v2253
    %v2255 = vlaneseq
    %v2256 = vshrl.u32 %v2255, 7
    %v2257 = vsub.s32 %v2254, %v2256
    %v2258 = vrot.slane %v2121, %v2257
    %v2260 = vunpack.c.l.s4 1983009808
    %v2261 = vunpack.c.0.s8 %v2260
    %v2262 = vlaneseq
    %v2263 = vshrl.u32 %v2262, 7
    %v2264 = vsub.s32 %v2261, %v2263
    %v2265 = vrot.slane %v2251, %v2264
    %v2266 = vcombine.high %v2258, %v2258
    %v2267 = vcombine.high %v2265, %v2265
    %v2268 = vcombine.high %v2193, %v2193
    %v2270 = vunpack.c.l.s4 1983009808
    %v2271 = vunpack.c.0.s8 %v2270
    %v2272 = vlaneseq
    %v2273 = vshrl.u32 %v2272, 7
    %v2274 = vsub.s32 %v2271, %v2273
    %v2275 = vrot.slane %v2193, %v2274
    %v2277 = vunpack.c.l.s4 1983009808
    %v2278 = vunpack.c.0.s8 %v2277
    %v2279 = vlaneseq
    %v2280 = vshrl.u32 %v2279, 7
    %v2281 = vsub.s32 %v2278, %v2280
    %v2282 = vrot.slane %v2268, %v2281
    %v2283 = vcombine.high %v2275, %v2275
    %v2284 = vcombine.high %v2282, %v2282
    %v2295 = vcombine.high %v2122, %v2122
    %v2297 = vunpack.c.l.s4 1983009808
    %v2298 = vunpack.c.0.s8 %v2297
    %v2299 = vlaneseq
    %v2300 = vshrl.u32 %v2299, 7
    %v2301 = vsub.s32 %v2298, %v2300
    %v2302 = vrot.slane %v2122, %v2301
    %v2304 = vunpack.c.l.s4 1983009808
    %v2305 = vunpack.c.0.s8 %v2304
    %v2306 = vlaneseq
    %v2307 = vshrl.u32 %v2306, 7
    %v2308 = vsub.s32 %v2305, %v2307
    %v2309 = vrot.slane %v2295, %v2308
    %v2310 = vcombine.high %v2302, %v2302
    %v2311 = vcombine.high %v2309, %v2309
    %v2312 = vcombine.high %v2194, %v2194
    %v2314 = vunpack.c.l.s4 1983009808
    %v2315 = vunpack.c.0.s8 %v2314
    %v2316 = vlaneseq
    %v2317 = vshrl.u32 %v2316, 7
    %v2318 = vsub.s32 %v2315, %v2317
    %v2319 = vrot.slane %v2194, %v2318
    %v2321 = vunpack.c.l.s4 1983009808
    %v2322 = vunpack.c.0.s8 %v2321
    %v2323 = vlaneseq
    %v2324 = vshrl.u32 %v2323, 7
    %v2325 = vsub.s32 %v2322, %v2324
    %v2326 = vrot.slane %v2312, %v2325
    %v2327 = vcombine.high %v2319, %v2319
    %v2328 = vcombine.high %v2326, %v2326
    %v2339 = vcombine.high %v2139, %v2139
    %v2341 = vunpack.c.l.s4 1983009808
    %v2342 = vunpack.c.0.s8 %v2341
    %v2343 = vlaneseq
    %v2344 = vshrl.u32 %v2343, 7
    %v2345 = vsub.s32 %v2342, %v2344
    %v2346 = vrot.slane %v2139, %v2345
    %v2348 = vunpack.c.l.s4 1983009808
    %v2349 = vunpack.c.0.s8 %v2348
    %v2350 = vlaneseq
    %v2351 = vshrl.u32 %v2350, 7
    %v2352 = vsub.s32 %v2349, %v2351
    %v2353 = vrot.slane %v2339, %v2352
    %v2354 = vcombine.high %v2346, %v2346
    %v2355 = vcombine.high %v2353, %v2353
    %v2356 = vcombine.high %v2211, %v2211
    %v2358 = vunpack.c.l.s4 1983009808
    %v2359 = vunpack.c.0.s8 %v2358
    %v2360 = vlaneseq
    %v2361 = vshrl.u32 %v2360, 7
    %v2362 = vsub.s32 %v2359, %v2361
    %v2363 = vrot.slane %v2211, %v2362
    %v2365 = vunpack.c.l.s4 1983009808
    %v2366 = vunpack.c.0.s8 %v2365
    %v2367 = vlaneseq
    %v2368 = vshrl.u32 %v2367, 7
    %v2369 = vsub.s32 %v2366, %v2368
    %v2370 = vrot.slane %v2356, %v2369
    %v2371 = vcombine.high %v2363, %v2363
    %v2372 = vcombine.high %v2370, %v2370
    %v2383 = vcombine.high %v2140, %v2140
    %v2385 = vunpack.c.l.s4 1983009808
    %v2386 = vunpack.c.0.s8 %v2385
    %v2387 = vlaneseq
    %v2388 = vshrl.u32 %v2387, 7
    %v2389 = vsub.s32 %v2386, %v2388
    %v2390 = vrot.slane %v2140, %v2389
    %v2392 = vunpack.c.l.s4 1983009808
    %v2393 = vunpack.c.0.s8 %v2392
    %v2394 = vlaneseq
    %v2395 = vshrl.u32 %v2394, 7
    %v2396 = vsub.s32 %v2393, %v2395
    %v2397 = vrot.slane %v2383, %v2396
    %v2398 = vcombine.high %v2390, %v2390
    %v2399 = vcombine.high %v2397, %v2397
    %v2400 = vcombine.high %v2212, %v2212
    %v2402 = vunpack.c.l.s4 1983009808
    %v2403 = vunpack.c.0.s8 %v2402
    %v2404 = vlaneseq
    %v2405 = vshrl.u32 %v2404, 7
    %v2406 = vsub.s32 %v2403, %v2405
    %v2407 = vrot.slane %v2212, %v2406
    %v2409 = vunpack.c.l.s4 1983009808
    %v2410 = vunpack.c.0.s8 %v2409
    %v2411 = vlaneseq
    %v2412 = vshrl.u32 %v2411, 7
    %v2413 = vsub.s32 %v2410, %v2412
    %v2414 = vrot.slane %v2400, %v2413
    %v2415 = vcombine.high %v2407, %v2407
    %v2416 = vcombine.high %v2414, %v2414
    %v2427 = vcombine.high %v2157, %v2157
    %v2429 = vunpack.c.l.s4 1983009808
    %v2430 = vunpack.c.0.s8 %v2429
    %v2431 = vlaneseq
    %v2432 = vshrl.u32 %v2431, 7
    %v2433 = vsub.s32 %v2430, %v2432
    %v2434 = vrot.slane %v2157, %v2433
    %v2436 = vunpack.c.l.s4 1983009808
    %v2437 = vunpack.c.0.s8 %v2436
    %v2438 = vlaneseq
    %v2439 = vshrl.u32 %v2438, 7
    %v2440 = vsub.s32 %v2437, %v2439
    %v2441 = vrot.slane %v2427, %v2440
    %v2442 = vcombine.high %v2434, %v2434
    %v2443 = vcombine.high %v2441, %v2441
    %v2444 = vcombine.high %v2229, %v2229
    %v2446 = vunpack.c.l.s4 1983009808
    %v2447 = vunpack.c.0.s8 %v2446
    %v2448 = vlaneseq
    %v2449 = vshrl.u32 %v2448, 7
    %v2450 = vsub.s32 %v2447, %v2449
    %v2451 = vrot.slane %v2229, %v2450
    %v2453 = vunpack.c.l.s4 1983009808
    %v2454 = vunpack.c.0.s8 %v2453
    %v2455 = vlaneseq
    %v2456 = vshrl.u32 %v2455, 7
    %v2457 = vsub.s32 %v2454, %v2456
    %v2458 = vrot.slane %v2444, %v2457
    %v2459 = vcombine.high %v2451, %v2451
    %v2460 = vcombine.high %v2458, %v2458
    %v2471 = vcombine.high %v2158, %v2158
    %v2473 = vunpack.c.l.s4 1983009808
    %v2474 = vunpack.c.0.s8 %v2473
    %v2475 = vlaneseq
    %v2476 = vshrl.u32 %v2475, 7
    %v2477 = vsub.s32 %v2474, %v2476
    %v2478 = vrot.slane %v2158, %v2477
    %v2480 = vunpack.c.l.s4 1983009808
    %v2481 = vunpack.c.0.s8 %v2480
    %v2482 = vlaneseq
    %v2483 = vshrl.u32 %v2482, 7
    %v2484 = vsub.s32 %v2481, %v2483
    %v2485 = vrot.slane %v2471, %v2484
    %v2486 = vcombine.high %v2478, %v2478
    %v2487 = vcombine.high %v2485, %v2485
    %v2488 = vcombine.high %v2230, %v2230
    %v2490 = vunpack.c.l.s4 1983009808
    %v2491 = vunpack.c.0.s8 %v2490
    %v2492 = vlaneseq
    %v2493 = vshrl.u32 %v2492, 7
    %v2494 = vsub.s32 %v2491, %v2493
    %v2495 = vrot.slane %v2230, %v2494
    %v2497 = vunpack.c.l.s4 1983009808
    %v2498 = vunpack.c.0.s8 %v2497
    %v2499 = vlaneseq
    %v2500 = vshrl.u32 %v2499, 7
    %v2501 = vsub.s32 %v2498, %v2500
    %v2502 = vrot.slane %v2488, %v2501
    %v2503 = vcombine.high %v2495, %v2495
    %v2504 = vcombine.high %v2502, %v2502
    %v2515 = vcombine.high %v2175, %v2175
    %v2517 = vunpack.c.l.s4 1983009808
    %v2518 = vunpack.c.0.s8 %v2517
    %v2519 = vlaneseq
    %v2520 = vshrl.u32 %v2519, 7
    %v2521 = vsub.s32 %v2518, %v2520
    %v2522 = vrot.slane %v2175, %v2521
    %v2524 = vunpack.c.l.s4 1983009808
    %v2525 = vunpack.c.0.s8 %v2524
    %v2526 = vlaneseq
    %v2527 = vshrl.u32 %v2526, 7
    %v2528 = vsub.s32 %v2525, %v2527
    %v2529 = vrot.slane %v2515, %v2528
    %v2530 = vcombine.high %v2522, %v2522
    %v2531 = vcombine.high %v2529, %v2529
    %v2532 = vcombine.high %v2247, %v2247
    %v2534 = vunpack.c.l.s4 1983009808
    %v2535 = vunpack.c.0.s8 %v2534
    %v2536 = vlaneseq
    %v2537 = vshrl.u32 %v2536, 7
    %v2538 = vsub.s32 %v2535, %v2537
    %v2539 = vrot.slane %v2247, %v2538
    %v2541 = vunpack.c.l.s4 1983009808
    %v2542 = vunpack.c.0.s8 %v2541
    %v2543 = vlaneseq
    %v2544 = vshrl.u32 %v2543, 7
    %v2545 = vsub.s32 %v2542, %v2544
    %v2546 = vrot.slane %v2532, %v2545
    %v2547 = vcombine.high %v2539, %v2539
    %v2548 = vcombine.high %v2546, %v2546
    %v2559 = vcombine.high %v2176, %v2176
    %v2561 = vunpack.c.l.s4 1983009808
    %v2562 = vunpack.c.0.s8 %v2561
    %v2563 = vlaneseq
    %v2564 = vshrl.u32 %v2563, 7
    %v2565 = vsub.s32 %v2562, %v2564
    %v2566 = vrot.slane %v2176, %v2565
    %v2568 = vunpack.c.l.s4 1983009808
    %v2569 = vunpack.c.0.s8 %v2568
    %v2570 = vlaneseq
    %v2571 = vshrl.u32 %v2570, 7
    %v2572 = vsub.s32 %v2569, %v2571
    %v2573 = vrot.slane %v2559, %v2572
    %v2574 = vcombine.high %v2566, %v2566
    %v2575 = vcombine.high %v2573, %v2573
    %v2576 = vcombine.high %v2248, %v2248
    %v2578 = vunpack.c.l.s4 1983009808
    %v2579 = vunpack.c.0.s8 %v2578
    %v2580 = vlaneseq
    %v2581 = vshrl.u32 %v2580, 7
    %v2582 = vsub.s32 %v2579, %v2581
    %v2583 = vrot.slane %v2248, %v2582
    %v2585 = vunpack.c.l.s4 1983009808
    %v2586 = vunpack.c.0.s8 %v2585
    %v2587 = vlaneseq
    %v2588 = vshrl.u32 %v2587, 7
    %v2589 = vsub.s32 %v2586, %v2588
    %v2590 = vrot.slane %v2576, %v2589
    %v2591 = vcombine.high %v2583, %v2583
    %v2592 = vcombine.high %v2590, %v2590
    %v2601 = vpack.c.bf16 %v2258, %v2258
    %v2602 = vpack.c.bf16 %v2266, %v2266
    %v2603 = vpack.c.bf16 %v2265, %v2265
    %v2604 = vpack.c.bf16 %v2267, %v2267
    %v2605 = vpack.c.bf16 %v2275, %v2275
    %v2606 = vpack.c.bf16 %v2283, %v2283
    %v2607 = vpack.c.bf16 %v2282, %v2282
    %v2608 = vpack.c.bf16 %v2284, %v2284
    %v2609 = vpack.c.bf16 %v2302, %v2302
    %v2610 = vpack.c.bf16 %v2310, %v2310
    %v2611 = vpack.c.bf16 %v2309, %v2309
    %v2612 = vpack.c.bf16 %v2311, %v2311
    %v2613 = vpack.c.bf16 %v2319, %v2319
    %v2614 = vpack.c.bf16 %v2327, %v2327
    %v2615 = vpack.c.bf16 %v2326, %v2326
    %v2616 = vpack.c.bf16 %v2328, %v2328
    %v2617 = vpack.c.bf16 %v2346, %v2346
    %v2618 = vpack.c.bf16 %v2354, %v2354
    %v2619 = vpack.c.bf16 %v2353, %v2353
    %v2620 = vpack.c.bf16 %v2355, %v2355
    %v2621 = vpack.c.bf16 %v2363, %v2363
    %v2622 = vpack.c.bf16 %v2371, %v2371
    %v2623 = vpack.c.bf16 %v2370, %v2370
    %v2624 = vpack.c.bf16 %v2372, %v2372
    %v2625 = vpack.c.bf16 %v2390, %v2390
    %v2626 = vpack.c.bf16 %v2398, %v2398
    %v2627 = vpack.c.bf16 %v2397, %v2397
    %v2628 = vpack.c.bf16 %v2399, %v2399
    %v2629 = vpack.c.bf16 %v2407, %v2407
    %v2630 = vpack.c.bf16 %v2415, %v2415
    %v2631 = vpack.c.bf16 %v2414, %v2414
    %v2632 = vpack.c.bf16 %v2416, %v2416
    %v2633 = vpack.c.bf16 %v2434, %v2434
    %v2634 = vpack.c.bf16 %v2442, %v2442
    %v2635 = vpack.c.bf16 %v2441, %v2441
    %v2636 = vpack.c.bf16 %v2443, %v2443
    %v2637 = vpack.c.bf16 %v2451, %v2451
    %v2638 = vpack.c.bf16 %v2459, %v2459
    %v2639 = vpack.c.bf16 %v2458, %v2458
    %v2640 = vpack.c.bf16 %v2460, %v2460
    %v2641 = vpack.c.bf16 %v2478, %v2478
    %v2642 = vpack.c.bf16 %v2486, %v2486
    %v2643 = vpack.c.bf16 %v2485, %v2485
    %v2644 = vpack.c.bf16 %v2487, %v2487
    %v2645 = vpack.c.bf16 %v2495, %v2495
    %v2646 = vpack.c.bf16 %v2503, %v2503
    %v2647 = vpack.c.bf16 %v2502, %v2502
    %v2648 = vpack.c.bf16 %v2504, %v2504
    %v2649 = vpack.c.bf16 %v2522, %v2522
    %v2650 = vpack.c.bf16 %v2530, %v2530
    %v2651 = vpack.c.bf16 %v2529, %v2529
    %v2652 = vpack.c.bf16 %v2531, %v2531
    %v2653 = vpack.c.bf16 %v2539, %v2539
    %v2654 = vpack.c.bf16 %v2547, %v2547
    %v2655 = vpack.c.bf16 %v2546, %v2546
    %v2656 = vpack.c.bf16 %v2548, %v2548
    %v2657 = vpack.c.bf16 %v2566, %v2566
    %v2658 = vpack.c.bf16 %v2574, %v2574
    %v2659 = vpack.c.bf16 %v2573, %v2573
    %v2660 = vpack.c.bf16 %v2575, %v2575
    %v2661 = vpack.c.bf16 %v2583, %v2583
    %v2662 = vpack.c.bf16 %v2591, %v2591
    %v2663 = vpack.c.bf16 %v2590, %v2590
    %v2664 = vpack.c.bf16 %v2592, %v2592
    %v2665 = vld [vmem:[#allocation8] sm:$0xff]
    %v2666 = vld [vmem:[#allocation8 + $0x8] sm:$0xff]
    %v2667 = vld [vmem:[#allocation8 + $0x10] sm:$0xff]
    %v2668 = vld [vmem:[#allocation8 + $0x18] sm:$0xff]
    %v2669 = vld [vmem:[#allocation8 + $0x20] sm:$0xff]
    %v2670 = vld [vmem:[#allocation8 + $0x28] sm:$0xff]
    %v2671 = vld [vmem:[#allocation8 + $0x30] sm:$0xff]
    %v2672 = vld [vmem:[#allocation8 + $0x38] sm:$0xff]
    %v2673 = vld [vmem:[#allocation8 + $0x40] sm:$0xff]
    %v2674 = vld [vmem:[#allocation8 + $0x48] sm:$0xff]
    %v2675 = vld [vmem:[#allocation8 + $0x50] sm:$0xff]
    %v2676 = vld [vmem:[#allocation8 + $0x58] sm:$0xff]
    %v2677 = vld [vmem:[#allocation8 + $0x60] sm:$0xff]
    %v2678 = vld [vmem:[#allocation8 + $0x68] sm:$0xff]
    %v2679 = vld [vmem:[#allocation8 + $0x70] sm:$0xff]
    %v2680 = vld [vmem:[#allocation8 + $0x78] sm:$0xff]
    %v2697 = vcombine.high %v2665, %v2665
    %v2699 = vunpack.c.l.s4 1983009808
    %v2700 = vunpack.c.0.s8 %v2699
    %v2701 = vlaneseq
    %v2702 = vshrl.u32 %v2701, 7
    %v2703 = vsub.s32 %v2700, %v2702
    %v2704 = vrot.slane %v2665, %v2703
    %v2706 = vunpack.c.l.s4 1983009808
    %v2707 = vunpack.c.0.s8 %v2706
    %v2708 = vlaneseq
    %v2709 = vshrl.u32 %v2708, 7
    %v2710 = vsub.s32 %v2707, %v2709
    %v2711 = vrot.slane %v2697, %v2710
    %v2712 = vcombine.high %v2704, %v2704
    %v2713 = vcombine.high %v2711, %v2711
    %v2714 = vcombine.high %v2666, %v2666
    %v2716 = vunpack.c.l.s4 1983009808
    %v2717 = vunpack.c.0.s8 %v2716
    %v2718 = vlaneseq
    %v2719 = vshrl.u32 %v2718, 7
    %v2720 = vsub.s32 %v2717, %v2719
    %v2721 = vrot.slane %v2666, %v2720
    %v2723 = vunpack.c.l.s4 1983009808
    %v2724 = vunpack.c.0.s8 %v2723
    %v2725 = vlaneseq
    %v2726 = vshrl.u32 %v2725, 7
    %v2727 = vsub.s32 %v2724, %v2726
    %v2728 = vrot.slane %v2714, %v2727
    %v2729 = vcombine.high %v2721, %v2721
    %v2730 = vcombine.high %v2728, %v2728
    %v2731 = vcombine.high %v2667, %v2667
    %v2733 = vunpack.c.l.s4 1983009808
    %v2734 = vunpack.c.0.s8 %v2733
    %v2735 = vlaneseq
    %v2736 = vshrl.u32 %v2735, 7
    %v2737 = vsub.s32 %v2734, %v2736
    %v2738 = vrot.slane %v2667, %v2737
    %v2740 = vunpack.c.l.s4 1983009808
    %v2741 = vunpack.c.0.s8 %v2740
    %v2742 = vlaneseq
    %v2743 = vshrl.u32 %v2742, 7
    %v2744 = vsub.s32 %v2741, %v2743
    %v2745 = vrot.slane %v2731, %v2744
    %v2746 = vcombine.high %v2738, %v2738
    %v2747 = vcombine.high %v2745, %v2745
    %v2748 = vcombine.high %v2668, %v2668
    %v2750 = vunpack.c.l.s4 1983009808
    %v2751 = vunpack.c.0.s8 %v2750
    %v2752 = vlaneseq
    %v2753 = vshrl.u32 %v2752, 7
    %v2754 = vsub.s32 %v2751, %v2753
    %v2755 = vrot.slane %v2668, %v2754
    %v2757 = vunpack.c.l.s4 1983009808
    %v2758 = vunpack.c.0.s8 %v2757
    %v2759 = vlaneseq
    %v2760 = vshrl.u32 %v2759, 7
    %v2761 = vsub.s32 %v2758, %v2760
    %v2762 = vrot.slane %v2748, %v2761
    %v2763 = vcombine.high %v2755, %v2755
    %v2764 = vcombine.high %v2762, %v2762
    %v2765 = vcombine.high %v2669, %v2669
    %v2767 = vunpack.c.l.s4 1983009808
    %v2768 = vunpack.c.0.s8 %v2767
    %v2769 = vlaneseq
    %v2770 = vshrl.u32 %v2769, 7
    %v2771 = vsub.s32 %v2768, %v2770
    %v2772 = vrot.slane %v2669, %v2771
    %v2774 = vunpack.c.l.s4 1983009808
    %v2775 = vunpack.c.0.s8 %v2774
    %v2776 = vlaneseq
    %v2777 = vshrl.u32 %v2776, 7
    %v2778 = vsub.s32 %v2775, %v2777
    %v2779 = vrot.slane %v2765, %v2778
    %v2780 = vcombine.high %v2772, %v2772
    %v2781 = vcombine.high %v2779, %v2779
    %v2782 = vcombine.high %v2670, %v2670
    %v2784 = vunpack.c.l.s4 1983009808
    %v2785 = vunpack.c.0.s8 %v2784
    %v2786 = vlaneseq
    %v2787 = vshrl.u32 %v2786, 7
    %v2788 = vsub.s32 %v2785, %v2787
    %v2789 = vrot.slane %v2670, %v2788
    %v2791 = vunpack.c.l.s4 1983009808
    %v2792 = vunpack.c.0.s8 %v2791
    %v2793 = vlaneseq
    %v2794 = vshrl.u32 %v2793, 7
    %v2795 = vsub.s32 %v2792, %v2794
    %v2796 = vrot.slane %v2782, %v2795
    %v2797 = vcombine.high %v2789, %v2789
    %v2798 = vcombine.high %v2796, %v2796
    %v2799 = vcombine.high %v2671, %v2671
    %v2801 = vunpack.c.l.s4 1983009808
    %v2802 = vunpack.c.0.s8 %v2801
    %v2803 = vlaneseq
    %v2804 = vshrl.u32 %v2803, 7
    %v2805 = vsub.s32 %v2802, %v2804
    %v2806 = vrot.slane %v2671, %v2805
    %v2808 = vunpack.c.l.s4 1983009808
    %v2809 = vunpack.c.0.s8 %v2808
    %v2810 = vlaneseq
    %v2811 = vshrl.u32 %v2810, 7
    %v2812 = vsub.s32 %v2809, %v2811
    %v2813 = vrot.slane %v2799, %v2812
    %v2814 = vcombine.high %v2806, %v2806
    %v2815 = vcombine.high %v2813, %v2813
    %v2816 = vcombine.high %v2672, %v2672
    %v2818 = vunpack.c.l.s4 1983009808
    %v2819 = vunpack.c.0.s8 %v2818
    %v2820 = vlaneseq
    %v2821 = vshrl.u32 %v2820, 7
    %v2822 = vsub.s32 %v2819, %v2821
    %v2823 = vrot.slane %v2672, %v2822
    %v2825 = vunpack.c.l.s4 1983009808
    %v2826 = vunpack.c.0.s8 %v2825
    %v2827 = vlaneseq
    %v2828 = vshrl.u32 %v2827, 7
    %v2829 = vsub.s32 %v2826, %v2828
    %v2830 = vrot.slane %v2816, %v2829
    %v2831 = vcombine.high %v2823, %v2823
    %v2832 = vcombine.high %v2830, %v2830
    %v2833 = vcombine.high %v2673, %v2673
    %v2835 = vunpack.c.l.s4 1983009808
    %v2836 = vunpack.c.0.s8 %v2835
    %v2837 = vlaneseq
    %v2838 = vshrl.u32 %v2837, 7
    %v2839 = vsub.s32 %v2836, %v2838
    %v2840 = vrot.slane %v2673, %v2839
    %v2842 = vunpack.c.l.s4 1983009808
    %v2843 = vunpack.c.0.s8 %v2842
    %v2844 = vlaneseq
    %v2845 = vshrl.u32 %v2844, 7
    %v2846 = vsub.s32 %v2843, %v2845
    %v2847 = vrot.slane %v2833, %v2846
    %v2848 = vcombine.high %v2840, %v2840
    %v2849 = vcombine.high %v2847, %v2847
    %v2850 = vcombine.high %v2674, %v2674
    %v2852 = vunpack.c.l.s4 1983009808
    %v2853 = vunpack.c.0.s8 %v2852
    %v2854 = vlaneseq
    %v2855 = vshrl.u32 %v2854, 7
    %v2856 = vsub.s32 %v2853, %v2855
    %v2857 = vrot.slane %v2674, %v2856
    %v2859 = vunpack.c.l.s4 1983009808
    %v2860 = vunpack.c.0.s8 %v2859
    %v2861 = vlaneseq
    %v2862 = vshrl.u32 %v2861, 7
    %v2863 = vsub.s32 %v2860, %v2862
    %v2864 = vrot.slane %v2850, %v2863
    %v2865 = vcombine.high %v2857, %v2857
    %v2866 = vcombine.high %v2864, %v2864
    %v2867 = vcombine.high %v2675, %v2675
    %v2869 = vunpack.c.l.s4 1983009808
    %v2870 = vunpack.c.0.s8 %v2869
    %v2871 = vlaneseq
    %v2872 = vshrl.u32 %v2871, 7
    %v2873 = vsub.s32 %v2870, %v2872
    %v2874 = vrot.slane %v2675, %v2873
    %v2876 = vunpack.c.l.s4 1983009808
    %v2877 = vunpack.c.0.s8 %v2876
    %v2878 = vlaneseq
    %v2879 = vshrl.u32 %v2878, 7
    %v2880 = vsub.s32 %v2877, %v2879
    %v2881 = vrot.slane %v2867, %v2880
    %v2882 = vcombine.high %v2874, %v2874
    %v2883 = vcombine.high %v2881, %v2881
    %v2884 = vcombine.high %v2676, %v2676
    %v2886 = vunpack.c.l.s4 1983009808
    %v2887 = vunpack.c.0.s8 %v2886
    %v2888 = vlaneseq
    %v2889 = vshrl.u32 %v2888, 7
    %v2890 = vsub.s32 %v2887, %v2889
    %v2891 = vrot.slane %v2676, %v2890
    %v2893 = vunpack.c.l.s4 1983009808
    %v2894 = vunpack.c.0.s8 %v2893
    %v2895 = vlaneseq
    %v2896 = vshrl.u32 %v2895, 7
    %v2897 = vsub.s32 %v2894, %v2896
    %v2898 = vrot.slane %v2884, %v2897
    %v2899 = vcombine.high %v2891, %v2891
    %v2900 = vcombine.high %v2898, %v2898
    %v2901 = vcombine.high %v2677, %v2677
    %v2903 = vunpack.c.l.s4 1983009808
    %v2904 = vunpack.c.0.s8 %v2903
    %v2905 = vlaneseq
    %v2906 = vshrl.u32 %v2905, 7
    %v2907 = vsub.s32 %v2904, %v2906
    %v2908 = vrot.slane %v2677, %v2907
    %v2910 = vunpack.c.l.s4 1983009808
    %v2911 = vunpack.c.0.s8 %v2910
    %v2912 = vlaneseq
    %v2913 = vshrl.u32 %v2912, 7
    %v2914 = vsub.s32 %v2911, %v2913
    %v2915 = vrot.slane %v2901, %v2914
    %v2916 = vcombine.high %v2908, %v2908
    %v2917 = vcombine.high %v2915, %v2915
    %v2918 = vcombine.high %v2678, %v2678
    %v2920 = vunpack.c.l.s4 1983009808
    %v2921 = vunpack.c.0.s8 %v2920
    %v2922 = vlaneseq
    %v2923 = vshrl.u32 %v2922, 7
    %v2924 = vsub.s32 %v2921, %v2923
    %v2925 = vrot.slane %v2678, %v2924
    %v2927 = vunpack.c.l.s4 1983009808
    %v2928 = vunpack.c.0.s8 %v2927
    %v2929 = vlaneseq
    %v2930 = vshrl.u32 %v2929, 7
    %v2931 = vsub.s32 %v2928, %v2930
    %v2932 = vrot.slane %v2918, %v2931
    %v2933 = vcombine.high %v2925, %v2925
    %v2934 = vcombine.high %v2932, %v2932
    %v2935 = vcombine.high %v2679, %v2679
    %v2937 = vunpack.c.l.s4 1983009808
    %v2938 = vunpack.c.0.s8 %v2937
    %v2939 = vlaneseq
    %v2940 = vshrl.u32 %v2939, 7
    %v2941 = vsub.s32 %v2938, %v2940
    %v2942 = vrot.slane %v2679, %v2941
    %v2944 = vunpack.c.l.s4 1983009808
    %v2945 = vunpack.c.0.s8 %v2944
    %v2946 = vlaneseq
    %v2947 = vshrl.u32 %v2946, 7
    %v2948 = vsub.s32 %v2945, %v2947
    %v2949 = vrot.slane %v2935, %v2948
    %v2950 = vcombine.high %v2942, %v2942
    %v2951 = vcombine.high %v2949, %v2949
    %v2952 = vcombine.high %v2680, %v2680
    %v2954 = vunpack.c.l.s4 1983009808
    %v2955 = vunpack.c.0.s8 %v2954
    %v2956 = vlaneseq
    %v2957 = vshrl.u32 %v2956, 7
    %v2958 = vsub.s32 %v2955, %v2957
    %v2959 = vrot.slane %v2680, %v2958
    %v2961 = vunpack.c.l.s4 1983009808
    %v2962 = vunpack.c.0.s8 %v2961
    %v2963 = vlaneseq
    %v2964 = vshrl.u32 %v2963, 7
    %v2965 = vsub.s32 %v2962, %v2964
    %v2966 = vrot.slane %v2952, %v2965
    %v2967 = vcombine.high %v2959, %v2959
    %v2968 = vcombine.high %v2966, %v2966
    %3033 = vmatprep.subr.bf16.mxu0 0
    %3034 = vmatpush1.bf16.xpose.msra.mxu0 0
    %3035 = vmatprep.subr.bf16.mxu0 0
    %3036 = vmatpush1.bf16.xpose.msra.mxu0 0
    %3037 = vmatprep.subr.bf16.mxu0 0
    %3038 = vmatpush1.bf16.xpose.msra.mxu0 0
    %3039 = vmatprep.subr.bf16.mxu0 0
    %3040 = vmatpush1.bf16.xpose.msra.mxu0 0
    %3041 = vmatprep.subr.bf16.mxu0 0
    %3042 = vmatpush1.bf16.xpose.msra.mxu0 0
    %3043 = vmatprep.subr.bf16.mxu0 0
    %3044 = vmatpush1.bf16.xpose.msra.mxu0 0
    %3045 = vmatprep.subr.bf16.mxu0 0
    %3046 = vmatpush1.bf16.xpose.msra.mxu0 0
    %3047 = vmatprep.subr.bf16.mxu0 %v2712
    %3048 = vmatpush1.bf16.xpose.msra.mxu0 %v2704
    %3049 = vmatprep.subr.bf16.mxu0 0
    %3050 = vmatpush2.bf16.xpose.msra.mxu0 0
    %3051 = vmatprep.subr.bf16.mxu0 0
    %3052 = vmatpush2.bf16.xpose.msra.mxu0 0
    %3053 = vmatprep.subr.bf16.mxu0 0
    %3054 = vmatpush2.bf16.xpose.msra.mxu0 0
    %3055 = vmatprep.subr.bf16.mxu0 0
    %3056 = vmatpush2.bf16.xpose.msra.mxu0 0
    %3057 = vmatprep.subr.bf16.mxu0 0
    %3058 = vmatpush2.bf16.xpose.msra.mxu0 0
    %3059 = vmatprep.subr.bf16.mxu0 0
    %3060 = vmatpush2.bf16.xpose.msra.mxu0 0
    %3061 = vmatprep.subr.bf16.mxu0 0
    %3062 = vmatpush2.bf16.xpose.msra.mxu0 0
    %3063 = vmatprep.subr.bf16.mxu0 0
    %3064 = vmatpush2.bf16.xpose.msra.mxu0 0
    %3065 = vmatprep.mubr.bf16.mxu0 %v2602
    %3066 = vmatmul.mubr.bf16.gmra.mxu0 %v2601
    %v3067 = vpop.f32.mrf.mxu0
    %v3068 = vadd.f32 0.0, %v3067
    %v3069 = vpop.f32.mrf.mxu0
    %v3070 = vpop.f32.mrf.mxu0
    %v3071 = vpop.f32.mrf.mxu0
    %3072 = vdwg.mxu0
    %3073 = vmatprep.subr.bf16.mxu0 0
    %3074 = vmatpush1.bf16.xpose.msra.mxu0 0
    %3075 = vmatprep.subr.bf16.mxu0 0
    %3076 = vmatpush1.bf16.xpose.msra.mxu0 0
    %3077 = vmatprep.subr.bf16.mxu0 0
    %3078 = vmatpush1.bf16.xpose.msra.mxu0 0
    %3079 = vmatprep.subr.bf16.mxu0 0
    %3080 = vmatpush1.bf16.xpose.msra.mxu0 0
    %3081 = vmatprep.subr.bf16.mxu0 0
    %3082 = vmatpush1.bf16.xpose.msra.mxu0 0
    %3083 = vmatprep.subr.bf16.mxu0 0
    %3084 = vmatpush1.bf16.xpose.msra.mxu0 0
    %3085 = vmatprep.subr.bf16.mxu0 0
    %3086 = vmatpush1.bf16.xpose.msra.mxu0 0
    %3087 = vmatprep.subr.bf16.mxu0 %v2713
    %3088 = vmatpush1.bf16.xpose.msra.mxu0 %v2711
    %3089 = vmatprep.subr.bf16.mxu0 0
    %3090 = vmatpush2.bf16.xpose.msra.mxu0 0
    %3091 = vmatprep.subr.bf16.mxu0 0
    %3092 = vmatpush2.bf16.xpose.msra.mxu0 0
    %3093 = vmatprep.subr.bf16.mxu0 0
    %3094 = vmatpush2.bf16.xpose.msra.mxu0 0
    %3095 = vmatprep.subr.bf16.mxu0 0
    %3096 = vmatpush2.bf16.xpose.msra.mxu0 0
    %3097 = vmatprep.subr.bf16.mxu0 0
    %3098 = vmatpush2.bf16.xpose.msra.mxu0 0
    %3099 = vmatprep.subr.bf16.mxu0 0
    %3100 = vmatpush2.bf16.xpose.msra.mxu0 0
    %3101 = vmatprep.subr.bf16.mxu0 0
    %3102 = vmatpush2.bf16.xpose.msra.mxu0 0
    %3103 = vmatprep.subr.bf16.mxu0 0
    %3104 = vmatpush2.bf16.xpose.msra.mxu0 0
    %3105 = vmatprep.mubr.bf16.mxu0 %v2604
    %3106 = vmatmul.mubr.bf16.gmra.mxu0 %v2603
    %v3107 = vpop.f32.mrf.mxu0
    %v3108 = vadd.f32 %v3068, %v3107
    %v3109 = vpop.f32.mrf.mxu0
    %v3110 = vpop.f32.mrf.mxu0
    %v3111 = vpop.f32.mrf.mxu0
    %3112 = vdwg.mxu0
    %3113 = vmatprep.subr.bf16.mxu0 0
    %3114 = vmatpush1.bf16.xpose.msra.mxu0 0
    %3115 = vmatprep.subr.bf16.mxu0 0
    %3116 = vmatpush1.bf16.xpose.msra.mxu0 0
    %3117 = vmatprep.subr.bf16.mxu0 0
    %3118 = vmatpush1.bf16.xpose.msra.mxu0 0
    %3119 = vmatprep.subr.bf16.mxu0 0
    %3120 = vmatpush1.bf16.xpose.msra.mxu0 0
    %3121 = vmatprep.subr.bf16.mxu0 0
    %3122 = vmatpush1.bf16.xpose.msra.mxu0 0
    %3123 = vmatprep.subr.bf16.mxu0 0
    %3124 = vmatpush1.bf16.xpose.msra.mxu0 0
    %3125 = vmatprep.subr.bf16.mxu0 0
    %3126 = vmatpush1.bf16.xpose.msra.mxu0 0
    %3127 = vmatprep.subr.bf16.mxu0 %v2729
    %3128 = vmatpush1.bf16.xpose.msra.mxu0 %v2721
    %3129 = vmatprep.subr.bf16.mxu0 0
    %3130 = vmatpush2.bf16.xpose.msra.mxu0 0
    %3131 = vmatprep.subr.bf16.mxu0 0
    %3132 = vmatpush2.bf16.xpose.msra.mxu0 0
    %3133 = vmatprep.subr.bf16.mxu0 0
    %3134 = vmatpush2.bf16.xpose.msra.mxu0 0
    %3135 = vmatprep.subr.bf16.mxu0 0
    %3136 = vmatpush2.bf16.xpose.msra.mxu0 0
    %3137 = vmatprep.subr.bf16.mxu0 0
    %3138 = vmatpush2.bf16.xpose.msra.mxu0 0
    %3139 = vmatprep.subr.bf16.mxu0 0
    %3140 = vmatpush2.bf16.xpose.msra.mxu0 0
    %3141 = vmatprep.subr.bf16.mxu0 0
    %3142 = vmatpush2.bf16.xpose.msra.mxu0 0
    %3143 = vmatprep.subr.bf16.mxu0 0
    %3144 = vmatpush2.bf16.xpose.msra.mxu0 0
    %3145 = vmatprep.mubr.bf16.mxu0 %v2606
    %3146 = vmatmul.mubr.bf16.gmra.mxu0 %v2605
    %v3147 = vpop.f32.mrf.mxu0
    %v3148 = vadd.f32 %v3108, %v3147
    %v3149 = vpop.f32.mrf.mxu0
    %v3150 = vpop.f32.mrf.mxu0
    %v3151 = vpop.f32.mrf.mxu0
    %3152 = vdwg.mxu0
    %3153 = vmatprep.subr.bf16.mxu0 0
    %3154 = vmatpush1.bf16.xpose.msra.mxu0 0
    %3155 = vmatprep.subr.bf16.mxu0 0
    %3156 = vmatpush1.bf16.xpose.msra.mxu0 0
    %3157 = vmatprep.subr.bf16.mxu0 0
    %3158 = vmatpush1.bf16.xpose.msra.mxu0 0
    %3159 = vmatprep.subr.bf16.mxu0 0
    %3160 = vmatpush1.bf16.xpose.msra.mxu0 0
    %3161 = vmatprep.subr.bf16.mxu0 0
    %3162 = vmatpush1.bf16.xpose.msra.mxu0 0
    %3163 = vmatprep.subr.bf16.mxu0 0
    %3164 = vmatpush1.bf16.xpose.msra.mxu0 0
    %3165 = vmatprep.subr.bf16.mxu0 0
    %3166 = vmatpush1.bf16.xpose.msra.mxu0 0
    %3167 = vmatprep.subr.bf16.mxu0 %v2730
    %3168 = vmatpush1.bf16.xpose.msra.mxu0 %v2728
    %3169 = vmatprep.subr.bf16.mxu0 0
    %3170 = vmatpush2.bf16.xpose.msra.mxu0 0
    %3171 = vmatprep.subr.bf16.mxu0 0
    %3172 = vmatpush2.bf16.xpose.msra.mxu0 0
    %3173 = vmatprep.subr.bf16.mxu0 0
    %3174 = vmatpush2.bf16.xpose.msra.mxu0 0
    %3175 = vmatprep.subr.bf16.mxu0 0
    %3176 = vmatpush2.bf16.xpose.msra.mxu0 0
    %3177 = vmatprep.subr.bf16.mxu0 0
    %3178 = vmatpush2.bf16.xpose.msra.mxu0 0
    %3179 = vmatprep.subr.bf16.mxu0 0
    %3180 = vmatpush2.bf16.xpose.msra.mxu0 0
    %3181 = vmatprep.subr.bf16.mxu0 0
    %3182 = vmatpush2.bf16.xpose.msra.mxu0 0
    %3183 = vmatprep.subr.bf16.mxu0 0
    %3184 = vmatpush2.bf16.xpose.msra.mxu0 0
    %3185 = vmatprep.mubr.bf16.mxu0 %v2608
    %3186 = vmatmul.mubr.bf16.gmra.mxu0 %v2607
    %v3187 = vpop.f32.mrf.mxu0
    %v3188 = vadd.f32 %v3148, %v3187
    %v3189 = vpop.f32.mrf.mxu0
    %v3190 = vpop.f32.mrf.mxu0
    %v3191 = vpop.f32.mrf.mxu0
    %3192 = vdwg.mxu0
    %3193 = vmatprep.subr.bf16.mxu0 0
    %3194 = vmatpush1.bf16.xpose.msra.mxu0 0
    %3195 = vmatprep.subr.bf16.mxu0 0
    %3196 = vmatpush1.bf16.xpose.msra.mxu0 0
    %3197 = vmatprep.subr.bf16.mxu0 0
    %3198 = vmatpush1.bf16.xpose.msra.mxu0 0
    %3199 = vmatprep.subr.bf16.mxu0 0
    %3200 = vmatpush1.bf16.xpose.msra.mxu0 0
    %3201 = vmatprep.subr.bf16.mxu0 0
    %3202 = vmatpush1.bf16.xpose.msra.mxu0 0
    %3203 = vmatprep.subr.bf16.mxu0 0
    %3204 = vmatpush1.bf16.xpose.msra.mxu0 0
    %3205 = vmatprep.subr.bf16.mxu0 0
    %3206 = vmatpush1.bf16.xpose.msra.mxu0 0
    %3207 = vmatprep.subr.bf16.mxu0 %v2746
    %3208 = vmatpush1.bf16.xpose.msra.mxu0 %v2738
    %3209 = vmatprep.subr.bf16.mxu0 0
    %3210 = vmatpush2.bf16.xpose.msra.mxu0 0
    %3211 = vmatprep.subr.bf16.mxu0 0
    %3212 = vmatpush2.bf16.xpose.msra.mxu0 0
    %3213 = vmatprep.subr.bf16.mxu0 0
    %3214 = vmatpush2.bf16.xpose.msra.mxu0 0
    %3215 = vmatprep.subr.bf16.mxu0 0
    %3216 = vmatpush2.bf16.xpose.msra.mxu0 0
    %3217 = vmatprep.subr.bf16.mxu0 0
    %3218 = vmatpush2.bf16.xpose.msra.mxu0 0
    %3219 = vmatprep.subr.bf16.mxu0 0
    %3220 = vmatpush2.bf16.xpose.msra.mxu0 0
    %3221 = vmatprep.subr.bf16.mxu0 0
    %3222 = vmatpush2.bf16.xpose.msra.mxu0 0
    %3223 = vmatprep.subr.bf16.mxu0 0
    %3224 = vmatpush2.bf16.xpose.msra.mxu0 0
    %3225 = vmatprep.mubr.bf16.mxu0 %v2610
    %3226 = vmatmul.mubr.bf16.gmra.mxu0 %v2609
    %v3227 = vpop.f32.mrf.mxu0
    %v3228 = vadd.f32 %v3188, %v3227
    %v3229 = vpop.f32.mrf.mxu0
    %v3230 = vpop.f32.mrf.mxu0
    %v3231 = vpop.f32.mrf.mxu0
    %3232 = vdwg.mxu0
    %3233 = vmatprep.subr.bf16.mxu0 0
    %3234 = vmatpush1.bf16.xpose.msra.mxu0 0
    %3235 = vmatprep.subr.bf16.mxu0 0
    %3236 = vmatpush1.bf16.xpose.msra.mxu0 0
    %3237 = vmatprep.subr.bf16.mxu0 0
    %3238 = vmatpush1.bf16.xpose.msra.mxu0 0
    %3239 = vmatprep.subr.bf16.mxu0 0
    %3240 = vmatpush1.bf16.xpose.msra.mxu0 0
    %3241 = vmatprep.subr.bf16.mxu0 0
    %3242 = vmatpush1.bf16.xpose.msra.mxu0 0
    %3243 = vmatprep.subr.bf16.mxu0 0
    %3244 = vmatpush1.bf16.xpose.msra.mxu0 0
    %3245 = vmatprep.subr.bf16.mxu0 0
    %3246 = vmatpush1.bf16.xpose.msra.mxu0 0
    %3247 = vmatprep.subr.bf16.mxu0 %v2747
    %3248 = vmatpush1.bf16.xpose.msra.mxu0 %v2745
    %3249 = vmatprep.subr.bf16.mxu0 0
    %3250 = vmatpush2.bf16.xpose.msra.mxu0 0
    %3251 = vmatprep.subr.bf16.mxu0 0
    %3252 = vmatpush2.bf16.xpose.msra.mxu0 0
    %3253 = vmatprep.subr.bf16.mxu0 0
    %3254 = vmatpush2.bf16.xpose.msra.mxu0 0
    %3255 = vmatprep.subr.bf16.mxu0 0
    %3256 = vmatpush2.bf16.xpose.msra.mxu0 0
    %3257 = vmatprep.subr.bf16.mxu0 0
    %3258 = vmatpush2.bf16.xpose.msra.mxu0 0
    %3259 = vmatprep.subr.bf16.mxu0 0
    %3260 = vmatpush2.bf16.xpose.msra.mxu0 0
    %3261 = vmatprep.subr.bf16.mxu0 0
    %3262 = vmatpush2.bf16.xpose.msra.mxu0 0
    %3263 = vmatprep.subr.bf16.mxu0 0
    %3264 = vmatpush2.bf16.xpose.msra.mxu0 0
    %3265 = vmatprep.mubr.bf16.mxu0 %v2612
    %3266 = vmatmul.mubr.bf16.gmra.mxu0 %v2611
    %v3267 = vpop.f32.mrf.mxu0
    %v3268 = vadd.f32 %v3228, %v3267
    %v3269 = vpop.f32.mrf.mxu0
    %v3270 = vpop.f32.mrf.mxu0
    %v3271 = vpop.f32.mrf.mxu0
    %3272 = vdwg.mxu0
    %3273 = vmatprep.subr.bf16.mxu0 0
    %3274 = vmatpush1.bf16.xpose.msra.mxu0 0
    %3275 = vmatprep.subr.bf16.mxu0 0
    %3276 = vmatpush1.bf16.xpose.msra.mxu0 0
    %3277 = vmatprep.subr.bf16.mxu0 0
    %3278 = vmatpush1.bf16.xpose.msra.mxu0 0
    %3279 = vmatprep.subr.bf16.mxu0 0
    %3280 = vmatpush1.bf16.xpose.msra.mxu0 0
    %3281 = vmatprep.subr.bf16.mxu0 0
    %3282 = vmatpush1.bf16.xpose.msra.mxu0 0
    %3283 = vmatprep.subr.bf16.mxu0 0
    %3284 = vmatpush1.bf16.xpose.msra.mxu0 0
    %3285 = vmatprep.subr.bf16.mxu0 0
    %3286 = vmatpush1.bf16.xpose.msra.mxu0 0
    %3287 = vmatprep.subr.bf16.mxu0 %v2763
    %3288 = vmatpush1.bf16.xpose.msra.mxu0 %v2755
    %3289 = vmatprep.subr.bf16.mxu0 0
    %3290 = vmatpush2.bf16.xpose.msra.mxu0 0
    %3291 = vmatprep.subr.bf16.mxu0 0
    %3292 = vmatpush2.bf16.xpose.msra.mxu0 0
    %3293 = vmatprep.subr.bf16.mxu0 0
    %3294 = vmatpush2.bf16.xpose.msra.mxu0 0
    %3295 = vmatprep.subr.bf16.mxu0 0
    %3296 = vmatpush2.bf16.xpose.msra.mxu0 0
    %3297 = vmatprep.subr.bf16.mxu0 0
    %3298 = vmatpush2.bf16.xpose.msra.mxu0 0
    %3299 = vmatprep.subr.bf16.mxu0 0
    %3300 = vmatpush2.bf16.xpose.msra.mxu0 0
    %3301 = vmatprep.subr.bf16.mxu0 0
    %3302 = vmatpush2.bf16.xpose.msra.mxu0 0
    %3303 = vmatprep.subr.bf16.mxu0 0
    %3304 = vmatpush2.bf16.xpose.msra.mxu0 0
    %3305 = vmatprep.mubr.bf16.mxu0 %v2614
    %3306 = vmatmul.mubr.bf16.gmra.mxu0 %v2613
    %v3307 = vpop.f32.mrf.mxu0
    %v3308 = vadd.f32 %v3268, %v3307
    %v3309 = vpop.f32.mrf.mxu0
    %v3310 = vpop.f32.mrf.mxu0
    %v3311 = vpop.f32.mrf.mxu0
    %3312 = vdwg.mxu0
    %3313 = vmatprep.subr.bf16.mxu0 0
    %3314 = vmatpush1.bf16.xpose.msra.mxu0 0
    %3315 = vmatprep.subr.bf16.mxu0 0
    %3316 = vmatpush1.bf16.xpose.msra.mxu0 0
    %3317 = vmatprep.subr.bf16.mxu0 0
    %3318 = vmatpush1.bf16.xpose.msra.mxu0 0
    %3319 = vmatprep.subr.bf16.mxu0 0
    %3320 = vmatpush1.bf16.xpose.msra.mxu0 0
    %3321 = vmatprep.subr.bf16.mxu0 0
    %3322 = vmatpush1.bf16.xpose.msra.mxu0 0
    %3323 = vmatprep.subr.bf16.mxu0 0
    %3324 = vmatpush1.bf16.xpose.msra.mxu0 0
    %3325 = vmatprep.subr.bf16.mxu0 0
    %3326 = vmatpush1.bf16.xpose.msra.mxu0 0
    %3327 = vmatprep.subr.bf16.mxu0 %v2764
    %3328 = vmatpush1.bf16.xpose.msra.mxu0 %v2762
    %3329 = vmatprep.subr.bf16.mxu0 0
    %3330 = vmatpush2.bf16.xpose.msra.mxu0 0
    %3331 = vmatprep.subr.bf16.mxu0 0
    %3332 = vmatpush2.bf16.xpose.msra.mxu0 0
    %3333 = vmatprep.subr.bf16.mxu0 0
    %3334 = vmatpush2.bf16.xpose.msra.mxu0 0
    %3335 = vmatprep.subr.bf16.mxu0 0
    %3336 = vmatpush2.bf16.xpose.msra.mxu0 0
    %3337 = vmatprep.subr.bf16.mxu0 0
    %3338 = vmatpush2.bf16.xpose.msra.mxu0 0
    %3339 = vmatprep.subr.bf16.mxu0 0
    %3340 = vmatpush2.bf16.xpose.msra.mxu0 0
    %3341 = vmatprep.subr.bf16.mxu0 0
    %3342 = vmatpush2.bf16.xpose.msra.mxu0 0
    %3343 = vmatprep.subr.bf16.mxu0 0
    %3344 = vmatpush2.bf16.xpose.msra.mxu0 0
    %3345 = vmatprep.mubr.bf16.mxu0 %v2616
    %3346 = vmatmul.mubr.bf16.gmra.mxu0 %v2615
    %v3347 = vpop.f32.mrf.mxu0
    %v3348 = vadd.f32 %v3308, %v3347
    %v3349 = vpop.f32.mrf.mxu0
    %v3350 = vpop.f32.mrf.mxu0
    %v3351 = vpop.f32.mrf.mxu0
    %3352 = vdwg.mxu0
    %3353 = vmatprep.subr.bf16.mxu0 0
    %3354 = vmatpush1.bf16.xpose.msra.mxu0 0
    %3355 = vmatprep.subr.bf16.mxu0 0
    %3356 = vmatpush1.bf16.xpose.msra.mxu0 0
    %3357 = vmatprep.subr.bf16.mxu0 0
    %3358 = vmatpush1.bf16.xpose.msra.mxu0 0
    %3359 = vmatprep.subr.bf16.mxu0 0
    %3360 = vmatpush1.bf16.xpose.msra.mxu0 0
    %3361 = vmatprep.subr.bf16.mxu0 0
    %3362 = vmatpush1.bf16.xpose.msra.mxu0 0
    %3363 = vmatprep.subr.bf16.mxu0 0
    %3364 = vmatpush1.bf16.xpose.msra.mxu0 0
    %3365 = vmatprep.subr.bf16.mxu0 0
    %3366 = vmatpush1.bf16.xpose.msra.mxu0 0
    %3367 = vmatprep.subr.bf16.mxu0 %v2780
    %3368 = vmatpush1.bf16.xpose.msra.mxu0 %v2772
    %3369 = vmatprep.subr.bf16.mxu0 0
    %3370 = vmatpush2.bf16.xpose.msra.mxu0 0
    %3371 = vmatprep.subr.bf16.mxu0 0
    %3372 = vmatpush2.bf16.xpose.msra.mxu0 0
    %3373 = vmatprep.subr.bf16.mxu0 0
    %3374 = vmatpush2.bf16.xpose.msra.mxu0 0
    %3375 = vmatprep.subr.bf16.mxu0 0
    %3376 = vmatpush2.bf16.xpose.msra.mxu0 0
    %3377 = vmatprep.subr.bf16.mxu0 0
    %3378 = vmatpush2.bf16.xpose.msra.mxu0 0
    %3379 = vmatprep.subr.bf16.mxu0 0
    %3380 = vmatpush2.bf16.xpose.msra.mxu0 0
    %3381 = vmatprep.subr.bf16.mxu0 0
    %3382 = vmatpush2.bf16.xpose.msra.mxu0 0
    %3383 = vmatprep.subr.bf16.mxu0 0
    %3384 = vmatpush2.bf16.xpose.msra.mxu0 0
    %3385 = vmatprep.mubr.bf16.mxu0 %v2618
    %3386 = vmatmul.mubr.bf16.gmra.mxu0 %v2617
    %v3387 = vpop.f32.mrf.mxu0
    %v3388 = vadd.f32 %v3348, %v3387
    %v3389 = vpop.f32.mrf.mxu0
    %v3390 = vpop.f32.mrf.mxu0
    %v3391 = vpop.f32.mrf.mxu0
    %3392 = vdwg.mxu0
    %3393 = vmatprep.subr.bf16.mxu0 0
    %3394 = vmatpush1.bf16.xpose.msra.mxu0 0
    %3395 = vmatprep.subr.bf16.mxu0 0
    %3396 = vmatpush1.bf16.xpose.msra.mxu0 0
    %3397 = vmatprep.subr.bf16.mxu0 0
    %3398 = vmatpush1.bf16.xpose.msra.mxu0 0
    %3399 = vmatprep.subr.bf16.mxu0 0
    %3400 = vmatpush1.bf16.xpose.msra.mxu0 0
    %3401 = vmatprep.subr.bf16.mxu0 0
    %3402 = vmatpush1.bf16.xpose.msra.mxu0 0
    %3403 = vmatprep.subr.bf16.mxu0 0
    %3404 = vmatpush1.bf16.xpose.msra.mxu0 0
    %3405 = vmatprep.subr.bf16.mxu0 0
    %3406 = vmatpush1.bf16.xpose.msra.mxu0 0
    %3407 = vmatprep.subr.bf16.mxu0 %v2781
    %3408 = vmatpush1.bf16.xpose.msra.mxu0 %v2779
    %3409 = vmatprep.subr.bf16.mxu0 0
    %3410 = vmatpush2.bf16.xpose.msra.mxu0 0
    %3411 = vmatprep.subr.bf16.mxu0 0
    %3412 = vmatpush2.bf16.xpose.msra.mxu0 0
    %3413 = vmatprep.subr.bf16.mxu0 0
    %3414 = vmatpush2.bf16.xpose.msra.mxu0 0
    %3415 = vmatprep.subr.bf16.mxu0 0
    %3416 = vmatpush2.bf16.xpose.msra.mxu0 0
    %3417 = vmatprep.subr.bf16.mxu0 0
    %3418 = vmatpush2.bf16.xpose.msra.mxu0 0
    %3419 = vmatprep.subr.bf16.mxu0 0
    %3420 = vmatpush2.bf16.xpose.msra.mxu0 0
    %3421 = vmatprep.subr.bf16.mxu0 0
    %3422 = vmatpush2.bf16.xpose.msra.mxu0 0
    %3423 = vmatprep.subr.bf16.mxu0 0
    %3424 = vmatpush2.bf16.xpose.msra.mxu0 0
    %3425 = vmatprep.mubr.bf16.mxu0 %v2620
    %3426 = vmatmul.mubr.bf16.gmra.mxu0 %v2619
    %v3427 = vpop.f32.mrf.mxu0
    %v3428 = vadd.f32 %v3388, %v3427
    %v3429 = vpop.f32.mrf.mxu0
    %v3430 = vpop.f32.mrf.mxu0
    %v3431 = vpop.f32.mrf.mxu0
    %3432 = vdwg.mxu0
    %3433 = vmatprep.subr.bf16.mxu0 0
    %3434 = vmatpush1.bf16.xpose.msra.mxu0 0
    %3435 = vmatprep.subr.bf16.mxu0 0
    %3436 = vmatpush1.bf16.xpose.msra.mxu0 0
    %3437 = vmatprep.subr.bf16.mxu0 0
    %3438 = vmatpush1.bf16.xpose.msra.mxu0 0
    %3439 = vmatprep.subr.bf16.mxu0 0
    %3440 = vmatpush1.bf16.xpose.msra.mxu0 0
    %3441 = vmatprep.subr.bf16.mxu0 0
    %3442 = vmatpush1.bf16.xpose.msra.mxu0 0
    %3443 = vmatprep.subr.bf16.mxu0 0
    %3444 = vmatpush1.bf16.xpose.msra.mxu0 0
    %3445 = vmatprep.subr.bf16.mxu0 0
    %3446 = vmatpush1.bf16.xpose.msra.mxu0 0
    %3447 = vmatprep.subr.bf16.mxu0 %v2797
    %3448 = vmatpush1.bf16.xpose.msra.mxu0 %v2789
    %3449 = vmatprep.subr.bf16.mxu0 0
    %3450 = vmatpush2.bf16.xpose.msra.mxu0 0
    %3451 = vmatprep.subr.bf16.mxu0 0
    %3452 = vmatpush2.bf16.xpose.msra.mxu0 0
    %3453 = vmatprep.subr.bf16.mxu0 0
    %3454 = vmatpush2.bf16.xpose.msra.mxu0 0
    %3455 = vmatprep.subr.bf16.mxu0 0
    %3456 = vmatpush2.bf16.xpose.msra.mxu0 0
    %3457 = vmatprep.subr.bf16.mxu0 0
    %3458 = vmatpush2.bf16.xpose.msra.mxu0 0
    %3459 = vmatprep.subr.bf16.mxu0 0
    %3460 = vmatpush2.bf16.xpose.msra.mxu0 0
    %3461 = vmatprep.subr.bf16.mxu0 0
    %3462 = vmatpush2.bf16.xpose.msra.mxu0 0
    %3463 = vmatprep.subr.bf16.mxu0 0
    %3464 = vmatpush2.bf16.xpose.msra.mxu0 0
    %3465 = vmatprep.mubr.bf16.mxu0 %v2622
    %3466 = vmatmul.mubr.bf16.gmra.mxu0 %v2621
    %v3467 = vpop.f32.mrf.mxu0
    %v3468 = vadd.f32 %v3428, %v3467
    %v3469 = vpop.f32.mrf.mxu0
    %v3470 = vpop.f32.mrf.mxu0
    %v3471 = vpop.f32.mrf.mxu0
    %3472 = vdwg.mxu0
    %3473 = vmatprep.subr.bf16.mxu0 0
    %3474 = vmatpush1.bf16.xpose.msra.mxu0 0
    %3475 = vmatprep.subr.bf16.mxu0 0
    %3476 = vmatpush1.bf16.xpose.msra.mxu0 0
    %3477 = vmatprep.subr.bf16.mxu0 0
    %3478 = vmatpush1.bf16.xpose.msra.mxu0 0
    %3479 = vmatprep.subr.bf16.mxu0 0
    %3480 = vmatpush1.bf16.xpose.msra.mxu0 0
    %3481 = vmatprep.subr.bf16.mxu0 0
    %3482 = vmatpush1.bf16.xpose.msra.mxu0 0
    %3483 = vmatprep.subr.bf16.mxu0 0
    %3484 = vmatpush1.bf16.xpose.msra.mxu0 0
    %3485 = vmatprep.subr.bf16.mxu0 0
    %3486 = vmatpush1.bf16.xpose.msra.mxu0 0
    %3487 = vmatprep.subr.bf16.mxu0 %v2798
    %3488 = vmatpush1.bf16.xpose.msra.mxu0 %v2796
    %3489 = vmatprep.subr.bf16.mxu0 0
    %3490 = vmatpush2.bf16.xpose.msra.mxu0 0
    %3491 = vmatprep.subr.bf16.mxu0 0
    %3492 = vmatpush2.bf16.xpose.msra.mxu0 0
    %3493 = vmatprep.subr.bf16.mxu0 0
    %3494 = vmatpush2.bf16.xpose.msra.mxu0 0
    %3495 = vmatprep.subr.bf16.mxu0 0
    %3496 = vmatpush2.bf16.xpose.msra.mxu0 0
    %3497 = vmatprep.subr.bf16.mxu0 0
    %3498 = vmatpush2.bf16.xpose.msra.mxu0 0
    %3499 = vmatprep.subr.bf16.mxu0 0
    %3500 = vmatpush2.bf16.xpose.msra.mxu0 0
    %3501 = vmatprep.subr.bf16.mxu0 0
    %3502 = vmatpush2.bf16.xpose.msra.mxu0 0
    %3503 = vmatprep.subr.bf16.mxu0 0
    %3504 = vmatpush2.bf16.xpose.msra.mxu0 0
    %3505 = vmatprep.mubr.bf16.mxu0 %v2624
    %3506 = vmatmul.mubr.bf16.gmra.mxu0 %v2623
    %v3507 = vpop.f32.mrf.mxu0
    %v3508 = vadd.f32 %v3468, %v3507
    %v3509 = vpop.f32.mrf.mxu0
    %v3510 = vpop.f32.mrf.mxu0
    %v3511 = vpop.f32.mrf.mxu0
    %3512 = vdwg.mxu0
    %3513 = vmatprep.subr.bf16.mxu0 0
    %3514 = vmatpush1.bf16.xpose.msra.mxu0 0
    %3515 = vmatprep.subr.bf16.mxu0 0
    %3516 = vmatpush1.bf16.xpose.msra.mxu0 0
    %3517 = vmatprep.subr.bf16.mxu0 0
    %3518 = vmatpush1.bf16.xpose.msra.mxu0 0
    %3519 = vmatprep.subr.bf16.mxu0 0
    %3520 = vmatpush1.bf16.xpose.msra.mxu0 0
    %3521 = vmatprep.subr.bf16.mxu0 0
    %3522 = vmatpush1.bf16.xpose.msra.mxu0 0
    %3523 = vmatprep.subr.bf16.mxu0 0
    %3524 = vmatpush1.bf16.xpose.msra.mxu0 0
    %3525 = vmatprep.subr.bf16.mxu0 0
    %3526 = vmatpush1.bf16.xpose.msra.mxu0 0
    %3527 = vmatprep.subr.bf16.mxu0 %v2814
    %3528 = vmatpush1.bf16.xpose.msra.mxu0 %v2806
    %3529 = vmatprep.subr.bf16.mxu0 0
    %3530 = vmatpush2.bf16.xpose.msra.mxu0 0
    %3531 = vmatprep.subr.bf16.mxu0 0
    %3532 = vmatpush2.bf16.xpose.msra.mxu0 0
    %3533 = vmatprep.subr.bf16.mxu0 0
    %3534 = vmatpush2.bf16.xpose.msra.mxu0 0
    %3535 = vmatprep.subr.bf16.mxu0 0
    %3536 = vmatpush2.bf16.xpose.msra.mxu0 0
    %3537 = vmatprep.subr.bf16.mxu0 0
    %3538 = vmatpush2.bf16.xpose.msra.mxu0 0
    %3539 = vmatprep.subr.bf16.mxu0 0
    %3540 = vmatpush2.bf16.xpose.msra.mxu0 0
    %3541 = vmatprep.subr.bf16.mxu0 0
    %3542 = vmatpush2.bf16.xpose.msra.mxu0 0
    %3543 = vmatprep.subr.bf16.mxu0 0
    %3544 = vmatpush2.bf16.xpose.msra.mxu0 0
    %3545 = vmatprep.mubr.bf16.mxu0 %v2626
    %3546 = vmatmul.mubr.bf16.gmra.mxu0 %v2625
    %v3547 = vpop.f32.mrf.mxu0
    %v3548 = vadd.f32 %v3508, %v3547
    %v3549 = vpop.f32.mrf.mxu0
    %v3550 = vpop.f32.mrf.mxu0
    %v3551 = vpop.f32.mrf.mxu0
    %3552 = vdwg.mxu0
    %3553 = vmatprep.subr.bf16.mxu0 0
    %3554 = vmatpush1.bf16.xpose.msra.mxu0 0
    %3555 = vmatprep.subr.bf16.mxu0 0
    %3556 = vmatpush1.bf16.xpose.msra.mxu0 0
    %3557 = vmatprep.subr.bf16.mxu0 0
    %3558 = vmatpush1.bf16.xpose.msra.mxu0 0
    %3559 = vmatprep.subr.bf16.mxu0 0
    %3560 = vmatpush1.bf16.xpose.msra.mxu0 0
    %3561 = vmatprep.subr.bf16.mxu0 0
    %3562 = vmatpush1.bf16.xpose.msra.mxu0 0
    %3563 = vmatprep.subr.bf16.mxu0 0
    %3564 = vmatpush1.bf16.xpose.msra.mxu0 0
    %3565 = vmatprep.subr.bf16.mxu0 0
    %3566 = vmatpush1.bf16.xpose.msra.mxu0 0
    %3567 = vmatprep.subr.bf16.mxu0 %v2815
    %3568 = vmatpush1.bf16.xpose.msra.mxu0 %v2813
    %3569 = vmatprep.subr.bf16.mxu0 0
    %3570 = vmatpush2.bf16.xpose.msra.mxu0 0
    %3571 = vmatprep.subr.bf16.mxu0 0
    %3572 = vmatpush2.bf16.xpose.msra.mxu0 0
    %3573 = vmatprep.subr.bf16.mxu0 0
    %3574 = vmatpush2.bf16.xpose.msra.mxu0 0
    %3575 = vmatprep.subr.bf16.mxu0 0
    %3576 = vmatpush2.bf16.xpose.msra.mxu0 0
    %3577 = vmatprep.subr.bf16.mxu0 0
    %3578 = vmatpush2.bf16.xpose.msra.mxu0 0
    %3579 = vmatprep.subr.bf16.mxu0 0
    %3580 = vmatpush2.bf16.xpose.msra.mxu0 0
    %3581 = vmatprep.subr.bf16.mxu0 0
    %3582 = vmatpush2.bf16.xpose.msra.mxu0 0
    %3583 = vmatprep.subr.bf16.mxu0 0
    %3584 = vmatpush2.bf16.xpose.msra.mxu0 0
    %3585 = vmatprep.mubr.bf16.mxu0 %v2628
    %3586 = vmatmul.mubr.bf16.gmra.mxu0 %v2627
    %v3587 = vpop.f32.mrf.mxu0
    %v3588 = vadd.f32 %v3548, %v3587
    %v3589 = vpop.f32.mrf.mxu0
    %v3590 = vpop.f32.mrf.mxu0
    %v3591 = vpop.f32.mrf.mxu0
    %3592 = vdwg.mxu0
    %3593 = vmatprep.subr.bf16.mxu0 0
    %3594 = vmatpush1.bf16.xpose.msra.mxu0 0
    %3595 = vmatprep.subr.bf16.mxu0 0
    %3596 = vmatpush1.bf16.xpose.msra.mxu0 0
    %3597 = vmatprep.subr.bf16.mxu0 0
    %3598 = vmatpush1.bf16.xpose.msra.mxu0 0
    %3599 = vmatprep.subr.bf16.mxu0 0
    %3600 = vmatpush1.bf16.xpose.msra.mxu0 0
    %3601 = vmatprep.subr.bf16.mxu0 0
    %3602 = vmatpush1.bf16.xpose.msra.mxu0 0
    %3603 = vmatprep.subr.bf16.mxu0 0
    %3604 = vmatpush1.bf16.xpose.msra.mxu0 0
    %3605 = vmatprep.subr.bf16.mxu0 0
    %3606 = vmatpush1.bf16.xpose.msra.mxu0 0
    %3607 = vmatprep.subr.bf16.mxu0 %v2831
    %3608 = vmatpush1.bf16.xpose.msra.mxu0 %v2823
    %3609 = vmatprep.subr.bf16.mxu0 0
    %3610 = vmatpush2.bf16.xpose.msra.mxu0 0
    %3611 = vmatprep.subr.bf16.mxu0 0
    %3612 = vmatpush2.bf16.xpose.msra.mxu0 0
    %3613 = vmatprep.subr.bf16.mxu0 0
    %3614 = vmatpush2.bf16.xpose.msra.mxu0 0
    %3615 = vmatprep.subr.bf16.mxu0 0
    %3616 = vmatpush2.bf16.xpose.msra.mxu0 0
    %3617 = vmatprep.subr.bf16.mxu0 0
    %3618 = vmatpush2.bf16.xpose.msra.mxu0 0
    %3619 = vmatprep.subr.bf16.mxu0 0
    %3620 = vmatpush2.bf16.xpose.msra.mxu0 0
    %3621 = vmatprep.subr.bf16.mxu0 0
    %3622 = vmatpush2.bf16.xpose.msra.mxu0 0
    %3623 = vmatprep.subr.bf16.mxu0 0
    %3624 = vmatpush2.bf16.xpose.msra.mxu0 0
    %3625 = vmatprep.mubr.bf16.mxu0 %v2630
    %3626 = vmatmul.mubr.bf16.gmra.mxu0 %v2629
    %v3627 = vpop.f32.mrf.mxu0
    %v3628 = vadd.f32 %v3588, %v3627
    %v3629 = vpop.f32.mrf.mxu0
    %v3630 = vpop.f32.mrf.mxu0
    %v3631 = vpop.f32.mrf.mxu0
    %3632 = vdwg.mxu0
    %3633 = vmatprep.subr.bf16.mxu0 0
    %3634 = vmatpush1.bf16.xpose.msra.mxu0 0
    %3635 = vmatprep.subr.bf16.mxu0 0
    %3636 = vmatpush1.bf16.xpose.msra.mxu0 0
    %3637 = vmatprep.subr.bf16.mxu0 0
    %3638 = vmatpush1.bf16.xpose.msra.mxu0 0
    %3639 = vmatprep.subr.bf16.mxu0 0
    %3640 = vmatpush1.bf16.xpose.msra.mxu0 0
    %3641 = vmatprep.subr.bf16.mxu0 0
    %3642 = vmatpush1.bf16.xpose.msra.mxu0 0
    %3643 = vmatprep.subr.bf16.mxu0 0
    %3644 = vmatpush1.bf16.xpose.msra.mxu0 0
    %3645 = vmatprep.subr.bf16.mxu0 0
    %3646 = vmatpush1.bf16.xpose.msra.mxu0 0
    %3647 = vmatprep.subr.bf16.mxu0 %v2832
    %3648 = vmatpush1.bf16.xpose.msra.mxu0 %v2830
    %3649 = vmatprep.subr.bf16.mxu0 0
    %3650 = vmatpush2.bf16.xpose.msra.mxu0 0
    %3651 = vmatprep.subr.bf16.mxu0 0
    %3652 = vmatpush2.bf16.xpose.msra.mxu0 0
    %3653 = vmatprep.subr.bf16.mxu0 0
    %3654 = vmatpush2.bf16.xpose.msra.mxu0 0
    %3655 = vmatprep.subr.bf16.mxu0 0
    %3656 = vmatpush2.bf16.xpose.msra.mxu0 0
    %3657 = vmatprep.subr.bf16.mxu0 0
    %3658 = vmatpush2.bf16.xpose.msra.mxu0 0
    %3659 = vmatprep.subr.bf16.mxu0 0
    %3660 = vmatpush2.bf16.xpose.msra.mxu0 0
    %3661 = vmatprep.subr.bf16.mxu0 0
    %3662 = vmatpush2.bf16.xpose.msra.mxu0 0
    %3663 = vmatprep.subr.bf16.mxu0 0
    %3664 = vmatpush2.bf16.xpose.msra.mxu0 0
    %3665 = vmatprep.mubr.bf16.mxu0 %v2632
    %3666 = vmatmul.mubr.bf16.gmra.mxu0 %v2631
    %v3667 = vpop.f32.mrf.mxu0
    %v3668 = vadd.f32 %v3628, %v3667
    %v3669 = vpop.f32.mrf.mxu0
    %v3670 = vpop.f32.mrf.mxu0
    %v3671 = vpop.f32.mrf.mxu0
    %3672 = vdwg.mxu0
    %3673 = vmatprep.subr.bf16.mxu0 0
    %3674 = vmatpush1.bf16.xpose.msra.mxu0 0
    %3675 = vmatprep.subr.bf16.mxu0 0
    %3676 = vmatpush1.bf16.xpose.msra.mxu0 0
    %3677 = vmatprep.subr.bf16.mxu0 0
    %3678 = vmatpush1.bf16.xpose.msra.mxu0 0
    %3679 = vmatprep.subr.bf16.mxu0 0
    %3680 = vmatpush1.bf16.xpose.msra.mxu0 0
    %3681 = vmatprep.subr.bf16.mxu0 0
    %3682 = vmatpush1.bf16.xpose.msra.mxu0 0
    %3683 = vmatprep.subr.bf16.mxu0 0
    %3684 = vmatpush1.bf16.xpose.msra.mxu0 0
    %3685 = vmatprep.subr.bf16.mxu0 0
    %3686 = vmatpush1.bf16.xpose.msra.mxu0 0
    %3687 = vmatprep.subr.bf16.mxu0 %v2848
    %3688 = vmatpush1.bf16.xpose.msra.mxu0 %v2840
    %3689 = vmatprep.subr.bf16.mxu0 0
    %3690 = vmatpush2.bf16.xpose.msra.mxu0 0
    %3691 = vmatprep.subr.bf16.mxu0 0
    %3692 = vmatpush2.bf16.xpose.msra.mxu0 0
    %3693 = vmatprep.subr.bf16.mxu0 0
    %3694 = vmatpush2.bf16.xpose.msra.mxu0 0
    %3695 = vmatprep.subr.bf16.mxu0 0
    %3696 = vmatpush2.bf16.xpose.msra.mxu0 0
    %3697 = vmatprep.subr.bf16.mxu0 0
    %3698 = vmatpush2.bf16.xpose.msra.mxu0 0
    %3699 = vmatprep.subr.bf16.mxu0 0
    %3700 = vmatpush2.bf16.xpose.msra.mxu0 0
    %3701 = vmatprep.subr.bf16.mxu0 0
    %3702 = vmatpush2.bf16.xpose.msra.mxu0 0
    %3703 = vmatprep.subr.bf16.mxu0 0
    %3704 = vmatpush2.bf16.xpose.msra.mxu0 0
    %3705 = vmatprep.mubr.bf16.mxu0 %v2634
    %3706 = vmatmul.mubr.bf16.gmra.mxu0 %v2633
    %v3707 = vpop.f32.mrf.mxu0
    %v3708 = vadd.f32 %v3668, %v3707
    %v3709 = vpop.f32.mrf.mxu0
    %v3710 = vpop.f32.mrf.mxu0
    %v3711 = vpop.f32.mrf.mxu0
    %3712 = vdwg.mxu0
    %3713 = vmatprep.subr.bf16.mxu0 0
    %3714 = vmatpush1.bf16.xpose.msra.mxu0 0
    %3715 = vmatprep.subr.bf16.mxu0 0
    %3716 = vmatpush1.bf16.xpose.msra.mxu0 0
    %3717 = vmatprep.subr.bf16.mxu0 0
    %3718 = vmatpush1.bf16.xpose.msra.mxu0 0
    %3719 = vmatprep.subr.bf16.mxu0 0
    %3720 = vmatpush1.bf16.xpose.msra.mxu0 0
    %3721 = vmatprep.subr.bf16.mxu0 0
    %3722 = vmatpush1.bf16.xpose.msra.mxu0 0
    %3723 = vmatprep.subr.bf16.mxu0 0
    %3724 = vmatpush1.bf16.xpose.msra.mxu0 0
    %3725 = vmatprep.subr.bf16.mxu0 0
    %3726 = vmatpush1.bf16.xpose.msra.mxu0 0
    %3727 = vmatprep.subr.bf16.mxu0 %v2849
    %3728 = vmatpush1.bf16.xpose.msra.mxu0 %v2847
    %3729 = vmatprep.subr.bf16.mxu0 0
    %3730 = vmatpush2.bf16.xpose.msra.mxu0 0
    %3731 = vmatprep.subr.bf16.mxu0 0
    %3732 = vmatpush2.bf16.xpose.msra.mxu0 0
    %3733 = vmatprep.subr.bf16.mxu0 0
    %3734 = vmatpush2.bf16.xpose.msra.mxu0 0
    %3735 = vmatprep.subr.bf16.mxu0 0
    %3736 = vmatpush2.bf16.xpose.msra.mxu0 0
    %3737 = vmatprep.subr.bf16.mxu0 0
    %3738 = vmatpush2.bf16.xpose.msra.mxu0 0
    %3739 = vmatprep.subr.bf16.mxu0 0
    %3740 = vmatpush2.bf16.xpose.msra.mxu0 0
    %3741 = vmatprep.subr.bf16.mxu0 0
    %3742 = vmatpush2.bf16.xpose.msra.mxu0 0
    %3743 = vmatprep.subr.bf16.mxu0 0
    %3744 = vmatpush2.bf16.xpose.msra.mxu0 0
    %3745 = vmatprep.mubr.bf16.mxu0 %v2636
    %3746 = vmatmul.mubr.bf16.gmra.mxu0 %v2635
    %v3747 = vpop.f32.mrf.mxu0
    %v3748 = vadd.f32 %v3708, %v3747
    %v3749 = vpop.f32.mrf.mxu0
    %v3750 = vpop.f32.mrf.mxu0
    %v3751 = vpop.f32.mrf.mxu0
    %3752 = vdwg.mxu0
    %3753 = vmatprep.subr.bf16.mxu0 0
    %3754 = vmatpush1.bf16.xpose.msra.mxu0 0
    %3755 = vmatprep.subr.bf16.mxu0 0
    %3756 = vmatpush1.bf16.xpose.msra.mxu0 0
    %3757 = vmatprep.subr.bf16.mxu0 0
    %3758 = vmatpush1.bf16.xpose.msra.mxu0 0
    %3759 = vmatprep.subr.bf16.mxu0 0
    %3760 = vmatpush1.bf16.xpose.msra.mxu0 0
    %3761 = vmatprep.subr.bf16.mxu0 0
    %3762 = vmatpush1.bf16.xpose.msra.mxu0 0
    %3763 = vmatprep.subr.bf16.mxu0 0
    %3764 = vmatpush1.bf16.xpose.msra.mxu0 0
    %3765 = vmatprep.subr.bf16.mxu0 0
    %3766 = vmatpush1.bf16.xpose.msra.mxu0 0
    %3767 = vmatprep.subr.bf16.mxu0 %v2865
    %3768 = vmatpush1.bf16.xpose.msra.mxu0 %v2857
    %3769 = vmatprep.subr.bf16.mxu0 0
    %3770 = vmatpush2.bf16.xpose.msra.mxu0 0
    %3771 = vmatprep.subr.bf16.mxu0 0
    %3772 = vmatpush2.bf16.xpose.msra.mxu0 0
    %3773 = vmatprep.subr.bf16.mxu0 0
    %3774 = vmatpush2.bf16.xpose.msra.mxu0 0
    %3775 = vmatprep.subr.bf16.mxu0 0
    %3776 = vmatpush2.bf16.xpose.msra.mxu0 0
    %3777 = vmatprep.subr.bf16.mxu0 0
    %3778 = vmatpush2.bf16.xpose.msra.mxu0 0
    %3779 = vmatprep.subr.bf16.mxu0 0
    %3780 = vmatpush2.bf16.xpose.msra.mxu0 0
    %3781 = vmatprep.subr.bf16.mxu0 0
    %3782 = vmatpush2.bf16.xpose.msra.mxu0 0
    %3783 = vmatprep.subr.bf16.mxu0 0
    %3784 = vmatpush2.bf16.xpose.msra.mxu0 0
    %3785 = vmatprep.mubr.bf16.mxu0 %v2638
    %3786 = vmatmul.mubr.bf16.gmra.mxu0 %v2637
    %v3787 = vpop.f32.mrf.mxu0
    %v3788 = vadd.f32 %v3748, %v3787
    %v3789 = vpop.f32.mrf.mxu0
    %v3790 = vpop.f32.mrf.mxu0
    %v3791 = vpop.f32.mrf.mxu0
    %3792 = vdwg.mxu0
    %3793 = vmatprep.subr.bf16.mxu0 0
    %3794 = vmatpush1.bf16.xpose.msra.mxu0 0
    %3795 = vmatprep.subr.bf16.mxu0 0
    %3796 = vmatpush1.bf16.xpose.msra.mxu0 0
    %3797 = vmatprep.subr.bf16.mxu0 0
    %3798 = vmatpush1.bf16.xpose.msra.mxu0 0
    %3799 = vmatprep.subr.bf16.mxu0 0
    %3800 = vmatpush1.bf16.xpose.msra.mxu0 0
    %3801 = vmatprep.subr.bf16.mxu0 0
    %3802 = vmatpush1.bf16.xpose.msra.mxu0 0
    %3803 = vmatprep.subr.bf16.mxu0 0
    %3804 = vmatpush1.bf16.xpose.msra.mxu0 0
    %3805 = vmatprep.subr.bf16.mxu0 0
    %3806 = vmatpush1.bf16.xpose.msra.mxu0 0
    %3807 = vmatprep.subr.bf16.mxu0 %v2866
    %3808 = vmatpush1.bf16.xpose.msra.mxu0 %v2864
    %3809 = vmatprep.subr.bf16.mxu0 0
    %3810 = vmatpush2.bf16.xpose.msra.mxu0 0
    %3811 = vmatprep.subr.bf16.mxu0 0
    %3812 = vmatpush2.bf16.xpose.msra.mxu0 0
    %3813 = vmatprep.subr.bf16.mxu0 0
    %3814 = vmatpush2.bf16.xpose.msra.mxu0 0
    %3815 = vmatprep.subr.bf16.mxu0 0
    %3816 = vmatpush2.bf16.xpose.msra.mxu0 0
    %3817 = vmatprep.subr.bf16.mxu0 0
    %3818 = vmatpush2.bf16.xpose.msra.mxu0 0
    %3819 = vmatprep.subr.bf16.mxu0 0
    %3820 = vmatpush2.bf16.xpose.msra.mxu0 0
    %3821 = vmatprep.subr.bf16.mxu0 0
    %3822 = vmatpush2.bf16.xpose.msra.mxu0 0
    %3823 = vmatprep.subr.bf16.mxu0 0
    %3824 = vmatpush2.bf16.xpose.msra.mxu0 0
    %3825 = vmatprep.mubr.bf16.mxu0 %v2640
    %3826 = vmatmul.mubr.bf16.gmra.mxu0 %v2639
    %v3827 = vpop.f32.mrf.mxu0
    %v3828 = vadd.f32 %v3788, %v3827
    %v3829 = vpop.f32.mrf.mxu0
    %v3830 = vpop.f32.mrf.mxu0
    %v3831 = vpop.f32.mrf.mxu0
    %3832 = vdwg.mxu0
    %3833 = vmatprep.subr.bf16.mxu0 0
    %3834 = vmatpush1.bf16.xpose.msra.mxu0 0
    %3835 = vmatprep.subr.bf16.mxu0 0
    %3836 = vmatpush1.bf16.xpose.msra.mxu0 0
    %3837 = vmatprep.subr.bf16.mxu0 0
    %3838 = vmatpush1.bf16.xpose.msra.mxu0 0
    %3839 = vmatprep.subr.bf16.mxu0 0
    %3840 = vmatpush1.bf16.xpose.msra.mxu0 0
    %3841 = vmatprep.subr.bf16.mxu0 0
    %3842 = vmatpush1.bf16.xpose.msra.mxu0 0
    %3843 = vmatprep.subr.bf16.mxu0 0
    %3844 = vmatpush1.bf16.xpose.msra.mxu0 0
    %3845 = vmatprep.subr.bf16.mxu0 0
    %3846 = vmatpush1.bf16.xpose.msra.mxu0 0
    %3847 = vmatprep.subr.bf16.mxu0 %v2882
    %3848 = vmatpush1.bf16.xpose.msra.mxu0 %v2874
    %3849 = vmatprep.subr.bf16.mxu0 0
    %3850 = vmatpush2.bf16.xpose.msra.mxu0 0
    %3851 = vmatprep.subr.bf16.mxu0 0
    %3852 = vmatpush2.bf16.xpose.msra.mxu0 0
    %3853 = vmatprep.subr.bf16.mxu0 0
    %3854 = vmatpush2.bf16.xpose.msra.mxu0 0
    %3855 = vmatprep.subr.bf16.mxu0 0
    %3856 = vmatpush2.bf16.xpose.msra.mxu0 0
    %3857 = vmatprep.subr.bf16.mxu0 0
    %3858 = vmatpush2.bf16.xpose.msra.mxu0 0
    %3859 = vmatprep.subr.bf16.mxu0 0
    %3860 = vmatpush2.bf16.xpose.msra.mxu0 0
    %3861 = vmatprep.subr.bf16.mxu0 0
    %3862 = vmatpush2.bf16.xpose.msra.mxu0 0
    %3863 = vmatprep.subr.bf16.mxu0 0
    %3864 = vmatpush2.bf16.xpose.msra.mxu0 0
    %3865 = vmatprep.mubr.bf16.mxu0 %v2642
    %3866 = vmatmul.mubr.bf16.gmra.mxu0 %v2641
    %v3867 = vpop.f32.mrf.mxu0
    %v3868 = vadd.f32 %v3828, %v3867
    %v3869 = vpop.f32.mrf.mxu0
    %v3870 = vpop.f32.mrf.mxu0
    %v3871 = vpop.f32.mrf.mxu0
    %3872 = vdwg.mxu0
    %3873 = vmatprep.subr.bf16.mxu0 0
    %3874 = vmatpush1.bf16.xpose.msra.mxu0 0
    %3875 = vmatprep.subr.bf16.mxu0 0
    %3876 = vmatpush1.bf16.xpose.msra.mxu0 0
    %3877 = vmatprep.subr.bf16.mxu0 0
    %3878 = vmatpush1.bf16.xpose.msra.mxu0 0
    %3879 = vmatprep.subr.bf16.mxu0 0
    %3880 = vmatpush1.bf16.xpose.msra.mxu0 0
    %3881 = vmatprep.subr.bf16.mxu0 0
    %3882 = vmatpush1.bf16.xpose.msra.mxu0 0
    %3883 = vmatprep.subr.bf16.mxu0 0
    %3884 = vmatpush1.bf16.xpose.msra.mxu0 0
    %3885 = vmatprep.subr.bf16.mxu0 0
    %3886 = vmatpush1.bf16.xpose.msra.mxu0 0
    %3887 = vmatprep.subr.bf16.mxu0 %v2883
    %3888 = vmatpush1.bf16.xpose.msra.mxu0 %v2881
    %3889 = vmatprep.subr.bf16.mxu0 0
    %3890 = vmatpush2.bf16.xpose.msra.mxu0 0
    %3891 = vmatprep.subr.bf16.mxu0 0
    %3892 = vmatpush2.bf16.xpose.msra.mxu0 0
    %3893 = vmatprep.subr.bf16.mxu0 0
    %3894 = vmatpush2.bf16.xpose.msra.mxu0 0
    %3895 = vmatprep.subr.bf16.mxu0 0
    %3896 = vmatpush2.bf16.xpose.msra.mxu0 0
    %3897 = vmatprep.subr.bf16.mxu0 0
    %3898 = vmatpush2.bf16.xpose.msra.mxu0 0
    %3899 = vmatprep.subr.bf16.mxu0 0
    %3900 = vmatpush2.bf16.xpose.msra.mxu0 0
    %3901 = vmatprep.subr.bf16.mxu0 0
    %3902 = vmatpush2.bf16.xpose.msra.mxu0 0
    %3903 = vmatprep.subr.bf16.mxu0 0
    %3904 = vmatpush2.bf16.xpose.msra.mxu0 0
    %3905 = vmatprep.mubr.bf16.mxu0 %v2644
    %3906 = vmatmul.mubr.bf16.gmra.mxu0 %v2643
    %v3907 = vpop.f32.mrf.mxu0
    %v3908 = vadd.f32 %v3868, %v3907
    %v3909 = vpop.f32.mrf.mxu0
    %v3910 = vpop.f32.mrf.mxu0
    %v3911 = vpop.f32.mrf.mxu0
    %3912 = vdwg.mxu0
    %3913 = vmatprep.subr.bf16.mxu0 0
    %3914 = vmatpush1.bf16.xpose.msra.mxu0 0
    %3915 = vmatprep.subr.bf16.mxu0 0
    %3916 = vmatpush1.bf16.xpose.msra.mxu0 0
    %3917 = vmatprep.subr.bf16.mxu0 0
    %3918 = vmatpush1.bf16.xpose.msra.mxu0 0
    %3919 = vmatprep.subr.bf16.mxu0 0
    %3920 = vmatpush1.bf16.xpose.msra.mxu0 0
    %3921 = vmatprep.subr.bf16.mxu0 0
    %3922 = vmatpush1.bf16.xpose.msra.mxu0 0
    %3923 = vmatprep.subr.bf16.mxu0 0
    %3924 = vmatpush1.bf16.xpose.msra.mxu0 0
    %3925 = vmatprep.subr.bf16.mxu0 0
    %3926 = vmatpush1.bf16.xpose.msra.mxu0 0
    %3927 = vmatprep.subr.bf16.mxu0 %v2899
    %3928 = vmatpush1.bf16.xpose.msra.mxu0 %v2891
    %3929 = vmatprep.subr.bf16.mxu0 0
    %3930 = vmatpush2.bf16.xpose.msra.mxu0 0
    %3931 = vmatprep.subr.bf16.mxu0 0
    %3932 = vmatpush2.bf16.xpose.msra.mxu0 0
    %3933 = vmatprep.subr.bf16.mxu0 0
    %3934 = vmatpush2.bf16.xpose.msra.mxu0 0
    %3935 = vmatprep.subr.bf16.mxu0 0
    %3936 = vmatpush2.bf16.xpose.msra.mxu0 0
    %3937 = vmatprep.subr.bf16.mxu0 0
    %3938 = vmatpush2.bf16.xpose.msra.mxu0 0
    %3939 = vmatprep.subr.bf16.mxu0 0
    %3940 = vmatpush2.bf16.xpose.msra.mxu0 0
    %3941 = vmatprep.subr.bf16.mxu0 0
    %3942 = vmatpush2.bf16.xpose.msra.mxu0 0
    %3943 = vmatprep.subr.bf16.mxu0 0
    %3944 = vmatpush2.bf16.xpose.msra.mxu0 0
    %3945 = vmatprep.mubr.bf16.mxu0 %v2646
    %3946 = vmatmul.mubr.bf16.gmra.mxu0 %v2645
    %v3947 = vpop.f32.mrf.mxu0
    %v3948 = vadd.f32 %v3908, %v3947
    %v3949 = vpop.f32.mrf.mxu0
    %v3950 = vpop.f32.mrf.mxu0
    %v3951 = vpop.f32.mrf.mxu0
    %3952 = vdwg.mxu0
    %3953 = vmatprep.subr.bf16.mxu0 0
    %3954 = vmatpush1.bf16.xpose.msra.mxu0 0
    %3955 = vmatprep.subr.bf16.mxu0 0
    %3956 = vmatpush1.bf16.xpose.msra.mxu0 0
    %3957 = vmatprep.subr.bf16.mxu0 0
    %3958 = vmatpush1.bf16.xpose.msra.mxu0 0
    %3959 = vmatprep.subr.bf16.mxu0 0
    %3960 = vmatpush1.bf16.xpose.msra.mxu0 0
    %3961 = vmatprep.subr.bf16.mxu0 0
    %3962 = vmatpush1.bf16.xpose.msra.mxu0 0
    %3963 = vmatprep.subr.bf16.mxu0 0
    %3964 = vmatpush1.bf16.xpose.msra.mxu0 0
    %3965 = vmatprep.subr.bf16.mxu0 0
    %3966 = vmatpush1.bf16.xpose.msra.mxu0 0
    %3967 = vmatprep.subr.bf16.mxu0 %v2900
    %3968 = vmatpush1.bf16.xpose.msra.mxu0 %v2898
    %3969 = vmatprep.subr.bf16.mxu0 0
    %3970 = vmatpush2.bf16.xpose.msra.mxu0 0
    %3971 = vmatprep.subr.bf16.mxu0 0
    %3972 = vmatpush2.bf16.xpose.msra.mxu0 0
    %3973 = vmatprep.subr.bf16.mxu0 0
    %3974 = vmatpush2.bf16.xpose.msra.mxu0 0
    %3975 = vmatprep.subr.bf16.mxu0 0
    %3976 = vmatpush2.bf16.xpose.msra.mxu0 0
    %3977 = vmatprep.subr.bf16.mxu0 0
    %3978 = vmatpush2.bf16.xpose.msra.mxu0 0
    %3979 = vmatprep.subr.bf16.mxu0 0
    %3980 = vmatpush2.bf16.xpose.msra.mxu0 0
    %3981 = vmatprep.subr.bf16.mxu0 0
    %3982 = vmatpush2.bf16.xpose.msra.mxu0 0
    %3983 = vmatprep.subr.bf16.mxu0 0
    %3984 = vmatpush2.bf16.xpose.msra.mxu0 0
    %3985 = vmatprep.mubr.bf16.mxu0 %v2648
    %3986 = vmatmul.mubr.bf16.gmra.mxu0 %v2647
    %v3987 = vpop.f32.mrf.mxu0
    %v3988 = vadd.f32 %v3948, %v3987
    %v3989 = vpop.f32.mrf.mxu0
    %v3990 = vpop.f32.mrf.mxu0
    %v3991 = vpop.f32.mrf.mxu0
    %3992 = vdwg.mxu0
    %3993 = vmatprep.subr.bf16.mxu0 0
    %3994 = vmatpush1.bf16.xpose.msra.mxu0 0
    %3995 = vmatprep.subr.bf16.mxu0 0
    %3996 = vmatpush1.bf16.xpose.msra.mxu0 0
    %3997 = vmatprep.subr.bf16.mxu0 0
    %3998 = vmatpush1.bf16.xpose.msra.mxu0 0
    %3999 = vmatprep.subr.bf16.mxu0 0
    %4000 = vmatpush1.bf16.xpose.msra.mxu0 0
    %4001 = vmatprep.subr.bf16.mxu0 0
    %4002 = vmatpush1.bf16.xpose.msra.mxu0 0
    %4003 = vmatprep.subr.bf16.mxu0 0
    %4004 = vmatpush1.bf16.xpose.msra.mxu0 0
    %4005 = vmatprep.subr.bf16.mxu0 0
    %4006 = vmatpush1.bf16.xpose.msra.mxu0 0
    %4007 = vmatprep.subr.bf16.mxu0 %v2916
    %4008 = vmatpush1.bf16.xpose.msra.mxu0 %v2908
    %4009 = vmatprep.subr.bf16.mxu0 0
    %4010 = vmatpush2.bf16.xpose.msra.mxu0 0
    %4011 = vmatprep.subr.bf16.mxu0 0
    %4012 = vmatpush2.bf16.xpose.msra.mxu0 0
    %4013 = vmatprep.subr.bf16.mxu0 0
    %4014 = vmatpush2.bf16.xpose.msra.mxu0 0
    %4015 = vmatprep.subr.bf16.mxu0 0
    %4016 = vmatpush2.bf16.xpose.msra.mxu0 0
    %4017 = vmatprep.subr.bf16.mxu0 0
    %4018 = vmatpush2.bf16.xpose.msra.mxu0 0
    %4019 = vmatprep.subr.bf16.mxu0 0
    %4020 = vmatpush2.bf16.xpose.msra.mxu0 0
    %4021 = vmatprep.subr.bf16.mxu0 0
    %4022 = vmatpush2.bf16.xpose.msra.mxu0 0
    %4023 = vmatprep.subr.bf16.mxu0 0
    %4024 = vmatpush2.bf16.xpose.msra.mxu0 0
    %4025 = vmatprep.mubr.bf16.mxu0 %v2650
    %4026 = vmatmul.mubr.bf16.gmra.mxu0 %v2649
    %v4027 = vpop.f32.mrf.mxu0
    %v4028 = vadd.f32 %v3988, %v4027
    %v4029 = vpop.f32.mrf.mxu0
    %v4030 = vpop.f32.mrf.mxu0
    %v4031 = vpop.f32.mrf.mxu0
    %4032 = vdwg.mxu0
    %4033 = vmatprep.subr.bf16.mxu0 0
    %4034 = vmatpush1.bf16.xpose.msra.mxu0 0
    %4035 = vmatprep.subr.bf16.mxu0 0
    %4036 = vmatpush1.bf16.xpose.msra.mxu0 0
    %4037 = vmatprep.subr.bf16.mxu0 0
    %4038 = vmatpush1.bf16.xpose.msra.mxu0 0
    %4039 = vmatprep.subr.bf16.mxu0 0
    %4040 = vmatpush1.bf16.xpose.msra.mxu0 0
    %4041 = vmatprep.subr.bf16.mxu0 0
    %4042 = vmatpush1.bf16.xpose.msra.mxu0 0
    %4043 = vmatprep.subr.bf16.mxu0 0
    %4044 = vmatpush1.bf16.xpose.msra.mxu0 0
    %4045 = vmatprep.subr.bf16.mxu0 0
    %4046 = vmatpush1.bf16.xpose.msra.mxu0 0
    %4047 = vmatprep.subr.bf16.mxu0 %v2917
    %4048 = vmatpush1.bf16.xpose.msra.mxu0 %v2915
    %4049 = vmatprep.subr.bf16.mxu0 0
    %4050 = vmatpush2.bf16.xpose.msra.mxu0 0
    %4051 = vmatprep.subr.bf16.mxu0 0
    %4052 = vmatpush2.bf16.xpose.msra.mxu0 0
    %4053 = vmatprep.subr.bf16.mxu0 0
    %4054 = vmatpush2.bf16.xpose.msra.mxu0 0
    %4055 = vmatprep.subr.bf16.mxu0 0
    %4056 = vmatpush2.bf16.xpose.msra.mxu0 0
    %4057 = vmatprep.subr.bf16.mxu0 0
    %4058 = vmatpush2.bf16.xpose.msra.mxu0 0
    %4059 = vmatprep.subr.bf16.mxu0 0
    %4060 = vmatpush2.bf16.xpose.msra.mxu0 0
    %4061 = vmatprep.subr.bf16.mxu0 0
    %4062 = vmatpush2.bf16.xpose.msra.mxu0 0
    %4063 = vmatprep.subr.bf16.mxu0 0
    %4064 = vmatpush2.bf16.xpose.msra.mxu0 0
    %4065 = vmatprep.mubr.bf16.mxu0 %v2652
    %4066 = vmatmul.mubr.bf16.gmra.mxu0 %v2651
    %v4067 = vpop.f32.mrf.mxu0
    %v4068 = vadd.f32 %v4028, %v4067
    %v4069 = vpop.f32.mrf.mxu0
    %v4070 = vpop.f32.mrf.mxu0
    %v4071 = vpop.f32.mrf.mxu0
    %4072 = vdwg.mxu0
    %4073 = vmatprep.subr.bf16.mxu0 0
    %4074 = vmatpush1.bf16.xpose.msra.mxu0 0
    %4075 = vmatprep.subr.bf16.mxu0 0
    %4076 = vmatpush1.bf16.xpose.msra.mxu0 0
    %4077 = vmatprep.subr.bf16.mxu0 0
    %4078 = vmatpush1.bf16.xpose.msra.mxu0 0
    %4079 = vmatprep.subr.bf16.mxu0 0
    %4080 = vmatpush1.bf16.xpose.msra.mxu0 0
    %4081 = vmatprep.subr.bf16.mxu0 0
    %4082 = vmatpush1.bf16.xpose.msra.mxu0 0
    %4083 = vmatprep.subr.bf16.mxu0 0
    %4084 = vmatpush1.bf16.xpose.msra.mxu0 0
    %4085 = vmatprep.subr.bf16.mxu0 0
    %4086 = vmatpush1.bf16.xpose.msra.mxu0 0
    %4087 = vmatprep.subr.bf16.mxu0 %v2933
    %4088 = vmatpush1.bf16.xpose.msra.mxu0 %v2925
    %4089 = vmatprep.subr.bf16.mxu0 0
    %4090 = vmatpush2.bf16.xpose.msra.mxu0 0
    %4091 = vmatprep.subr.bf16.mxu0 0
    %4092 = vmatpush2.bf16.xpose.msra.mxu0 0
    %4093 = vmatprep.subr.bf16.mxu0 0
    %4094 = vmatpush2.bf16.xpose.msra.mxu0 0
    %4095 = vmatprep.subr.bf16.mxu0 0
    %4096 = vmatpush2.bf16.xpose.msra.mxu0 0
    %4097 = vmatprep.subr.bf16.mxu0 0
    %4098 = vmatpush2.bf16.xpose.msra.mxu0 0
    %4099 = vmatprep.subr.bf16.mxu0 0
    %4100 = vmatpush2.bf16.xpose.msra.mxu0 0
    %4101 = vmatprep.subr.bf16.mxu0 0
    %4102 = vmatpush2.bf16.xpose.msra.mxu0 0
    %4103 = vmatprep.subr.bf16.mxu0 0
    %4104 = vmatpush2.bf16.xpose.msra.mxu0 0
    %4105 = vmatprep.mubr.bf16.mxu0 %v2654
    %4106 = vmatmul.mubr.bf16.gmra.mxu0 %v2653
    %v4107 = vpop.f32.mrf.mxu0
    %v4108 = vadd.f32 %v4068, %v4107
    %v4109 = vpop.f32.mrf.mxu0
    %v4110 = vpop.f32.mrf.mxu0
    %v4111 = vpop.f32.mrf.mxu0
    %4112 = vdwg.mxu0
    %4113 = vmatprep.subr.bf16.mxu0 0
    %4114 = vmatpush1.bf16.xpose.msra.mxu0 0
    %4115 = vmatprep.subr.bf16.mxu0 0
    %4116 = vmatpush1.bf16.xpose.msra.mxu0 0
    %4117 = vmatprep.subr.bf16.mxu0 0
    %4118 = vmatpush1.bf16.xpose.msra.mxu0 0
    %4119 = vmatprep.subr.bf16.mxu0 0
    %4120 = vmatpush1.bf16.xpose.msra.mxu0 0
    %4121 = vmatprep.subr.bf16.mxu0 0
    %4122 = vmatpush1.bf16.xpose.msra.mxu0 0
    %4123 = vmatprep.subr.bf16.mxu0 0
    %4124 = vmatpush1.bf16.xpose.msra.mxu0 0
    %4125 = vmatprep.subr.bf16.mxu0 0
    %4126 = vmatpush1.bf16.xpose.msra.mxu0 0
    %4127 = vmatprep.subr.bf16.mxu0 %v2934
    %4128 = vmatpush1.bf16.xpose.msra.mxu0 %v2932
    %4129 = vmatprep.subr.bf16.mxu0 0
    %4130 = vmatpush2.bf16.xpose.msra.mxu0 0
    %4131 = vmatprep.subr.bf16.mxu0 0
    %4132 = vmatpush2.bf16.xpose.msra.mxu0 0
    %4133 = vmatprep.subr.bf16.mxu0 0
    %4134 = vmatpush2.bf16.xpose.msra.mxu0 0
    %4135 = vmatprep.subr.bf16.mxu0 0
    %4136 = vmatpush2.bf16.xpose.msra.mxu0 0
    %4137 = vmatprep.subr.bf16.mxu0 0
    %4138 = vmatpush2.bf16.xpose.msra.mxu0 0
    %4139 = vmatprep.subr.bf16.mxu0 0
    %4140 = vmatpush2.bf16.xpose.msra.mxu0 0
    %4141 = vmatprep.subr.bf16.mxu0 0
    %4142 = vmatpush2.bf16.xpose.msra.mxu0 0
    %4143 = vmatprep.subr.bf16.mxu0 0
    %4144 = vmatpush2.bf16.xpose.msra.mxu0 0
    %4145 = vmatprep.mubr.bf16.mxu0 %v2656
    %4146 = vmatmul.mubr.bf16.gmra.mxu0 %v2655
    %v4147 = vpop.f32.mrf.mxu0
    %v4148 = vadd.f32 %v4108, %v4147
    %v4149 = vpop.f32.mrf.mxu0
    %v4150 = vpop.f32.mrf.mxu0
    %v4151 = vpop.f32.mrf.mxu0
    %4152 = vdwg.mxu0
    %4153 = vmatprep.subr.bf16.mxu0 0
    %4154 = vmatpush1.bf16.xpose.msra.mxu0 0
    %4155 = vmatprep.subr.bf16.mxu0 0
    %4156 = vmatpush1.bf16.xpose.msra.mxu0 0
    %4157 = vmatprep.subr.bf16.mxu0 0
    %4158 = vmatpush1.bf16.xpose.msra.mxu0 0
    %4159 = vmatprep.subr.bf16.mxu0 0
    %4160 = vmatpush1.bf16.xpose.msra.mxu0 0
    %4161 = vmatprep.subr.bf16.mxu0 0
    %4162 = vmatpush1.bf16.xpose.msra.mxu0 0
    %4163 = vmatprep.subr.bf16.mxu0 0
    %4164 = vmatpush1.bf16.xpose.msra.mxu0 0
    %4165 = vmatprep.subr.bf16.mxu0 0
    %4166 = vmatpush1.bf16.xpose.msra.mxu0 0
    %4167 = vmatprep.subr.bf16.mxu0 %v2950
    %4168 = vmatpush1.bf16.xpose.msra.mxu0 %v2942
    %4169 = vmatprep.subr.bf16.mxu0 0
    %4170 = vmatpush2.bf16.xpose.msra.mxu0 0
    %4171 = vmatprep.subr.bf16.mxu0 0
    %4172 = vmatpush2.bf16.xpose.msra.mxu0 0
    %4173 = vmatprep.subr.bf16.mxu0 0
    %4174 = vmatpush2.bf16.xpose.msra.mxu0 0
    %4175 = vmatprep.subr.bf16.mxu0 0
    %4176 = vmatpush2.bf16.xpose.msra.mxu0 0
    %4177 = vmatprep.subr.bf16.mxu0 0
    %4178 = vmatpush2.bf16.xpose.msra.mxu0 0
    %4179 = vmatprep.subr.bf16.mxu0 0
    %4180 = vmatpush2.bf16.xpose.msra.mxu0 0
    %4181 = vmatprep.subr.bf16.mxu0 0
    %4182 = vmatpush2.bf16.xpose.msra.mxu0 0
    %4183 = vmatprep.subr.bf16.mxu0 0
    %4184 = vmatpush2.bf16.xpose.msra.mxu0 0
    %4185 = vmatprep.mubr.bf16.mxu0 %v2658
    %4186 = vmatmul.mubr.bf16.gmra.mxu0 %v2657
    %v4187 = vpop.f32.mrf.mxu0
    %v4188 = vadd.f32 %v4148, %v4187
    %v4189 = vpop.f32.mrf.mxu0
    %v4190 = vpop.f32.mrf.mxu0
    %v4191 = vpop.f32.mrf.mxu0
    %4192 = vdwg.mxu0
    %4193 = vmatprep.subr.bf16.mxu0 0
    %4194 = vmatpush1.bf16.xpose.msra.mxu0 0
    %4195 = vmatprep.subr.bf16.mxu0 0
    %4196 = vmatpush1.bf16.xpose.msra.mxu0 0
    %4197 = vmatprep.subr.bf16.mxu0 0
    %4198 = vmatpush1.bf16.xpose.msra.mxu0 0
    %4199 = vmatprep.subr.bf16.mxu0 0
    %4200 = vmatpush1.bf16.xpose.msra.mxu0 0
    %4201 = vmatprep.subr.bf16.mxu0 0
    %4202 = vmatpush1.bf16.xpose.msra.mxu0 0
    %4203 = vmatprep.subr.bf16.mxu0 0
    %4204 = vmatpush1.bf16.xpose.msra.mxu0 0
    %4205 = vmatprep.subr.bf16.mxu0 0
    %4206 = vmatpush1.bf16.xpose.msra.mxu0 0
    %4207 = vmatprep.subr.bf16.mxu0 %v2951
    %4208 = vmatpush1.bf16.xpose.msra.mxu0 %v2949
    %4209 = vmatprep.subr.bf16.mxu0 0
    %4210 = vmatpush2.bf16.xpose.msra.mxu0 0
    %4211 = vmatprep.subr.bf16.mxu0 0
    %4212 = vmatpush2.bf16.xpose.msra.mxu0 0
    %4213 = vmatprep.subr.bf16.mxu0 0
    %4214 = vmatpush2.bf16.xpose.msra.mxu0 0
    %4215 = vmatprep.subr.bf16.mxu0 0
    %4216 = vmatpush2.bf16.xpose.msra.mxu0 0
    %4217 = vmatprep.subr.bf16.mxu0 0
    %4218 = vmatpush2.bf16.xpose.msra.mxu0 0
    %4219 = vmatprep.subr.bf16.mxu0 0
    %4220 = vmatpush2.bf16.xpose.msra.mxu0 0
    %4221 = vmatprep.subr.bf16.mxu0 0
    %4222 = vmatpush2.bf16.xpose.msra.mxu0 0
    %4223 = vmatprep.subr.bf16.mxu0 0
    %4224 = vmatpush2.bf16.xpose.msra.mxu0 0
    %4225 = vmatprep.mubr.bf16.mxu0 %v2660
    %4226 = vmatmul.mubr.bf16.gmra.mxu0 %v2659
    %v4227 = vpop.f32.mrf.mxu0
    %v4228 = vadd.f32 %v4188, %v4227
    %v4229 = vpop.f32.mrf.mxu0
    %v4230 = vpop.f32.mrf.mxu0
    %v4231 = vpop.f32.mrf.mxu0
    %4232 = vdwg.mxu0
    %4233 = vmatprep.subr.bf16.mxu0 0
    %4234 = vmatpush1.bf16.xpose.msra.mxu0 0
    %4235 = vmatprep.subr.bf16.mxu0 0
    %4236 = vmatpush1.bf16.xpose.msra.mxu0 0
    %4237 = vmatprep.subr.bf16.mxu0 0
    %4238 = vmatpush1.bf16.xpose.msra.mxu0 0
    %4239 = vmatprep.subr.bf16.mxu0 0
    %4240 = vmatpush1.bf16.xpose.msra.mxu0 0
    %4241 = vmatprep.subr.bf16.mxu0 0
    %4242 = vmatpush1.bf16.xpose.msra.mxu0 0
    %4243 = vmatprep.subr.bf16.mxu0 0
    %4244 = vmatpush1.bf16.xpose.msra.mxu0 0
    %4245 = vmatprep.subr.bf16.mxu0 0
    %4246 = vmatpush1.bf16.xpose.msra.mxu0 0
    %4247 = vmatprep.subr.bf16.mxu0 %v2967
    %4248 = vmatpush1.bf16.xpose.msra.mxu0 %v2959
    %4249 = vmatprep.subr.bf16.mxu0 0
    %4250 = vmatpush2.bf16.xpose.msra.mxu0 0
    %4251 = vmatprep.subr.bf16.mxu0 0
    %4252 = vmatpush2.bf16.xpose.msra.mxu0 0
    %4253 = vmatprep.subr.bf16.mxu0 0
    %4254 = vmatpush2.bf16.xpose.msra.mxu0 0
    %4255 = vmatprep.subr.bf16.mxu0 0
    %4256 = vmatpush2.bf16.xpose.msra.mxu0 0
    %4257 = vmatprep.subr.bf16.mxu0 0
    %4258 = vmatpush2.bf16.xpose.msra.mxu0 0
    %4259 = vmatprep.subr.bf16.mxu0 0
    %4260 = vmatpush2.bf16.xpose.msra.mxu0 0
    %4261 = vmatprep.subr.bf16.mxu0 0
    %4262 = vmatpush2.bf16.xpose.msra.mxu0 0
    %4263 = vmatprep.subr.bf16.mxu0 0
    %4264 = vmatpush2.bf16.xpose.msra.mxu0 0
    %4265 = vmatprep.mubr.bf16.mxu0 %v2662
    %4266 = vmatmul.mubr.bf16.gmra.mxu0 %v2661
    %v4267 = vpop.f32.mrf.mxu0
    %v4268 = vadd.f32 %v4228, %v4267
    %v4269 = vpop.f32.mrf.mxu0
    %v4270 = vpop.f32.mrf.mxu0
    %v4271 = vpop.f32.mrf.mxu0
    %4272 = vdwg.mxu0
    %4273 = vmatprep.subr.bf16.mxu0 0
    %4274 = vmatpush1.bf16.xpose.msra.mxu0 0
    %4275 = vmatprep.subr.bf16.mxu0 0
    %4276 = vmatpush1.bf16.xpose.msra.mxu0 0
    %4277 = vmatprep.subr.bf16.mxu0 0
    %4278 = vmatpush1.bf16.xpose.msra.mxu0 0
    %4279 = vmatprep.subr.bf16.mxu0 0
    %4280 = vmatpush1.bf16.xpose.msra.mxu0 0
    %4281 = vmatprep.subr.bf16.mxu0 0
    %4282 = vmatpush1.bf16.xpose.msra.mxu0 0
    %4283 = vmatprep.subr.bf16.mxu0 0
    %4284 = vmatpush1.bf16.xpose.msra.mxu0 0
    %4285 = vmatprep.subr.bf16.mxu0 0
    %4286 = vmatpush1.bf16.xpose.msra.mxu0 0
    %4287 = vmatprep.subr.bf16.mxu0 %v2968
    %4288 = vmatpush1.bf16.xpose.msra.mxu0 %v2966
    %4289 = vmatprep.subr.bf16.mxu0 0
    %4290 = vmatpush2.bf16.xpose.msra.mxu0 0
    %4291 = vmatprep.subr.bf16.mxu0 0
    %4292 = vmatpush2.bf16.xpose.msra.mxu0 0
    %4293 = vmatprep.subr.bf16.mxu0 0
    %4294 = vmatpush2.bf16.xpose.msra.mxu0 0
    %4295 = vmatprep.subr.bf16.mxu0 0
    %4296 = vmatpush2.bf16.xpose.msra.mxu0 0
    %4297 = vmatprep.subr.bf16.mxu0 0
    %4298 = vmatpush2.bf16.xpose.msra.mxu0 0
    %4299 = vmatprep.subr.bf16.mxu0 0
    %4300 = vmatpush2.bf16.xpose.msra.mxu0 0
    %4301 = vmatprep.subr.bf16.mxu0 0
    %4302 = vmatpush2.bf16.xpose.msra.mxu0 0
    %4303 = vmatprep.subr.bf16.mxu0 0
    %4304 = vmatpush2.bf16.xpose.msra.mxu0 0
    %4305 = vmatprep.mubr.bf16.mxu0 %v2664
    %4306 = vmatmul.mubr.bf16.gmra.mxu0 %v2663
    %v4307 = vpop.f32.mrf.mxu0
    %v4308 = vadd.f32 %v4268, %v4307
    %v4309 = vpop.f32.mrf.mxu0
    %v4310 = vpop.f32.mrf.mxu0
    %v4311 = vpop.f32.mrf.mxu0
    %4312 = vdwg.mxu0
    %v4313 = vld [vmem:[%s7] sm:$0x1]
    %v4315 = vlaneseq
    %v4316 = vshrl.u32 %v4315, 7
    %v4317 = vsub.s32 0, %v4316
    %v4318 = vrot.slane %v4313, %v4317
    %v4320 = vmul.f32 %v1922, %v4318
    %v4321 = vsub.f32 %v4308, %v4320
    %v4322 = vmul.f32 %v4321, %v1928
    %v4323 = vld [vmem:[%s8] sm:$0x1]
    %v4325 = vlaneseq
    %v4326 = vshrl.u32 %v4325, 7
    %v4327 = vsub.s32 0, %v4326
    %v4328 = vrot.slane %v4323, %v4327
    %v4330 = vadd.f32 %v4322, %v4328
    %vm4331 = vcmask 17408
    %4332 = vst.msk [vmem:[#allocation10] sm:$0x3] %vm4331, %v4330
    // Predicated region
    $region54: #{tpu_custom_call.1} parent=1 // pred_check
      _
    $region55: #{tpu_custom_call.1} parent=1 // pred_check_branch
      %4334 = sbr.rel (0) target = $region57
    $region56: #{tpu_custom_call.1} parent=1 // pred_region
      %s4336 = ssub.s32 32, 32
      %4337 = vsyncadd [#allocation4], %s4336
      %s4339 = sshll.u32 [#allocation10], 4
      %s4340 = int_to_ptr.vmem [resolvable:$true] %s4339
      %4342 = dma.vmem_to_hbm [thread:$0]  %s4340, 32, %s9, [#allocation4]
    $region57: #{tpu_custom_call.1} parent=1 // pred_fallthru
      _
    // Predicated region
    $region58: #{tpu_custom_call.1} parent=1 // pred_check
      _
    $region59: #{tpu_custom_call.1} parent=1 // pred_check_branch
      %4344 = sbr.rel (0) target = $region61
    $region60: #{tpu_custom_call.1} parent=1 // pred_region
      %4345 = dma.done [#allocation4], 32
    $region61: #{tpu_custom_call.1} parent=1 // pred_fallthru
      _
    %4346 = vsyncpa [#allocation3], 1
    %4347 = vsyncpa [#allocation6], 1
    %4348 = vsyncpa [#allocation9], 1
    %4349 = vsyncpa [#allocation4], 1

</llo_original>
